<compile_context>
chip_gen: v7x
topology: tpu7x:2x2x1
jax: 0.10.0
libtpu: 0.0.40
codegen_flags: <defaults>
</compile_context>

<pallas_src>
import jax
import jax.numpy as jnp
from jax.experimental import pallas as pl
from jax.experimental.pallas import tpu as pltpu

# ---------------------------------------------------------------------------
# Column definitions (match the PyTorch module)
# ---------------------------------------------------------------------------
CATEGORICAL_COLS = [f"C{i}" for i in range(1, 27)] + ["I1", "I10", "I11", "I12"]
INTEGER_COLS = ["I2", "I3", "I4", "I5", "I6", "I7", "I8", "I9", "I13"]

BN_EPS = 1e-5


def _round_up(x, m):
    return ((x + m - 1) // m) * m


# ---------------------------------------------------------------------------
# Pallas kernel: (linear -> relu) x3 -> linear_4, with every eval-mode BN
# pre-folded into the adjacent linear and dropout = identity.
# ---------------------------------------------------------------------------
def _click_mlp_kernel(
    x_ref,              # (b_tile, K)  bf16   (BN0 folded into W1/b1)
    w1_ref, b1_ref,     # (K, 1024) bf16, (1, 1024) f32
    w2_ref, b2_ref,     # (1024, 512) bf16, (1, 512) f32   (BN1 folded in)
    w3_ref, b3_ref,     # (512, 128) bf16, (1, 128) f32    (BN2 folded in)
    w4_ref, b4_ref,     # (1, 128) f32, (1, 1) f32         (BN3 folded in)
    o_ref,              # (1, b_tile) f32  -- lane-dense logits
):
    # linear_1 -> relu_1   (norm_0/drop_0 folded / identity)
    h = jnp.dot(x_ref[...], w1_ref[...], preferred_element_type=jnp.float32)
    h = jnp.maximum(h + b1_ref[...], 0.0)

    # linear_2 -> relu_2   (norm_1/drop_1 folded / identity)
    h = jnp.dot(h.astype(jnp.bfloat16), w2_ref[...],
                preferred_element_type=jnp.float32)
    h = jnp.maximum(h + b2_ref[...], 0.0)

    # linear_3 -> relu_3   (norm_2/drop_2 folded / identity)
    h = jnp.dot(h.astype(jnp.bfloat16), w3_ref[...],
                preferred_element_type=jnp.float32)
    h = jnp.maximum(h + b3_ref[...], 0.0)

    # linear_4 (N=1 logit), computed as (1, 128) @ (128, b_tile) so the output
    # block is a lane-dense (1, b_tile) row instead of a (b_tile, 1) column.
    logits = jnp.dot(w4_ref[...], h.T, preferred_element_type=jnp.float32)
    o_ref[...] = logits + b4_ref[...]


def click_mlp_pallas(features, params, *, block_rows=512):
    """features: (B, total_dim) f32. params: folded/padded kernel params."""
    B, d_in = features.shape
    K = params["w1"].shape[0]
    n1 = params["w1"].shape[1]
    n2 = params["w2"].shape[1]
    n3 = params["w3"].shape[1]

    # Batch tile: multiple of 128 (lane-dense output); don't over-pad tiny B.
    b_tile = min(_round_up(block_rows, 128), _round_up(max(B, 1), 128))
    b_pad = _round_up(B, b_tile)

    x = jnp.pad(features, ((0, b_pad - B), (0, K - d_in))).astype(jnp.bfloat16)

    def resident(shape):                       # weights/biases stay in VMEM
        return pl.BlockSpec(shape, lambda i: (0, 0))

    out = pl.pallas_call(
        _click_mlp_kernel,
        out_shape=jax.ShapeDtypeStruct((1, b_pad), jnp.float32),
        grid=(b_pad // b_tile,),
        in_specs=[
            pl.BlockSpec((b_tile, K), lambda i: (i, 0)),   # streamed activations
            resident((K, n1)), resident((1, n1)),
            resident((n1, n2)), resident((1, n2)),
            resident((n2, n3)), resident((1, n3)),
            resident((1, n3)), resident((1, 1)),
        ],
        out_specs=pl.BlockSpec((1, b_tile), lambda i: (0, i)),
        compiler_params=pltpu.CompilerParams(
            dimension_semantics=("parallel",),
            vmem_limit_bytes=24 << 20,
        ),
    )(x, params["w1"], params["b1"], params["w2"], params["b2"],
      params["w3"], params["b3"], params["w4"], params["b4"])

    return out[:, :B].T            # (B, 1), matching the PyTorch module output


# ---------------------------------------------------------------------------
# Parameter construction (deterministic, synthetic) + BN folding / padding
# ---------------------------------------------------------------------------
def make_bn_params(key, n):
    """Eval-mode BatchNorm folded to per-feature (scale, shift) vectors."""
    k1, k2, k3, k4 = jax.random.split(key, 4)
    gamma = jax.random.uniform(k1, (n,), minval=0.5, maxval=1.5)
    beta = 0.1 * jax.random.normal(k2, (n,))
    mean = 0.1 * jax.random.normal(k3, (n,))
    var = jax.random.uniform(k4, (n,), minval=0.5, maxval=1.5)
    scale = gamma / jnp.sqrt(var + BN_EPS)
    shift = beta - mean * scale
    return scale.astype(jnp.float32), shift.astype(jnp.float32)


def make_linear(key, fan_in, fan_out):
    kw, kb = jax.random.split(key)
    w = (jax.random.normal(kw, (fan_in, fan_out)) / jnp.sqrt(fan_in)).astype(jnp.float32)
    b = (0.05 * jax.random.normal(kb, (fan_out,))).astype(jnp.float32)
    return w, b


def build_model(key, category_count, category_dim):
    keys = jax.random.split(key, len(CATEGORICAL_COLS) + 8)
    emb_tables = {
        col: jax.random.normal(
            keys[i], (category_count[col], category_dim[col])
        ).astype(jnp.float32)
        for i, col in enumerate(CATEGORICAL_COLS)
    }
    total_dim = sum(category_dim.values()) + len(INTEGER_COLS)
    kk = keys[len(CATEGORICAL_COLS):]

    s0, t0 = make_bn_params(kk[0], total_dim)
    w1, b1 = make_linear(kk[1], total_dim, 1000)
    s1, t1 = make_bn_params(kk[2], 1000)
    w2, b2 = make_linear(kk[3], 1000, 500)
    s2, t2 = make_bn_params(kk[4], 500)
    w3, b3 = make_linear(kk[5], 500, 100)
    s3, t3 = make_bn_params(kk[6], 100)
    w4, b4 = make_linear(kk[7], 100, 1)

    # Un-folded f32 params for the pure-JAX reference (original semantics).
    ref_params = dict(
        s0=s0[None], t0=t0[None], w1=w1, b1=b1[None],
        s1=s1[None], t1=t1[None], w2=w2, b2=b2[None],
        s2=s2[None], t2=t2[None], w3=w3, b3=b3[None],
        s3=s3[None], t3=t3[None], w4=w4, b4=b4[None],
    )

    # Fold each eval-mode BN into the *following* linear:
    #   (h * s + t) @ W + b  ==  h @ (s[:, None] * W) + (t @ W + b)
    W1f, b1f = s0[:, None] * w1, t0 @ w1 + b1
    W2f, b2f = s1[:, None] * w2, t1 @ w2 + b2
    W3f, b3f = s2[:, None] * w3, t2 @ w3 + b3
    W4f, b4f = s3[:, None] * w4, t3 @ w4 + b4          # (100, 1), (1,)

    # Zero-pad to MXU/lane-aligned sizes (exact: padded rows/cols are zero).
    K = _round_up(total_dim, 128)      # 129 -> 256
    N1 = _round_up(1000, 128)          # 1024
    N2 = _round_up(500, 128)           # 512
    N3 = _round_up(100, 128)           # 128

    def pad2(a, r, c):
        return jnp.pad(a, ((0, r - a.shape[0]), (0, c - a.shape[1])))

    kernel_params = dict(
        w1=pad2(W1f, K, N1).astype(jnp.bfloat16),
        b1=pad2(b1f[None], 1, N1).astype(jnp.float32),
        w2=pad2(W2f, N1, N2).astype(jnp.bfloat16),
        b2=pad2(b2f[None], 1, N2).astype(jnp.float32),
        w3=pad2(W3f, N2, N3).astype(jnp.bfloat16),
        b3=pad2(b3f[None], 1, N3).astype(jnp.float32),
        w4=pad2(W4f.T, 1, N3).astype(jnp.float32),     # (1, 128), tiny -> keep f32
        b4=b4f[None].astype(jnp.float32),              # (1, 1)
    )
    return emb_tables, kernel_params, ref_params, total_dim


def embed_and_concat(x_dict, emb_tables):
    """Plain-JAX glue: embedding gathers + concat. Matches PyTorch dict order:
    embeddings for C1..C26, I1, I10, I11, I12, then raw I2..I9, I13."""
    parts = []
    for col in CATEGORICAL_COLS:
        idx = x_dict[col].astype(jnp.int32)
        parts.append(emb_tables[col][idx])                       # (B, dim_col)
    for col in INTEGER_COLS:
        parts.append(x_dict[col].astype(jnp.float32)[:, None])   # unsqueeze(1)
    return jnp.concatenate(parts, axis=1)


# ---------------------------------------------------------------------------
# Pure-JAX f32 reference (original eval-mode forward) for validation
# ---------------------------------------------------------------------------
def reference_forward(features, p):
    h = features * p["s0"] + p["t0"]
    h = jnp.maximum(h @ p["w1"] + p["b1"], 0.0) * p["s1"] + p["t1"]
    h = jnp.maximum(h @ p["w2"] + p["b2"], 0.0) * p["s2"] + p["t2"]
    h = jnp.maximum(h @ p["w3"] + p["b3"], 0.0) * p["s3"] + p["t3"]
    return h @ p["w4"] + p["b4"]


# ---------------------------------------------------------------------------
if __name__ == "__main__":
    # Small synthetic configuration consistent with the module.
    category_count = {col: 20 + 3 * i for i, col in enumerate(CATEGORICAL_COLS)}
    category_dim = {col: 4 for col in CATEGORICAL_COLS}   # total_dim = 30*4 + 9 = 129
    B = 8

    root = jax.random.PRNGKey(0)
    k_model, k_data = jax.random.split(root)
    emb_tables, kparams, ref_params, total_dim = build_model(
        k_model, category_count, category_dim)

    # Build the input dict deterministically.
    x = {}
    data_keys = jax.random.split(k_data, len(CATEGORICAL_COLS) + len(INTEGER_COLS))
    for i, col in enumerate(CATEGORICAL_COLS):
        x[col] = jax.random.randint(data_keys[i], (B,), 0, category_count[col])
    for j, col in enumerate(INTEGER_COLS):
        x[col] = jax.random.normal(data_keys[len(CATEGORICAL_COLS) + j], (B,))

    # Glue: embeddings + concat (plain JAX), then the Pallas MLP kernel.
    features = embed_and_concat(x, emb_tables)             # (B, total_dim) f32
    out = jax.block_until_ready(click_mlp_pallas(features, kparams))   # (B, 1)

    ref = jax.block_until_ready(reference_forward(features, ref_params))
    assert out.shape == (B, 1)
    # bf16 MXU inputs (with f32 accumulation) vs pure-f32 reference: ~1% error.
    assert jnp.allclose(out, ref, rtol=5e-2, atol=5e-2), (out, ref)

    # TODO(synk): dropout / training-mode BatchNorm statistics are not modeled;
    # this implements the eval-mode forward pass only.
    print("KERNEL_OK")
</pallas_src>

<mosaic_0001>
module attributes {stable_mosaic.version = 11 : i64} {
  func.func @_click_mlp_kernel(%arg0: i32, %arg1: memref<128x256xbf16, #tpu.memory_space<vmem>>, %arg2: memref<256x1024xbf16, #tpu.memory_space<vmem>>, %arg3: memref<1x1024xf32, #tpu.memory_space<vmem>>, %arg4: memref<1024x512xbf16, #tpu.memory_space<vmem>>, %arg5: memref<1x512xf32, #tpu.memory_space<vmem>>, %arg6: memref<512x128xbf16, #tpu.memory_space<vmem>>, %arg7: memref<1x128xf32, #tpu.memory_space<vmem>>, %arg8: memref<1x128xf32, #tpu.memory_space<vmem>>, %arg9: memref<1x1xf32, #tpu.memory_space<vmem>>, %arg10: memref<1x128xf32, #tpu.memory_space<vmem>>) attributes {dimension_semantics = [#tpu.dimension_semantics<parallel>], iteration_bounds = array<i64: 1>, scalar_prefetch = 0 : i64, scratch_operands = 0 : i64, tpu.core_type = #tpu.core_type<tc>, window_params = [{transform_indices = @transform_0, window_bounds = array<i64: 128, 256>}, {pipeline_mode = #tpu.pipeline_mode<synchronous>, transform_indices = @transform_1, window_bounds = array<i64: 256, 1024>}, {pipeline_mode = #tpu.pipeline_mode<synchronous>, transform_indices = @transform_2, window_bounds = array<i64: 1, 1024>}, {pipeline_mode = #tpu.pipeline_mode<synchronous>, transform_indices = @transform_3, window_bounds = array<i64: 1024, 512>}, {pipeline_mode = #tpu.pipeline_mode<synchronous>, transform_indices = @transform_4, window_bounds = array<i64: 1, 512>}, {pipeline_mode = #tpu.pipeline_mode<synchronous>, transform_indices = @transform_5, window_bounds = array<i64: 512, 128>}, {pipeline_mode = #tpu.pipeline_mode<synchronous>, transform_indices = @transform_6, window_bounds = array<i64: 1, 128>}, {pipeline_mode = #tpu.pipeline_mode<synchronous>, transform_indices = @transform_7, window_bounds = array<i64: 1, 128>}, {pipeline_mode = #tpu.pipeline_mode<synchronous>, transform_indices = @transform_8, window_bounds = array<i64: 1, 1>}, {transform_indices = @transform_9, window_bounds = array<i64: 1, 128>}]} {
    %c0 = arith.constant 0 : index
    %c0_0 = arith.constant 0 : index
    %0 = vector.load %arg1[%c0, %c0_0] : memref<128x256xbf16, #tpu.memory_space<vmem>>, vector<128x256xbf16>
    %c0_1 = arith.constant 0 : index
    %c0_2 = arith.constant 0 : index
    %1 = vector.load %arg2[%c0_1, %c0_2] : memref<256x1024xbf16, #tpu.memory_space<vmem>>, vector<256x1024xbf16>
    %cst = arith.constant dense<0.000000e+00> : vector<128x1024xf32>
    %2 = tpu.matmul %0, %1, %cst {dimension_numbers = #tpu.dot_dimension_numbers<[1], [0], [0], [1], [0, 0, 1, 1], [], []>} : vector<128x256xbf16>, vector<256x1024xbf16>, vector<128x1024xf32> -> vector<128x1024xf32>
    %c0_3 = arith.constant 0 : index
    %c0_4 = arith.constant 0 : index
    %3 = vector.load %arg3[%c0_3, %c0_4] : memref<1x1024xf32, #tpu.memory_space<vmem>>, vector<1x1024xf32>
    %4 = vector.broadcast %3 : vector<1x1024xf32> to vector<128x1024xf32>
    %5 = arith.addf %2, %4 : vector<128x1024xf32>
    %cst_5 = arith.constant 0.000000e+00 : f32
    %6 = vector.broadcast %cst_5 : f32 to vector<128x1024xf32>
    %7 = arith.maximumf %5, %6 : vector<128x1024xf32>
    %8 = arith.truncf %7 : vector<128x1024xf32> to vector<128x1024xbf16>
    %c0_6 = arith.constant 0 : index
    %c0_7 = arith.constant 0 : index
    %9 = vector.load %arg4[%c0_6, %c0_7] : memref<1024x512xbf16, #tpu.memory_space<vmem>>, vector<1024x512xbf16>
    %cst_8 = arith.constant dense<0.000000e+00> : vector<128x512xf32>
    %10 = tpu.matmul %8, %9, %cst_8 {dimension_numbers = #tpu.dot_dimension_numbers<[1], [0], [0], [1], [0, 0, 1, 1], [], []>} : vector<128x1024xbf16>, vector<1024x512xbf16>, vector<128x512xf32> -> vector<128x512xf32>
    %c0_9 = arith.constant 0 : index
    %c0_10 = arith.constant 0 : index
    %11 = vector.load %arg5[%c0_9, %c0_10] : memref<1x512xf32, #tpu.memory_space<vmem>>, vector<1x512xf32>
    %12 = vector.broadcast %11 : vector<1x512xf32> to vector<128x512xf32>
    %13 = arith.addf %10, %12 : vector<128x512xf32>
    %cst_11 = arith.constant 0.000000e+00 : f32
    %14 = vector.broadcast %cst_11 : f32 to vector<128x512xf32>
    %15 = arith.maximumf %13, %14 : vector<128x512xf32>
    %16 = arith.truncf %15 : vector<128x512xf32> to vector<128x512xbf16>
    %c0_12 = arith.constant 0 : index
    %c0_13 = arith.constant 0 : index
    %17 = vector.load %arg6[%c0_12, %c0_13] : memref<512x128xbf16, #tpu.memory_space<vmem>>, vector<512x128xbf16>
    %cst_14 = arith.constant dense<0.000000e+00> : vector<128x128xf32>
    %18 = tpu.matmul %16, %17, %cst_14 {dimension_numbers = #tpu.dot_dimension_numbers<[1], [0], [0], [1], [0, 0, 1, 1], [], []>} : vector<128x512xbf16>, vector<512x128xbf16>, vector<128x128xf32> -> vector<128x128xf32>
    %c0_15 = arith.constant 0 : index
    %c0_16 = arith.constant 0 : index
    %19 = vector.load %arg7[%c0_15, %c0_16] : memref<1x128xf32, #tpu.memory_space<vmem>>, vector<1x128xf32>
    %20 = vector.broadcast %19 : vector<1x128xf32> to vector<128x128xf32>
    %21 = arith.addf %18, %20 : vector<128x128xf32>
    %cst_17 = arith.constant 0.000000e+00 : f32
    %22 = vector.broadcast %cst_17 : f32 to vector<128x128xf32>
    %23 = arith.maximumf %21, %22 : vector<128x128xf32>
    %c0_18 = arith.constant 0 : index
    %c0_19 = arith.constant 0 : index
    %24 = vector.load %arg8[%c0_18, %c0_19] : memref<1x128xf32, #tpu.memory_space<vmem>>, vector<1x128xf32>
    %25 = tpu.transpose %23, [1, 0] : vector<128x128xf32> -> vector<128x128xf32>
    %cst_20 = arith.constant dense<0.000000e+00> : vector<1x128xf32>
    %26 = tpu.matmul %24, %25, %cst_20 {dimension_numbers = #tpu.dot_dimension_numbers<[1], [0], [0], [1], [0, 0, 1, 1], [], []>} : vector<1x128xf32>, vector<128x128xf32>, vector<1x128xf32> -> vector<1x128xf32>
    %c0_21 = arith.constant 0 : index
    %c0_22 = arith.constant 0 : index
    %27 = vector.load %arg9[%c0_21, %c0_22] : memref<1x1xf32, #tpu.memory_space<vmem>>, vector<1x1xf32>
    %28 = vector.broadcast %27 : vector<1x1xf32> to vector<1x128xf32>
    %29 = arith.addf %26, %28 : vector<1x128xf32>
    %c0_23 = arith.constant 0 : index
    %c0_24 = arith.constant 0 : index
    %30 = vector.load %arg10[%c0_23, %c0_24] : memref<1x128xf32, #tpu.memory_space<vmem>>, vector<1x128xf32>
    tpu.vector_store %arg10[%c0_23, %c0_24], %29 {strides = array<i32>} : memref<1x128xf32, #tpu.memory_space<vmem>>, vector<1x128xf32>,
    return
  }
  func.func @transform_0(%arg0: i32) -> (i32, i32) {
    %c0_i32 = arith.constant 0 : i32
    %c0_i32_0 = arith.constant 0 : i32
    return %arg0, %c0_i32 : i32, i32
  }
  func.func @transform_1(%arg0: i32) -> (i32, i32) {
    %c0_i32 = arith.constant 0 : i32
    %c0_i32_0 = arith.constant 0 : i32
    %c0_i32_1 = arith.constant 0 : i32
    return %c0_i32, %c0_i32_0 : i32, i32
  }
  func.func @transform_2(%arg0: i32) -> (i32, i32) {
    %c0_i32 = arith.constant 0 : i32
    %c0_i32_0 = arith.constant 0 : i32
    %c0_i32_1 = arith.constant 0 : i32
    return %c0_i32, %c0_i32_0 : i32, i32
  }
  func.func @transform_3(%arg0: i32) -> (i32, i32) {
    %c0_i32 = arith.constant 0 : i32
    %c0_i32_0 = arith.constant 0 : i32
    %c0_i32_1 = arith.constant 0 : i32
    return %c0_i32, %c0_i32_0 : i32, i32
  }
  func.func @transform_4(%arg0: i32) -> (i32, i32) {
    %c0_i32 = arith.constant 0 : i32
    %c0_i32_0 = arith.constant 0 : i32
    %c0_i32_1 = arith.constant 0 : i32
    return %c0_i32, %c0_i32_0 : i32, i32
  }
  func.func @transform_5(%arg0: i32) -> (i32, i32) {
    %c0_i32 = arith.constant 0 : i32
    %c0_i32_0 = arith.constant 0 : i32
    %c0_i32_1 = arith.constant 0 : i32
    return %c0_i32, %c0_i32_0 : i32, i32
  }
  func.func @transform_6(%arg0: i32) -> (i32, i32) {
    %c0_i32 = arith.constant 0 : i32
    %c0_i32_0 = arith.constant 0 : i32
    %c0_i32_1 = arith.constant 0 : i32
    return %c0_i32, %c0_i32_0 : i32, i32
  }
  func.func @transform_7(%arg0: i32) -> (i32, i32) {
    %c0_i32 = arith.constant 0 : i32
    %c0_i32_0 = arith.constant 0 : i32
    %c0_i32_1 = arith.constant 0 : i32
    return %c0_i32, %c0_i32_0 : i32, i32
  }
  func.func @transform_8(%arg0: i32) -> (i32, i32) {
    %c0_i32 = arith.constant 0 : i32
    %c0_i32_0 = arith.constant 0 : i32
    %c0_i32_1 = arith.constant 0 : i32
    return %c0_i32, %c0_i32_0 : i32, i32
  }
  func.func @transform_9(%arg0: i32) -> (i32, i32) {
    %c0_i32 = arith.constant 0 : i32
    %c0_i32_0 = arith.constant 0 : i32
    return %c0_i32, %arg0 : i32, i32
  }
}

</mosaic_0001>

<llo_original>
// kernel: tpu_custom_call.1
$region0: #{tpu_custom_call.1}
  #allocation0 [shape = 'u32[]', space=smem, size = 0x4, offset = 0x4, fixed_abs, tag = 'smem constant byte address 0x4 - core index']
  #allocation1 [shape = 'u32[144,128]{1,0:T(1,128)}', space=vmem, size = 0x12000, scoped, tag = 'internal scratch']
  #allocation2 [shape = 'f32[1,1]{1,0:T(1,128)S(1)}', space=vmem, size = 0x200, scoped, tag = 'scoped memory for tpu_custom_call.1']
  %s0 = inlined_call_operand.hbm [shape: bf16[128,256], index: 0, kind: input, shape index: {}]
  %s1 = inlined_call_operand.hbm [shape: bf16[256,1024], index: 1, kind: input, shape index: {}]
  %s2 = inlined_call_operand.vmem [shape: f32[1,1024], index: 2, kind: input, shape index: {}]
  %s3 = inlined_call_operand.hbm [shape: bf16[1024,512], index: 3, kind: input, shape index: {}]
  %s4 = inlined_call_operand.vmem [shape: f32[1,512], index: 4, kind: input, shape index: {}]
  %s5 = inlined_call_operand.hbm [shape: bf16[512,128], index: 5, kind: input, shape index: {}]
  %s6 = inlined_call_operand.vmem [shape: f32[1,128], index: 6, kind: input, shape index: {}]
  %s7 = inlined_call_operand.vmem [shape: f32[1,128], index: 7, kind: input, shape index: {}]
  %s8 = inlined_call_operand.<no memory space> [shape: f32[1,1], index: 8, kind: input, shape index: {}]
  %s9 = inlined_call_operand.hbm [shape: f32[1,128], index: 9, kind: output, shape index: {}]
  %s10 = sld [smem:[#allocation0]]
  $region62: #{tpu_custom_call.1} parent=0
    _
  %s12 = ssub.s32 1, %s10
  %s13 = scalar_select 0, %s12, %s10
  %v14 = vstv %s8
  %15 = vst [vmem:[#allocation2] sm:$0x1] %v14
  $region1: #{tpu_custom_call.1} parent=0
    #allocation3 [shape = 'u8[65536]{0}', space=vmem, size = 0x10000, scoped, tag = 'input window, operand 0, single buffered']
    #allocation4 [shape = 's32[1]{0}', space=sflag, size = 0x4, scoped, tag = 'scoped memory for tpu_custom_call.1']
    #allocation5 [shape = 's32[1]{0}', space=sflag, size = 0x4, scoped, tag = 'scoped memory for tpu_custom_call.1']
    #allocation6 [shape = 'u8[524288]{0}', space=vmem, size = 0x80000, scoped, tag = 'input window, operand 1, single buffered']
    #allocation7 [shape = 's32[1]{0}', space=sflag, size = 0x4, scoped, tag = 'scoped memory for tpu_custom_call.1']
    #allocation8 [shape = 'u8[1048576]{0}', space=vmem, size = 0x100000, scoped, tag = 'input window, operand 3, single buffered']
    #allocation9 [shape = 'u8[131072]{0}', space=vmem, size = 0x20000, scoped, tag = 'input window, operand 5, single buffered']
    #allocation10 [shape = 's32[1]{0}', space=sflag, size = 0x4, scoped, tag = 'scoped memory for tpu_custom_call.1']
    #allocation11 [shape = 'u8[512]{0}', space=vmem, size = 0x400, scoped, tag = 'output window, operand 0, single buffered']
    %16 = vsyncpa [#allocation4], 0
    %17 = vsyncpa [#allocation7], 0
    %18 = vsyncpa [#allocation10], 0
    %19 = vsyncpa [#allocation5], 0
    // Predicated region
    $region2: #{tpu_custom_call.1} parent=1 // pred_check
      _
    $region3: #{tpu_custom_call.1} parent=1 // pred_check_branch
      %21 = sbr.rel (0) target = $region5
    $region4: #{tpu_custom_call.1} parent=1 // pred_region
      %s23 = ssub.s32 2048, 2048
      %24 = vsyncadd [#allocation4], %s23
      %s25 = sshll.u32 [#allocation3], 4
      %s26 = int_to_ptr.vmem [resolvable:$true] %s25
      %31 = dma.hbm_to_vmem [thread:$0]  %s0, 2048, %s26, [#allocation4], 128, 128, 8
    $region5: #{tpu_custom_call.1} parent=1 // pred_fallthru
      _
    // Predicated region
    $region6: #{tpu_custom_call.1} parent=1 // pred_check
      _
    $region7: #{tpu_custom_call.1} parent=1 // pred_check_branch
      %33 = sbr.rel (0) target = $region9
    $region8: #{tpu_custom_call.1} parent=1 // pred_region
      %s35 = ssub.s32 16384, 16384
      %36 = vsyncadd [#allocation7], %s35
      %s37 = sshll.u32 [#allocation6], 4
      %s38 = int_to_ptr.vmem [resolvable:$true] %s37
      %43 = dma.hbm_to_vmem [thread:$0]  %s1, 16384, %s38, [#allocation7], 512, 512, 32
    $region9: #{tpu_custom_call.1} parent=1 // pred_fallthru
      _
    // Predicated region
    $region10: #{tpu_custom_call.1} parent=1 // pred_check
      _
    $region11: #{tpu_custom_call.1} parent=1 // pred_check_branch
      %45 = sbr.rel (0) target = $region13
    $region12: #{tpu_custom_call.1} parent=1 // pred_region
      _
    $region13: #{tpu_custom_call.1} parent=1 // pred_fallthru
      _
    // Predicated region
    $region14: #{tpu_custom_call.1} parent=1 // pred_check
      _
    $region15: #{tpu_custom_call.1} parent=1 // pred_check_branch
      %47 = sbr.rel (0) target = $region17
    $region16: #{tpu_custom_call.1} parent=1 // pred_region
      %s49 = ssub.s32 32768, 32768
      %50 = vsyncadd [#allocation7], %s49
      %s51 = sshll.u32 [#allocation8], 4
      %s52 = int_to_ptr.vmem [resolvable:$true] %s51
      %57 = dma.hbm_to_vmem [thread:$0]  %s3, 32768, %s52, [#allocation7], 256, 256, 16
    $region17: #{tpu_custom_call.1} parent=1 // pred_fallthru
      _
    // Predicated region
    $region18: #{tpu_custom_call.1} parent=1 // pred_check
      _
    $region19: #{tpu_custom_call.1} parent=1 // pred_check_branch
      %59 = sbr.rel (0) target = $region21
    $region20: #{tpu_custom_call.1} parent=1 // pred_region
      _
    $region21: #{tpu_custom_call.1} parent=1 // pred_fallthru
      _
    // Predicated region
    $region22: #{tpu_custom_call.1} parent=1 // pred_check
      _
    $region23: #{tpu_custom_call.1} parent=1 // pred_check_branch
      %61 = sbr.rel (0) target = $region25
    $region24: #{tpu_custom_call.1} parent=1 // pred_region
      %s63 = ssub.s32 4096, 4096
      %64 = vsyncadd [#allocation10], %s63
      %s65 = sshll.u32 [#allocation9], 4
      %s66 = int_to_ptr.vmem [resolvable:$true] %s65
      %71 = dma.hbm_to_vmem [thread:$0]  %s5, 4096, %s66, [#allocation10], 64, 64, 4
    $region25: #{tpu_custom_call.1} parent=1 // pred_fallthru
      _
    // Predicated region
    $region26: #{tpu_custom_call.1} parent=1 // pred_check
      _
    $region27: #{tpu_custom_call.1} parent=1 // pred_check_branch
      %73 = sbr.rel (0) target = $region29
    $region28: #{tpu_custom_call.1} parent=1 // pred_region
      _
    $region29: #{tpu_custom_call.1} parent=1 // pred_fallthru
      _
    // Predicated region
    $region30: #{tpu_custom_call.1} parent=1 // pred_check
      _
    $region31: #{tpu_custom_call.1} parent=1 // pred_check_branch
      %75 = sbr.rel (0) target = $region33
    $region32: #{tpu_custom_call.1} parent=1 // pred_region
      _
    $region33: #{tpu_custom_call.1} parent=1 // pred_fallthru
      _
    // Predicated region
    $region34: #{tpu_custom_call.1} parent=1 // pred_check
      _
    $region35: #{tpu_custom_call.1} parent=1 // pred_check_branch
      %77 = sbr.rel (0) target = $region37
    $region36: #{tpu_custom_call.1} parent=1 // pred_region
      _
    $region37: #{tpu_custom_call.1} parent=1 // pred_fallthru
      _
    // Predicated region
    $region38: #{tpu_custom_call.1} parent=1 // pred_check
      _
    $region39: #{tpu_custom_call.1} parent=1 // pred_check_branch
      %79 = sbr.rel (0) target = $region41
    $region40: #{tpu_custom_call.1} parent=1 // pred_region
      %80 = dma.done [#allocation4], 2048
    $region41: #{tpu_custom_call.1} parent=1 // pred_fallthru
      _
    // Predicated region
    $region42: #{tpu_custom_call.1} parent=1 // pred_check
      _
    $region43: #{tpu_custom_call.1} parent=1 // pred_check_branch
      %82 = sbr.rel (0) target = $region45
    $region44: #{tpu_custom_call.1} parent=1 // pred_region
      %83 = dma.done [#allocation7], 16384
    $region45: #{tpu_custom_call.1} parent=1 // pred_fallthru
      _
    // Predicated region
    $region46: #{tpu_custom_call.1} parent=1 // pred_check
      _
    $region47: #{tpu_custom_call.1} parent=1 // pred_check_branch
      %85 = sbr.rel (0) target = $region49
    $region48: #{tpu_custom_call.1} parent=1 // pred_region
      %86 = dma.done [#allocation7], 32768
    $region49: #{tpu_custom_call.1} parent=1 // pred_fallthru
      _
    // Predicated region
    $region50: #{tpu_custom_call.1} parent=1 // pred_check
      _
    $region51: #{tpu_custom_call.1} parent=1 // pred_check_branch
      %88 = sbr.rel (0) target = $region53
    $region52: #{tpu_custom_call.1} parent=1 // pred_region
      %89 = dma.done [#allocation10], 4096
    $region53: #{tpu_custom_call.1} parent=1 // pred_fallthru
      _
    %v91 = vld [vmem:[#allocation3] sm:$0xff]
    %v92 = vld [vmem:[#allocation3 + $0x8] sm:$0xff]
    %v93 = vld [vmem:[#allocation3 + $0x10] sm:$0xff]
    %v94 = vld [vmem:[#allocation3 + $0x18] sm:$0xff]
    %v95 = vld [vmem:[#allocation3 + $0x20] sm:$0xff]
    %v96 = vld [vmem:[#allocation3 + $0x28] sm:$0xff]
    %v97 = vld [vmem:[#allocation3 + $0x30] sm:$0xff]
    %v98 = vld [vmem:[#allocation3 + $0x38] sm:$0xff]
    %v99 = vld [vmem:[#allocation3 + $0x40] sm:$0xff]
    %v100 = vld [vmem:[#allocation3 + $0x48] sm:$0xff]
    %v101 = vld [vmem:[#allocation3 + $0x50] sm:$0xff]
    %v102 = vld [vmem:[#allocation3 + $0x58] sm:$0xff]
    %v103 = vld [vmem:[#allocation3 + $0x60] sm:$0xff]
    %v104 = vld [vmem:[#allocation3 + $0x68] sm:$0xff]
    %v105 = vld [vmem:[#allocation3 + $0x70] sm:$0xff]
    %v106 = vld [vmem:[#allocation3 + $0x78] sm:$0xff]
    %v107 = vld [vmem:[#allocation6] sm:$0xff]
    %v108 = vld [vmem:[#allocation6 + $0x8] sm:$0xff]
    %v109 = vld [vmem:[#allocation6 + $0x10] sm:$0xff]
    %v110 = vld [vmem:[#allocation6 + $0x18] sm:$0xff]
    %v111 = vld [vmem:[#allocation6 + $0x20] sm:$0xff]
    %v112 = vld [vmem:[#allocation6 + $0x28] sm:$0xff]
    %v113 = vld [vmem:[#allocation6 + $0x30] sm:$0xff]
    %v114 = vld [vmem:[#allocation6 + $0x38] sm:$0xff]
    %v115 = vld [vmem:[#allocation6 + $0x40] sm:$0xff]
    %v116 = vld [vmem:[#allocation6 + $0x48] sm:$0xff]
    %v117 = vld [vmem:[#allocation6 + $0x50] sm:$0xff]
    %v118 = vld [vmem:[#allocation6 + $0x58] sm:$0xff]
    %v119 = vld [vmem:[#allocation6 + $0x60] sm:$0xff]
    %v120 = vld [vmem:[#allocation6 + $0x68] sm:$0xff]
    %v121 = vld [vmem:[#allocation6 + $0x70] sm:$0xff]
    %v122 = vld [vmem:[#allocation6 + $0x78] sm:$0xff]
    %v123 = vld [vmem:[#allocation6 + $0x80] sm:$0xff]
    %v124 = vld [vmem:[#allocation6 + $0x88] sm:$0xff]
    %v125 = vld [vmem:[#allocation6 + $0x90] sm:$0xff]
    %v126 = vld [vmem:[#allocation6 + $0x98] sm:$0xff]
    %v127 = vld [vmem:[#allocation6 + $0xa0] sm:$0xff]
    %v128 = vld [vmem:[#allocation6 + $0xa8] sm:$0xff]
    %v129 = vld [vmem:[#allocation6 + $0xb0] sm:$0xff]
    %v130 = vld [vmem:[#allocation6 + $0xb8] sm:$0xff]
    %v131 = vld [vmem:[#allocation6 + $0xc0] sm:$0xff]
    %v132 = vld [vmem:[#allocation6 + $0xc8] sm:$0xff]
    %v133 = vld [vmem:[#allocation6 + $0xd0] sm:$0xff]
    %v134 = vld [vmem:[#allocation6 + $0xd8] sm:$0xff]
    %v135 = vld [vmem:[#allocation6 + $0xe0] sm:$0xff]
    %v136 = vld [vmem:[#allocation6 + $0xe8] sm:$0xff]
    %v137 = vld [vmem:[#allocation6 + $0xf0] sm:$0xff]
    %v138 = vld [vmem:[#allocation6 + $0xf8] sm:$0xff]
    %v139 = vld [vmem:[#allocation6 + $0x100] sm:$0xff]
    %v140 = vld [vmem:[#allocation6 + $0x108] sm:$0xff]
    %v141 = vld [vmem:[#allocation6 + $0x110] sm:$0xff]
    %v142 = vld [vmem:[#allocation6 + $0x118] sm:$0xff]
    %v143 = vld [vmem:[#allocation6 + $0x120] sm:$0xff]
    %v144 = vld [vmem:[#allocation6 + $0x128] sm:$0xff]
    %v145 = vld [vmem:[#allocation6 + $0x130] sm:$0xff]
    %v146 = vld [vmem:[#allocation6 + $0x138] sm:$0xff]
    %v147 = vld [vmem:[#allocation6 + $0x140] sm:$0xff]
    %v148 = vld [vmem:[#allocation6 + $0x148] sm:$0xff]
    %v149 = vld [vmem:[#allocation6 + $0x150] sm:$0xff]
    %v150 = vld [vmem:[#allocation6 + $0x158] sm:$0xff]
    %v151 = vld [vmem:[#allocation6 + $0x160] sm:$0xff]
    %v152 = vld [vmem:[#allocation6 + $0x168] sm:$0xff]
    %v153 = vld [vmem:[#allocation6 + $0x170] sm:$0xff]
    %v154 = vld [vmem:[#allocation6 + $0x178] sm:$0xff]
    %v155 = vld [vmem:[#allocation6 + $0x180] sm:$0xff]
    %v156 = vld [vmem:[#allocation6 + $0x188] sm:$0xff]
    %v157 = vld [vmem:[#allocation6 + $0x190] sm:$0xff]
    %v158 = vld [vmem:[#allocation6 + $0x198] sm:$0xff]
    %v159 = vld [vmem:[#allocation6 + $0x1a0] sm:$0xff]
    %v160 = vld [vmem:[#allocation6 + $0x1a8] sm:$0xff]
    %v161 = vld [vmem:[#allocation6 + $0x1b0] sm:$0xff]
    %v162 = vld [vmem:[#allocation6 + $0x1b8] sm:$0xff]
    %v163 = vld [vmem:[#allocation6 + $0x1c0] sm:$0xff]
    %v164 = vld [vmem:[#allocation6 + $0x1c8] sm:$0xff]
    %v165 = vld [vmem:[#allocation6 + $0x1d0] sm:$0xff]
    %v166 = vld [vmem:[#allocation6 + $0x1d8] sm:$0xff]
    %v167 = vld [vmem:[#allocation6 + $0x1e0] sm:$0xff]
    %v168 = vld [vmem:[#allocation6 + $0x1e8] sm:$0xff]
    %v169 = vld [vmem:[#allocation6 + $0x1f0] sm:$0xff]
    %v170 = vld [vmem:[#allocation6 + $0x1f8] sm:$0xff]
    %v171 = vld [vmem:[#allocation6 + $0x200] sm:$0xff]
    %v172 = vld [vmem:[#allocation6 + $0x208] sm:$0xff]
    %v173 = vld [vmem:[#allocation6 + $0x210] sm:$0xff]
    %v174 = vld [vmem:[#allocation6 + $0x218] sm:$0xff]
    %v175 = vld [vmem:[#allocation6 + $0x220] sm:$0xff]
    %v176 = vld [vmem:[#allocation6 + $0x228] sm:$0xff]
    %v177 = vld [vmem:[#allocation6 + $0x230] sm:$0xff]
    %v178 = vld [vmem:[#allocation6 + $0x238] sm:$0xff]
    %v179 = vld [vmem:[#allocation6 + $0x240] sm:$0xff]
    %v180 = vld [vmem:[#allocation6 + $0x248] sm:$0xff]
    %v181 = vld [vmem:[#allocation6 + $0x250] sm:$0xff]
    %v182 = vld [vmem:[#allocation6 + $0x258] sm:$0xff]
    %v183 = vld [vmem:[#allocation6 + $0x260] sm:$0xff]
    %v184 = vld [vmem:[#allocation6 + $0x268] sm:$0xff]
    %v185 = vld [vmem:[#allocation6 + $0x270] sm:$0xff]
    %v186 = vld [vmem:[#allocation6 + $0x278] sm:$0xff]
    %v187 = vld [vmem:[#allocation6 + $0x280] sm:$0xff]
    %v188 = vld [vmem:[#allocation6 + $0x288] sm:$0xff]
    %v189 = vld [vmem:[#allocation6 + $0x290] sm:$0xff]
    %v190 = vld [vmem:[#allocation6 + $0x298] sm:$0xff]
    %v191 = vld [vmem:[#allocation6 + $0x2a0] sm:$0xff]
    %v192 = vld [vmem:[#allocation6 + $0x2a8] sm:$0xff]
    %v193 = vld [vmem:[#allocation6 + $0x2b0] sm:$0xff]
    %v194 = vld [vmem:[#allocation6 + $0x2b8] sm:$0xff]
    %v195 = vld [vmem:[#allocation6 + $0x2c0] sm:$0xff]
    %v196 = vld [vmem:[#allocation6 + $0x2c8] sm:$0xff]
    %v197 = vld [vmem:[#allocation6 + $0x2d0] sm:$0xff]
    %v198 = vld [vmem:[#allocation6 + $0x2d8] sm:$0xff]
    %v199 = vld [vmem:[#allocation6 + $0x2e0] sm:$0xff]
    %v200 = vld [vmem:[#allocation6 + $0x2e8] sm:$0xff]
    %v201 = vld [vmem:[#allocation6 + $0x2f0] sm:$0xff]
    %v202 = vld [vmem:[#allocation6 + $0x2f8] sm:$0xff]
    %v203 = vld [vmem:[#allocation6 + $0x300] sm:$0xff]
    %v204 = vld [vmem:[#allocation6 + $0x308] sm:$0xff]
    %v205 = vld [vmem:[#allocation6 + $0x310] sm:$0xff]
    %v206 = vld [vmem:[#allocation6 + $0x318] sm:$0xff]
    %v207 = vld [vmem:[#allocation6 + $0x320] sm:$0xff]
    %v208 = vld [vmem:[#allocation6 + $0x328] sm:$0xff]
    %v209 = vld [vmem:[#allocation6 + $0x330] sm:$0xff]
    %v210 = vld [vmem:[#allocation6 + $0x338] sm:$0xff]
    %v211 = vld [vmem:[#allocation6 + $0x340] sm:$0xff]
    %v212 = vld [vmem:[#allocation6 + $0x348] sm:$0xff]
    %v213 = vld [vmem:[#allocation6 + $0x350] sm:$0xff]
    %v214 = vld [vmem:[#allocation6 + $0x358] sm:$0xff]
    %v215 = vld [vmem:[#allocation6 + $0x360] sm:$0xff]
    %v216 = vld [vmem:[#allocation6 + $0x368] sm:$0xff]
    %v217 = vld [vmem:[#allocation6 + $0x370] sm:$0xff]
    %v218 = vld [vmem:[#allocation6 + $0x378] sm:$0xff]
    %v219 = vld [vmem:[#allocation6 + $0x380] sm:$0xff]
    %v220 = vld [vmem:[#allocation6 + $0x388] sm:$0xff]
    %v221 = vld [vmem:[#allocation6 + $0x390] sm:$0xff]
    %v222 = vld [vmem:[#allocation6 + $0x398] sm:$0xff]
    %v223 = vld [vmem:[#allocation6 + $0x3a0] sm:$0xff]
    %v224 = vld [vmem:[#allocation6 + $0x3a8] sm:$0xff]
    %v225 = vld [vmem:[#allocation6 + $0x3b0] sm:$0xff]
    %v226 = vld [vmem:[#allocation6 + $0x3b8] sm:$0xff]
    %v227 = vld [vmem:[#allocation6 + $0x3c0] sm:$0xff]
    %v228 = vld [vmem:[#allocation6 + $0x3c8] sm:$0xff]
    %v229 = vld [vmem:[#allocation6 + $0x3d0] sm:$0xff]
    %v230 = vld [vmem:[#allocation6 + $0x3d8] sm:$0xff]
    %v231 = vld [vmem:[#allocation6 + $0x3e0] sm:$0xff]
    %v232 = vld [vmem:[#allocation6 + $0x3e8] sm:$0xff]
    %v233 = vld [vmem:[#allocation6 + $0x3f0] sm:$0xff]
    %v234 = vld [vmem:[#allocation6 + $0x3f8] sm:$0xff]
    %v235 = vld [vmem:[%s2] sm:$0xff]
    %v237 = vlaneseq
    %v238 = vshrl.u32 %v237, 7
    %v239 = vsub.s32 0, %v238
    %v240 = vrot.slane %v235, %v239
    %v241 = vlaneseq
    %v242 = vshrl.u32 %v241, 7
    %v243 = vsub.s32 1, %v242
    %v244 = vrot.slane %v235, %v243
    %v245 = vlaneseq
    %v246 = vshrl.u32 %v245, 7
    %v247 = vsub.s32 2, %v246
    %v248 = vrot.slane %v235, %v247
    %v249 = vlaneseq
    %v250 = vshrl.u32 %v249, 7
    %v251 = vsub.s32 3, %v250
    %v252 = vrot.slane %v235, %v251
    %v253 = vlaneseq
    %v254 = vshrl.u32 %v253, 7
    %v255 = vsub.s32 4, %v254
    %v256 = vrot.slane %v235, %v255
    %v257 = vlaneseq
    %v258 = vshrl.u32 %v257, 7
    %v259 = vsub.s32 5, %v258
    %v260 = vrot.slane %v235, %v259
    %v261 = vlaneseq
    %v262 = vshrl.u32 %v261, 7
    %v263 = vsub.s32 6, %v262
    %v264 = vrot.slane %v235, %v263
    %v265 = vlaneseq
    %v266 = vshrl.u32 %v265, 7
    %v267 = vsub.s32 7, %v266
    %v268 = vrot.slane %v235, %v267
    %v293 = vunpack.c.l.b16 %v91
    %v294 = vunpack.c.h.b16 %v91
    %v295 = vunpack.c.l.b16 %v92
    %v296 = vunpack.c.h.b16 %v92
    %v297 = vunpack.c.l.b16 %v93
    %v298 = vunpack.c.h.b16 %v93
    %v299 = vunpack.c.l.b16 %v94
    %v300 = vunpack.c.h.b16 %v94
    %v301 = vunpack.c.l.b16 %v95
    %v302 = vunpack.c.h.b16 %v95
    %v303 = vunpack.c.l.b16 %v96
    %v304 = vunpack.c.h.b16 %v96
    %v305 = vunpack.c.l.b16 %v97
    %v306 = vunpack.c.h.b16 %v97
    %v307 = vunpack.c.l.b16 %v98
    %v308 = vunpack.c.h.b16 %v98
    %v309 = vunpack.c.l.b16 %v99
    %v310 = vunpack.c.h.b16 %v99
    %v311 = vunpack.c.l.b16 %v100
    %v312 = vunpack.c.h.b16 %v100
    %v313 = vunpack.c.l.b16 %v101
    %v314 = vunpack.c.h.b16 %v101
    %v315 = vunpack.c.l.b16 %v102
    %v316 = vunpack.c.h.b16 %v102
    %v317 = vunpack.c.l.b16 %v103
    %v318 = vunpack.c.h.b16 %v103
    %v319 = vunpack.c.l.b16 %v104
    %v320 = vunpack.c.h.b16 %v104
    %v321 = vunpack.c.l.b16 %v105
    %v322 = vunpack.c.h.b16 %v105
    %v323 = vunpack.c.l.b16 %v106
    %v324 = vunpack.c.h.b16 %v106
    %v325 = vpack.c.b16 %v295, %v293
    %v326 = vpack.c.b16 %v296, %v294
    %v327 = vpack.c.b16 %v299, %v297
    %v328 = vpack.c.b16 %v300, %v298
    %v329 = vpack.c.b16 %v303, %v301
    %v330 = vpack.c.b16 %v304, %v302
    %v331 = vpack.c.b16 %v307, %v305
    %v332 = vpack.c.b16 %v308, %v306
    %v333 = vpack.c.b16 %v311, %v309
    %v334 = vpack.c.b16 %v312, %v310
    %v335 = vpack.c.b16 %v315, %v313
    %v336 = vpack.c.b16 %v316, %v314
    %v337 = vpack.c.b16 %v319, %v317
    %v338 = vpack.c.b16 %v320, %v318
    %v339 = vpack.c.b16 %v323, %v321
    %v340 = vpack.c.b16 %v324, %v322
    %v485 = vunpack.c.l.b16 %v107
    %v486 = vunpack.c.h.b16 %v107
    %v487 = vunpack.c.l.b16 %v108
    %v488 = vunpack.c.h.b16 %v108
    %v489 = vunpack.c.l.b16 %v109
    %v490 = vunpack.c.h.b16 %v109
    %v491 = vunpack.c.l.b16 %v110
    %v492 = vunpack.c.h.b16 %v110
    %v493 = vunpack.c.l.b16 %v111
    %v494 = vunpack.c.h.b16 %v111
    %v495 = vunpack.c.l.b16 %v112
    %v496 = vunpack.c.h.b16 %v112
    %v497 = vunpack.c.l.b16 %v113
    %v498 = vunpack.c.h.b16 %v113
    %v499 = vunpack.c.l.b16 %v114
    %v500 = vunpack.c.h.b16 %v114
    %v501 = vunpack.c.l.b16 %v115
    %v502 = vunpack.c.h.b16 %v115
    %v503 = vunpack.c.l.b16 %v116
    %v504 = vunpack.c.h.b16 %v116
    %v505 = vunpack.c.l.b16 %v117
    %v506 = vunpack.c.h.b16 %v117
    %v507 = vunpack.c.l.b16 %v118
    %v508 = vunpack.c.h.b16 %v118
    %v509 = vunpack.c.l.b16 %v119
    %v510 = vunpack.c.h.b16 %v119
    %v511 = vunpack.c.l.b16 %v120
    %v512 = vunpack.c.h.b16 %v120
    %v513 = vunpack.c.l.b16 %v121
    %v514 = vunpack.c.h.b16 %v121
    %v515 = vunpack.c.l.b16 %v122
    %v516 = vunpack.c.h.b16 %v122
    %v517 = vunpack.c.l.b16 %v123
    %v518 = vunpack.c.h.b16 %v123
    %v519 = vunpack.c.l.b16 %v124
    %v520 = vunpack.c.h.b16 %v124
    %v521 = vunpack.c.l.b16 %v125
    %v522 = vunpack.c.h.b16 %v125
    %v523 = vunpack.c.l.b16 %v126
    %v524 = vunpack.c.h.b16 %v126
    %v525 = vunpack.c.l.b16 %v127
    %v526 = vunpack.c.h.b16 %v127
    %v527 = vunpack.c.l.b16 %v128
    %v528 = vunpack.c.h.b16 %v128
    %v529 = vunpack.c.l.b16 %v129
    %v530 = vunpack.c.h.b16 %v129
    %v531 = vunpack.c.l.b16 %v130
    %v532 = vunpack.c.h.b16 %v130
    %v533 = vunpack.c.l.b16 %v131
    %v534 = vunpack.c.h.b16 %v131
    %v535 = vunpack.c.l.b16 %v132
    %v536 = vunpack.c.h.b16 %v132
    %v537 = vunpack.c.l.b16 %v133
    %v538 = vunpack.c.h.b16 %v133
    %v539 = vunpack.c.l.b16 %v134
    %v540 = vunpack.c.h.b16 %v134
    %v541 = vunpack.c.l.b16 %v135
    %v542 = vunpack.c.h.b16 %v135
    %v543 = vunpack.c.l.b16 %v136
    %v544 = vunpack.c.h.b16 %v136
    %v545 = vunpack.c.l.b16 %v137
    %v546 = vunpack.c.h.b16 %v137
    %v547 = vunpack.c.l.b16 %v138
    %v548 = vunpack.c.h.b16 %v138
    %v549 = vunpack.c.l.b16 %v139
    %v550 = vunpack.c.h.b16 %v139
    %v551 = vunpack.c.l.b16 %v140
    %v552 = vunpack.c.h.b16 %v140
    %v553 = vunpack.c.l.b16 %v141
    %v554 = vunpack.c.h.b16 %v141
    %v555 = vunpack.c.l.b16 %v142
    %v556 = vunpack.c.h.b16 %v142
    %v557 = vunpack.c.l.b16 %v143
    %v558 = vunpack.c.h.b16 %v143
    %v559 = vunpack.c.l.b16 %v144
    %v560 = vunpack.c.h.b16 %v144
    %v561 = vunpack.c.l.b16 %v145
    %v562 = vunpack.c.h.b16 %v145
    %v563 = vunpack.c.l.b16 %v146
    %v564 = vunpack.c.h.b16 %v146
    %v565 = vunpack.c.l.b16 %v147
    %v566 = vunpack.c.h.b16 %v147
    %v567 = vunpack.c.l.b16 %v148
    %v568 = vunpack.c.h.b16 %v148
    %v569 = vunpack.c.l.b16 %v149
    %v570 = vunpack.c.h.b16 %v149
    %v571 = vunpack.c.l.b16 %v150
    %v572 = vunpack.c.h.b16 %v150
    %v573 = vunpack.c.l.b16 %v151
    %v574 = vunpack.c.h.b16 %v151
    %v575 = vunpack.c.l.b16 %v152
    %v576 = vunpack.c.h.b16 %v152
    %v577 = vunpack.c.l.b16 %v153
    %v578 = vunpack.c.h.b16 %v153
    %v579 = vunpack.c.l.b16 %v154
    %v580 = vunpack.c.h.b16 %v154
    %v581 = vunpack.c.l.b16 %v155
    %v582 = vunpack.c.h.b16 %v155
    %v583 = vunpack.c.l.b16 %v156
    %v584 = vunpack.c.h.b16 %v156
    %v585 = vunpack.c.l.b16 %v157
    %v586 = vunpack.c.h.b16 %v157
    %v587 = vunpack.c.l.b16 %v158
    %v588 = vunpack.c.h.b16 %v158
    %v589 = vunpack.c.l.b16 %v159
    %v590 = vunpack.c.h.b16 %v159
    %v591 = vunpack.c.l.b16 %v160
    %v592 = vunpack.c.h.b16 %v160
    %v593 = vunpack.c.l.b16 %v161
    %v594 = vunpack.c.h.b16 %v161
    %v595 = vunpack.c.l.b16 %v162
    %v596 = vunpack.c.h.b16 %v162
    %v597 = vunpack.c.l.b16 %v163
    %v598 = vunpack.c.h.b16 %v163
    %v599 = vunpack.c.l.b16 %v164
    %v600 = vunpack.c.h.b16 %v164
    %v601 = vunpack.c.l.b16 %v165
    %v602 = vunpack.c.h.b16 %v165
    %v603 = vunpack.c.l.b16 %v166
    %v604 = vunpack.c.h.b16 %v166
    %v605 = vunpack.c.l.b16 %v167
    %v606 = vunpack.c.h.b16 %v167
    %v607 = vunpack.c.l.b16 %v168
    %v608 = vunpack.c.h.b16 %v168
    %v609 = vunpack.c.l.b16 %v169
    %v610 = vunpack.c.h.b16 %v169
    %v611 = vunpack.c.l.b16 %v170
    %v612 = vunpack.c.h.b16 %v170
    %v613 = vunpack.c.l.b16 %v171
    %v614 = vunpack.c.h.b16 %v171
    %v615 = vunpack.c.l.b16 %v172
    %v616 = vunpack.c.h.b16 %v172
    %v617 = vunpack.c.l.b16 %v173
    %v618 = vunpack.c.h.b16 %v173
    %v619 = vunpack.c.l.b16 %v174
    %v620 = vunpack.c.h.b16 %v174
    %v621 = vunpack.c.l.b16 %v175
    %v622 = vunpack.c.h.b16 %v175
    %v623 = vunpack.c.l.b16 %v176
    %v624 = vunpack.c.h.b16 %v176
    %v625 = vunpack.c.l.b16 %v177
    %v626 = vunpack.c.h.b16 %v177
    %v627 = vunpack.c.l.b16 %v178
    %v628 = vunpack.c.h.b16 %v178
    %v629 = vunpack.c.l.b16 %v179
    %v630 = vunpack.c.h.b16 %v179
    %v631 = vunpack.c.l.b16 %v180
    %v632 = vunpack.c.h.b16 %v180
    %v633 = vunpack.c.l.b16 %v181
    %v634 = vunpack.c.h.b16 %v181
    %v635 = vunpack.c.l.b16 %v182
    %v636 = vunpack.c.h.b16 %v182
    %v637 = vunpack.c.l.b16 %v183
    %v638 = vunpack.c.h.b16 %v183
    %v639 = vunpack.c.l.b16 %v184
    %v640 = vunpack.c.h.b16 %v184
    %v641 = vunpack.c.l.b16 %v185
    %v642 = vunpack.c.h.b16 %v185
    %v643 = vunpack.c.l.b16 %v186
    %v644 = vunpack.c.h.b16 %v186
    %v645 = vunpack.c.l.b16 %v187
    %v646 = vunpack.c.h.b16 %v187
    %v647 = vunpack.c.l.b16 %v188
    %v648 = vunpack.c.h.b16 %v188
    %v649 = vunpack.c.l.b16 %v189
    %v650 = vunpack.c.h.b16 %v189
    %v651 = vunpack.c.l.b16 %v190
    %v652 = vunpack.c.h.b16 %v190
    %v653 = vunpack.c.l.b16 %v191
    %v654 = vunpack.c.h.b16 %v191
    %v655 = vunpack.c.l.b16 %v192
    %v656 = vunpack.c.h.b16 %v192
    %v657 = vunpack.c.l.b16 %v193
    %v658 = vunpack.c.h.b16 %v193
    %v659 = vunpack.c.l.b16 %v194
    %v660 = vunpack.c.h.b16 %v194
    %v661 = vunpack.c.l.b16 %v195
    %v662 = vunpack.c.h.b16 %v195
    %v663 = vunpack.c.l.b16 %v196
    %v664 = vunpack.c.h.b16 %v196
    %v665 = vunpack.c.l.b16 %v197
    %v666 = vunpack.c.h.b16 %v197
    %v667 = vunpack.c.l.b16 %v198
    %v668 = vunpack.c.h.b16 %v198
    %v669 = vunpack.c.l.b16 %v199
    %v670 = vunpack.c.h.b16 %v199
    %v671 = vunpack.c.l.b16 %v200
    %v672 = vunpack.c.h.b16 %v200
    %v673 = vunpack.c.l.b16 %v201
    %v674 = vunpack.c.h.b16 %v201
    %v675 = vunpack.c.l.b16 %v202
    %v676 = vunpack.c.h.b16 %v202
    %v677 = vunpack.c.l.b16 %v203
    %v678 = vunpack.c.h.b16 %v203
    %v679 = vunpack.c.l.b16 %v204
    %v680 = vunpack.c.h.b16 %v204
    %v681 = vunpack.c.l.b16 %v205
    %v682 = vunpack.c.h.b16 %v205
    %v683 = vunpack.c.l.b16 %v206
    %v684 = vunpack.c.h.b16 %v206
    %v685 = vunpack.c.l.b16 %v207
    %v686 = vunpack.c.h.b16 %v207
    %v687 = vunpack.c.l.b16 %v208
    %v688 = vunpack.c.h.b16 %v208
    %v689 = vunpack.c.l.b16 %v209
    %v690 = vunpack.c.h.b16 %v209
    %v691 = vunpack.c.l.b16 %v210
    %v692 = vunpack.c.h.b16 %v210
    %v693 = vunpack.c.l.b16 %v211
    %v694 = vunpack.c.h.b16 %v211
    %v695 = vunpack.c.l.b16 %v212
    %v696 = vunpack.c.h.b16 %v212
    %v697 = vunpack.c.l.b16 %v213
    %v698 = vunpack.c.h.b16 %v213
    %v699 = vunpack.c.l.b16 %v214
    %v700 = vunpack.c.h.b16 %v214
    %v701 = vunpack.c.l.b16 %v215
    %v702 = vunpack.c.h.b16 %v215
    %v703 = vunpack.c.l.b16 %v216
    %v704 = vunpack.c.h.b16 %v216
    %v705 = vunpack.c.l.b16 %v217
    %v706 = vunpack.c.h.b16 %v217
    %v707 = vunpack.c.l.b16 %v218
    %v708 = vunpack.c.h.b16 %v218
    %v709 = vunpack.c.l.b16 %v219
    %v710 = vunpack.c.h.b16 %v219
    %v711 = vunpack.c.l.b16 %v220
    %v712 = vunpack.c.h.b16 %v220
    %v713 = vunpack.c.l.b16 %v221
    %v714 = vunpack.c.h.b16 %v221
    %v715 = vunpack.c.l.b16 %v222
    %v716 = vunpack.c.h.b16 %v222
    %v717 = vunpack.c.l.b16 %v223
    %v718 = vunpack.c.h.b16 %v223
    %v719 = vunpack.c.l.b16 %v224
    %v720 = vunpack.c.h.b16 %v224
    %v721 = vunpack.c.l.b16 %v225
    %v722 = vunpack.c.h.b16 %v225
    %v723 = vunpack.c.l.b16 %v226
    %v724 = vunpack.c.h.b16 %v226
    %v725 = vunpack.c.l.b16 %v227
    %v726 = vunpack.c.h.b16 %v227
    %v727 = vunpack.c.l.b16 %v228
    %v728 = vunpack.c.h.b16 %v228
    %v729 = vunpack.c.l.b16 %v229
    %v730 = vunpack.c.h.b16 %v229
    %v731 = vunpack.c.l.b16 %v230
    %v732 = vunpack.c.h.b16 %v230
    %v733 = vunpack.c.l.b16 %v231
    %v734 = vunpack.c.h.b16 %v231
    %v735 = vunpack.c.l.b16 %v232
    %v736 = vunpack.c.h.b16 %v232
    %v737 = vunpack.c.l.b16 %v233
    %v738 = vunpack.c.h.b16 %v233
    %v739 = vunpack.c.l.b16 %v234
    %v740 = vunpack.c.h.b16 %v234
    %v741 = vpack.c.b16 %v493, %v485
    %v742 = vpack.c.b16 %v494, %v486
    %v743 = vpack.c.b16 %v495, %v487
    %v744 = vpack.c.b16 %v496, %v488
    %v745 = vpack.c.b16 %v497, %v489
    %v746 = vpack.c.b16 %v498, %v490
    %v747 = vpack.c.b16 %v499, %v491
    %v748 = vpack.c.b16 %v500, %v492
    %v749 = vpack.c.b16 %v509, %v501
    %v750 = vpack.c.b16 %v510, %v502
    %v751 = vpack.c.b16 %v511, %v503
    %v752 = vpack.c.b16 %v512, %v504
    %v753 = vpack.c.b16 %v513, %v505
    %v754 = vpack.c.b16 %v514, %v506
    %v755 = vpack.c.b16 %v515, %v507
    %v756 = vpack.c.b16 %v516, %v508
    %v757 = vpack.c.b16 %v525, %v517
    %v758 = vpack.c.b16 %v526, %v518
    %v759 = vpack.c.b16 %v527, %v519
    %v760 = vpack.c.b16 %v528, %v520
    %v761 = vpack.c.b16 %v529, %v521
    %v762 = vpack.c.b16 %v530, %v522
    %v763 = vpack.c.b16 %v531, %v523
    %v764 = vpack.c.b16 %v532, %v524
    %v765 = vpack.c.b16 %v541, %v533
    %v766 = vpack.c.b16 %v542, %v534
    %v767 = vpack.c.b16 %v543, %v535
    %v768 = vpack.c.b16 %v544, %v536
    %v769 = vpack.c.b16 %v545, %v537
    %v770 = vpack.c.b16 %v546, %v538
    %v771 = vpack.c.b16 %v547, %v539
    %v772 = vpack.c.b16 %v548, %v540
    %v773 = vpack.c.b16 %v557, %v549
    %v774 = vpack.c.b16 %v558, %v550
    %v775 = vpack.c.b16 %v559, %v551
    %v776 = vpack.c.b16 %v560, %v552
    %v777 = vpack.c.b16 %v561, %v553
    %v778 = vpack.c.b16 %v562, %v554
    %v779 = vpack.c.b16 %v563, %v555
    %v780 = vpack.c.b16 %v564, %v556
    %v781 = vpack.c.b16 %v573, %v565
    %v782 = vpack.c.b16 %v574, %v566
    %v783 = vpack.c.b16 %v575, %v567
    %v784 = vpack.c.b16 %v576, %v568
    %v785 = vpack.c.b16 %v577, %v569
    %v786 = vpack.c.b16 %v578, %v570
    %v787 = vpack.c.b16 %v579, %v571
    %v788 = vpack.c.b16 %v580, %v572
    %v789 = vpack.c.b16 %v589, %v581
    %v790 = vpack.c.b16 %v590, %v582
    %v791 = vpack.c.b16 %v591, %v583
    %v792 = vpack.c.b16 %v592, %v584
    %v793 = vpack.c.b16 %v593, %v585
    %v794 = vpack.c.b16 %v594, %v586
    %v795 = vpack.c.b16 %v595, %v587
    %v796 = vpack.c.b16 %v596, %v588
    %v797 = vpack.c.b16 %v605, %v597
    %v798 = vpack.c.b16 %v606, %v598
    %v799 = vpack.c.b16 %v607, %v599
    %v800 = vpack.c.b16 %v608, %v600
    %v801 = vpack.c.b16 %v609, %v601
    %v802 = vpack.c.b16 %v610, %v602
    %v803 = vpack.c.b16 %v611, %v603
    %v804 = vpack.c.b16 %v612, %v604
    %v805 = vpack.c.b16 %v621, %v613
    %v806 = vpack.c.b16 %v622, %v614
    %v807 = vpack.c.b16 %v623, %v615
    %v808 = vpack.c.b16 %v624, %v616
    %v809 = vpack.c.b16 %v625, %v617
    %v810 = vpack.c.b16 %v626, %v618
    %v811 = vpack.c.b16 %v627, %v619
    %v812 = vpack.c.b16 %v628, %v620
    %v813 = vpack.c.b16 %v637, %v629
    %v814 = vpack.c.b16 %v638, %v630
    %v815 = vpack.c.b16 %v639, %v631
    %v816 = vpack.c.b16 %v640, %v632
    %v817 = vpack.c.b16 %v641, %v633
    %v818 = vpack.c.b16 %v642, %v634
    %v819 = vpack.c.b16 %v643, %v635
    %v820 = vpack.c.b16 %v644, %v636
    %v821 = vpack.c.b16 %v653, %v645
    %v822 = vpack.c.b16 %v654, %v646
    %v823 = vpack.c.b16 %v655, %v647
    %v824 = vpack.c.b16 %v656, %v648
    %v825 = vpack.c.b16 %v657, %v649
    %v826 = vpack.c.b16 %v658, %v650
    %v827 = vpack.c.b16 %v659, %v651
    %v828 = vpack.c.b16 %v660, %v652
    %v829 = vpack.c.b16 %v669, %v661
    %v830 = vpack.c.b16 %v670, %v662
    %v831 = vpack.c.b16 %v671, %v663
    %v832 = vpack.c.b16 %v672, %v664
    %v833 = vpack.c.b16 %v673, %v665
    %v834 = vpack.c.b16 %v674, %v666
    %v835 = vpack.c.b16 %v675, %v667
    %v836 = vpack.c.b16 %v676, %v668
    %v837 = vpack.c.b16 %v685, %v677
    %v838 = vpack.c.b16 %v686, %v678
    %v839 = vpack.c.b16 %v687, %v679
    %v840 = vpack.c.b16 %v688, %v680
    %v841 = vpack.c.b16 %v689, %v681
    %v842 = vpack.c.b16 %v690, %v682
    %v843 = vpack.c.b16 %v691, %v683
    %v844 = vpack.c.b16 %v692, %v684
    %v845 = vpack.c.b16 %v701, %v693
    %v846 = vpack.c.b16 %v702, %v694
    %v847 = vpack.c.b16 %v703, %v695
    %v848 = vpack.c.b16 %v704, %v696
    %v849 = vpack.c.b16 %v705, %v697
    %v850 = vpack.c.b16 %v706, %v698
    %v851 = vpack.c.b16 %v707, %v699
    %v852 = vpack.c.b16 %v708, %v700
    %v853 = vpack.c.b16 %v717, %v709
    %v854 = vpack.c.b16 %v718, %v710
    %v855 = vpack.c.b16 %v719, %v711
    %v856 = vpack.c.b16 %v720, %v712
    %v857 = vpack.c.b16 %v721, %v713
    %v858 = vpack.c.b16 %v722, %v714
    %v859 = vpack.c.b16 %v723, %v715
    %v860 = vpack.c.b16 %v724, %v716
    %v861 = vpack.c.b16 %v733, %v725
    %v862 = vpack.c.b16 %v734, %v726
    %v863 = vpack.c.b16 %v735, %v727
    %v864 = vpack.c.b16 %v736, %v728
    %v865 = vpack.c.b16 %v737, %v729
    %v866 = vpack.c.b16 %v738, %v730
    %v867 = vpack.c.b16 %v739, %v731
    %v868 = vpack.c.b16 %v740, %v732
    %997 = vmatprep.subr.bf16.mxu0 %v742
    %998 = vmatpush1.bf16.msra.mxu0 %v741
    %999 = vmatprep.subr.bf16.mxu0 %v750
    %1000 = vmatpush1.bf16.msra.mxu0 %v749
    %1001 = vmatprep.subr.bf16.mxu0 %v758
    %1002 = vmatpush1.bf16.msra.mxu0 %v757
    %1003 = vmatprep.subr.bf16.mxu0 %v766
    %1004 = vmatpush1.bf16.msra.mxu0 %v765
    %1005 = vmatprep.subr.bf16.mxu0 %v774
    %1006 = vmatpush1.bf16.msra.mxu0 %v773
    %1007 = vmatprep.subr.bf16.mxu0 %v782
    %1008 = vmatpush1.bf16.msra.mxu0 %v781
    %1009 = vmatprep.subr.bf16.mxu0 %v790
    %1010 = vmatpush1.bf16.msra.mxu0 %v789
    %1011 = vmatprep.subr.bf16.mxu0 %v798
    %1012 = vmatpush1.bf16.msra.mxu0 %v797
    %1013 = vmatprep.subr.bf16.mxu0 %v806
    %1014 = vmatpush1.bf16.msra.mxu0 %v805
    %1015 = vmatprep.subr.bf16.mxu0 %v814
    %1016 = vmatpush1.bf16.msra.mxu0 %v813
    %1017 = vmatprep.subr.bf16.mxu0 %v822
    %1018 = vmatpush1.bf16.msra.mxu0 %v821
    %1019 = vmatprep.subr.bf16.mxu0 %v830
    %1020 = vmatpush1.bf16.msra.mxu0 %v829
    %1021 = vmatprep.subr.bf16.mxu0 %v838
    %1022 = vmatpush1.bf16.msra.mxu0 %v837
    %1023 = vmatprep.subr.bf16.mxu0 %v846
    %1024 = vmatpush1.bf16.msra.mxu0 %v845
    %1025 = vmatprep.subr.bf16.mxu0 %v854
    %1026 = vmatpush1.bf16.msra.mxu0 %v853
    %1027 = vmatprep.subr.bf16.mxu0 %v862
    %1028 = vmatpush1.bf16.msra.mxu0 %v861
    %1029 = vmatprep.mubr.bf16.mxu0 %v326
    %1030 = vmatmul.mubr.bf16.gmra.mrb[0].mxu0 %v325
    %v1031 = vpop.f32.mrb[0].mxu0
    %v1032 = vadd.f32 %v240, %v1031
    %v1033 = vpop.f32.mrb[0].mxu0
    %v1034 = vadd.f32 %v244, %v1033
    %v1035 = vpop.f32.mrb[0].mxu0
    %v1036 = vadd.f32 %v240, %v1035
    %v1037 = vpop.f32.mrb[0].mxu0
    %v1038 = vadd.f32 %v244, %v1037
    %1039 = vmatprep.mubr.bf16.mxu0 %v328
    %1040 = vmatmul.mubr.bf16.gmra.mrb[0].mxu0 %v327
    %v1041 = vpop.f32.mrb[0].mxu0
    %v1042 = vadd.f32 %v240, %v1041
    %v1043 = vpop.f32.mrb[0].mxu0
    %v1044 = vadd.f32 %v244, %v1043
    %v1045 = vpop.f32.mrb[0].mxu0
    %v1046 = vadd.f32 %v240, %v1045
    %v1047 = vpop.f32.mrb[0].mxu0
    %v1048 = vadd.f32 %v244, %v1047
    %1049 = vmatprep.mubr.bf16.mxu0 %v330
    %1050 = vmatmul.mubr.bf16.gmra.mrb[0].mxu0 %v329
    %v1051 = vpop.f32.mrb[0].mxu0
    %v1052 = vadd.f32 %v240, %v1051
    %v1053 = vpop.f32.mrb[0].mxu0
    %v1054 = vadd.f32 %v244, %v1053
    %v1055 = vpop.f32.mrb[0].mxu0
    %v1056 = vadd.f32 %v240, %v1055
    %v1057 = vpop.f32.mrb[0].mxu0
    %v1058 = vadd.f32 %v244, %v1057
    %1059 = vmatprep.mubr.bf16.mxu0 %v332
    %1060 = vmatmul.mubr.bf16.gmra.mrb[0].mxu0 %v331
    %v1061 = vpop.f32.mrb[0].mxu0
    %v1062 = vadd.f32 %v240, %v1061
    %v1063 = vpop.f32.mrb[0].mxu0
    %v1064 = vadd.f32 %v244, %v1063
    %v1065 = vpop.f32.mrb[0].mxu0
    %v1066 = vadd.f32 %v240, %v1065
    %v1067 = vpop.f32.mrb[0].mxu0
    %v1068 = vadd.f32 %v244, %v1067
    %1069 = vmatprep.mubr.bf16.mxu0 %v334
    %1070 = vmatmul.mubr.bf16.gmra.mrb[0].mxu0 %v333
    %v1071 = vpop.f32.mrb[0].mxu0
    %v1072 = vadd.f32 %v240, %v1071
    %v1073 = vpop.f32.mrb[0].mxu0
    %v1074 = vadd.f32 %v244, %v1073
    %v1075 = vpop.f32.mrb[0].mxu0
    %v1076 = vadd.f32 %v240, %v1075
    %v1077 = vpop.f32.mrb[0].mxu0
    %v1078 = vadd.f32 %v244, %v1077
    %1079 = vmatprep.mubr.bf16.mxu0 %v336
    %1080 = vmatmul.mubr.bf16.gmra.mrb[0].mxu0 %v335
    %v1081 = vpop.f32.mrb[0].mxu0
    %v1082 = vadd.f32 %v240, %v1081
    %v1083 = vpop.f32.mrb[0].mxu0
    %v1084 = vadd.f32 %v244, %v1083
    %v1085 = vpop.f32.mrb[0].mxu0
    %v1086 = vadd.f32 %v240, %v1085
    %v1087 = vpop.f32.mrb[0].mxu0
    %v1088 = vadd.f32 %v244, %v1087
    %1089 = vmatprep.mubr.bf16.mxu0 %v338
    %1090 = vmatmul.mubr.bf16.gmra.mrb[0].mxu0 %v337
    %v1091 = vpop.f32.mrb[0].mxu0
    %v1092 = vadd.f32 %v240, %v1091
    %v1093 = vpop.f32.mrb[0].mxu0
    %v1094 = vadd.f32 %v244, %v1093
    %v1095 = vpop.f32.mrb[0].mxu0
    %v1096 = vadd.f32 %v240, %v1095
    %v1097 = vpop.f32.mrb[0].mxu0
    %v1098 = vadd.f32 %v244, %v1097
    %1099 = vmatprep.mubr.bf16.mxu0 %v340
    %1100 = vmatmul.mubr.bf16.gmra.mrb[0].mxu0 %v339
    %v1101 = vpop.f32.mrb[0].mxu0
    %v1102 = vadd.f32 %v240, %v1101
    %v1103 = vpop.f32.mrb[0].mxu0
    %v1104 = vadd.f32 %v244, %v1103
    %v1105 = vpop.f32.mrb[0].mxu0
    %v1106 = vadd.f32 %v240, %v1105
    %v1107 = vpop.f32.mrb[0].mxu0
    %v1108 = vadd.f32 %v244, %v1107
    %1109 = vdwg.mxu0
    %1110 = vmatprep.subr.bf16.mxu0 %v744
    %1111 = vmatpush1.bf16.msra.mxu0 %v743
    %1112 = vmatprep.subr.bf16.mxu0 %v752
    %1113 = vmatpush1.bf16.msra.mxu0 %v751
    %1114 = vmatprep.subr.bf16.mxu0 %v760
    %1115 = vmatpush1.bf16.msra.mxu0 %v759
    %1116 = vmatprep.subr.bf16.mxu0 %v768
    %1117 = vmatpush1.bf16.msra.mxu0 %v767
    %1118 = vmatprep.subr.bf16.mxu0 %v776
    %1119 = vmatpush1.bf16.msra.mxu0 %v775
    %1120 = vmatprep.subr.bf16.mxu0 %v784
    %1121 = vmatpush1.bf16.msra.mxu0 %v783
    %1122 = vmatprep.subr.bf16.mxu0 %v792
    %1123 = vmatpush1.bf16.msra.mxu0 %v791
    %1124 = vmatprep.subr.bf16.mxu0 %v800
    %1125 = vmatpush1.bf16.msra.mxu0 %v799
    %1126 = vmatprep.subr.bf16.mxu0 %v808
    %1127 = vmatpush1.bf16.msra.mxu0 %v807
    %1128 = vmatprep.subr.bf16.mxu0 %v816
    %1129 = vmatpush1.bf16.msra.mxu0 %v815
    %1130 = vmatprep.subr.bf16.mxu0 %v824
    %1131 = vmatpush1.bf16.msra.mxu0 %v823
    %1132 = vmatprep.subr.bf16.mxu0 %v832
    %1133 = vmatpush1.bf16.msra.mxu0 %v831
    %1134 = vmatprep.subr.bf16.mxu0 %v840
    %1135 = vmatpush1.bf16.msra.mxu0 %v839
    %1136 = vmatprep.subr.bf16.mxu0 %v848
    %1137 = vmatpush1.bf16.msra.mxu0 %v847
    %1138 = vmatprep.subr.bf16.mxu0 %v856
    %1139 = vmatpush1.bf16.msra.mxu0 %v855
    %1140 = vmatprep.subr.bf16.mxu0 %v864
    %1141 = vmatpush1.bf16.msra.mxu0 %v863
    %1142 = vmatprep.mubr.bf16.mxu0 %v326
    %1143 = vmatmul.mubr.bf16.gmra.mrb[0].mxu0 %v325
    %v1144 = vpop.f32.mrb[0].mxu0
    %v1145 = vadd.f32 %v248, %v1144
    %v1146 = vpop.f32.mrb[0].mxu0
    %v1147 = vadd.f32 %v252, %v1146
    %v1148 = vpop.f32.mrb[0].mxu0
    %v1149 = vadd.f32 %v248, %v1148
    %v1150 = vpop.f32.mrb[0].mxu0
    %v1151 = vadd.f32 %v252, %v1150
    %1152 = vmatprep.mubr.bf16.mxu0 %v328
    %1153 = vmatmul.mubr.bf16.gmra.mrb[0].mxu0 %v327
    %v1154 = vpop.f32.mrb[0].mxu0
    %v1155 = vadd.f32 %v248, %v1154
    %v1156 = vpop.f32.mrb[0].mxu0
    %v1157 = vadd.f32 %v252, %v1156
    %v1158 = vpop.f32.mrb[0].mxu0
    %v1159 = vadd.f32 %v248, %v1158
    %v1160 = vpop.f32.mrb[0].mxu0
    %v1161 = vadd.f32 %v252, %v1160
    %1162 = vmatprep.mubr.bf16.mxu0 %v330
    %1163 = vmatmul.mubr.bf16.gmra.mrb[0].mxu0 %v329
    %v1164 = vpop.f32.mrb[0].mxu0
    %v1165 = vadd.f32 %v248, %v1164
    %v1166 = vpop.f32.mrb[0].mxu0
    %v1167 = vadd.f32 %v252, %v1166
    %v1168 = vpop.f32.mrb[0].mxu0
    %v1169 = vadd.f32 %v248, %v1168
    %v1170 = vpop.f32.mrb[0].mxu0
    %v1171 = vadd.f32 %v252, %v1170
    %1172 = vmatprep.mubr.bf16.mxu0 %v332
    %1173 = vmatmul.mubr.bf16.gmra.mrb[0].mxu0 %v331
    %v1174 = vpop.f32.mrb[0].mxu0
    %v1175 = vadd.f32 %v248, %v1174
    %v1176 = vpop.f32.mrb[0].mxu0
    %v1177 = vadd.f32 %v252, %v1176
    %v1178 = vpop.f32.mrb[0].mxu0
    %v1179 = vadd.f32 %v248, %v1178
    %v1180 = vpop.f32.mrb[0].mxu0
    %v1181 = vadd.f32 %v252, %v1180
    %1182 = vmatprep.mubr.bf16.mxu0 %v334
    %1183 = vmatmul.mubr.bf16.gmra.mrb[0].mxu0 %v333
    %v1184 = vpop.f32.mrb[0].mxu0
    %v1185 = vadd.f32 %v248, %v1184
    %v1186 = vpop.f32.mrb[0].mxu0
    %v1187 = vadd.f32 %v252, %v1186
    %v1188 = vpop.f32.mrb[0].mxu0
    %v1189 = vadd.f32 %v248, %v1188
    %v1190 = vpop.f32.mrb[0].mxu0
    %v1191 = vadd.f32 %v252, %v1190
    %1192 = vmatprep.mubr.bf16.mxu0 %v336
    %1193 = vmatmul.mubr.bf16.gmra.mrb[0].mxu0 %v335
    %v1194 = vpop.f32.mrb[0].mxu0
    %v1195 = vadd.f32 %v248, %v1194
    %v1196 = vpop.f32.mrb[0].mxu0
    %v1197 = vadd.f32 %v252, %v1196
    %v1198 = vpop.f32.mrb[0].mxu0
    %v1199 = vadd.f32 %v248, %v1198
    %v1200 = vpop.f32.mrb[0].mxu0
    %v1201 = vadd.f32 %v252, %v1200
    %1202 = vmatprep.mubr.bf16.mxu0 %v338
    %1203 = vmatmul.mubr.bf16.gmra.mrb[0].mxu0 %v337
    %v1204 = vpop.f32.mrb[0].mxu0
    %v1205 = vadd.f32 %v248, %v1204
    %v1206 = vpop.f32.mrb[0].mxu0
    %v1207 = vadd.f32 %v252, %v1206
    %v1208 = vpop.f32.mrb[0].mxu0
    %v1209 = vadd.f32 %v248, %v1208
    %v1210 = vpop.f32.mrb[0].mxu0
    %v1211 = vadd.f32 %v252, %v1210
    %1212 = vmatprep.mubr.bf16.mxu0 %v340
    %1213 = vmatmul.mubr.bf16.gmra.mrb[0].mxu0 %v339
    %v1214 = vpop.f32.mrb[0].mxu0
    %v1215 = vadd.f32 %v248, %v1214
    %v1216 = vpop.f32.mrb[0].mxu0
    %v1217 = vadd.f32 %v252, %v1216
    %v1218 = vpop.f32.mrb[0].mxu0
    %v1219 = vadd.f32 %v248, %v1218
    %v1220 = vpop.f32.mrb[0].mxu0
    %v1221 = vadd.f32 %v252, %v1220
    %1222 = vdwg.mxu0
    %1223 = vmatprep.subr.bf16.mxu0 %v746
    %1224 = vmatpush1.bf16.msra.mxu0 %v745
    %1225 = vmatprep.subr.bf16.mxu0 %v754
    %1226 = vmatpush1.bf16.msra.mxu0 %v753
    %1227 = vmatprep.subr.bf16.mxu0 %v762
    %1228 = vmatpush1.bf16.msra.mxu0 %v761
    %1229 = vmatprep.subr.bf16.mxu0 %v770
    %1230 = vmatpush1.bf16.msra.mxu0 %v769
    %1231 = vmatprep.subr.bf16.mxu0 %v778
    %1232 = vmatpush1.bf16.msra.mxu0 %v777
    %1233 = vmatprep.subr.bf16.mxu0 %v786
    %1234 = vmatpush1.bf16.msra.mxu0 %v785
    %1235 = vmatprep.subr.bf16.mxu0 %v794
    %1236 = vmatpush1.bf16.msra.mxu0 %v793
    %1237 = vmatprep.subr.bf16.mxu0 %v802
    %1238 = vmatpush1.bf16.msra.mxu0 %v801
    %1239 = vmatprep.subr.bf16.mxu0 %v810
    %1240 = vmatpush1.bf16.msra.mxu0 %v809
    %1241 = vmatprep.subr.bf16.mxu0 %v818
    %1242 = vmatpush1.bf16.msra.mxu0 %v817
    %1243 = vmatprep.subr.bf16.mxu0 %v826
    %1244 = vmatpush1.bf16.msra.mxu0 %v825
    %1245 = vmatprep.subr.bf16.mxu0 %v834
    %1246 = vmatpush1.bf16.msra.mxu0 %v833
    %1247 = vmatprep.subr.bf16.mxu0 %v842
    %1248 = vmatpush1.bf16.msra.mxu0 %v841
    %1249 = vmatprep.subr.bf16.mxu0 %v850
    %1250 = vmatpush1.bf16.msra.mxu0 %v849
    %1251 = vmatprep.subr.bf16.mxu0 %v858
    %1252 = vmatpush1.bf16.msra.mxu0 %v857
    %1253 = vmatprep.subr.bf16.mxu0 %v866
    %1254 = vmatpush1.bf16.msra.mxu0 %v865
    %1255 = vmatprep.mubr.bf16.mxu0 %v326
    %1256 = vmatmul.mubr.bf16.gmra.mrb[0].mxu0 %v325
    %v1257 = vpop.f32.mrb[0].mxu0
    %v1258 = vadd.f32 %v256, %v1257
    %v1259 = vpop.f32.mrb[0].mxu0
    %v1260 = vadd.f32 %v260, %v1259
    %v1261 = vpop.f32.mrb[0].mxu0
    %v1262 = vadd.f32 %v256, %v1261
    %v1263 = vpop.f32.mrb[0].mxu0
    %v1264 = vadd.f32 %v260, %v1263
    %1265 = vmatprep.mubr.bf16.mxu0 %v328
    %1266 = vmatmul.mubr.bf16.gmra.mrb[0].mxu0 %v327
    %v1267 = vpop.f32.mrb[0].mxu0
    %v1268 = vadd.f32 %v256, %v1267
    %v1269 = vpop.f32.mrb[0].mxu0
    %v1270 = vadd.f32 %v260, %v1269
    %v1271 = vpop.f32.mrb[0].mxu0
    %v1272 = vadd.f32 %v256, %v1271
    %v1273 = vpop.f32.mrb[0].mxu0
    %v1274 = vadd.f32 %v260, %v1273
    %1275 = vmatprep.mubr.bf16.mxu0 %v330
    %1276 = vmatmul.mubr.bf16.gmra.mrb[0].mxu0 %v329
    %v1277 = vpop.f32.mrb[0].mxu0
    %v1278 = vadd.f32 %v256, %v1277
    %v1279 = vpop.f32.mrb[0].mxu0
    %v1280 = vadd.f32 %v260, %v1279
    %v1281 = vpop.f32.mrb[0].mxu0
    %v1282 = vadd.f32 %v256, %v1281
    %v1283 = vpop.f32.mrb[0].mxu0
    %v1284 = vadd.f32 %v260, %v1283
    %1285 = vmatprep.mubr.bf16.mxu0 %v332
    %1286 = vmatmul.mubr.bf16.gmra.mrb[0].mxu0 %v331
    %v1287 = vpop.f32.mrb[0].mxu0
    %v1288 = vadd.f32 %v256, %v1287
    %v1289 = vpop.f32.mrb[0].mxu0
    %v1290 = vadd.f32 %v260, %v1289
    %v1291 = vpop.f32.mrb[0].mxu0
    %v1292 = vadd.f32 %v256, %v1291
    %v1293 = vpop.f32.mrb[0].mxu0
    %v1294 = vadd.f32 %v260, %v1293
    %1295 = vmatprep.mubr.bf16.mxu0 %v334
    %1296 = vmatmul.mubr.bf16.gmra.mrb[0].mxu0 %v333
    %v1297 = vpop.f32.mrb[0].mxu0
    %v1298 = vadd.f32 %v256, %v1297
    %v1299 = vpop.f32.mrb[0].mxu0
    %v1300 = vadd.f32 %v260, %v1299
    %v1301 = vpop.f32.mrb[0].mxu0
    %v1302 = vadd.f32 %v256, %v1301
    %v1303 = vpop.f32.mrb[0].mxu0
    %v1304 = vadd.f32 %v260, %v1303
    %1305 = vmatprep.mubr.bf16.mxu0 %v336
    %1306 = vmatmul.mubr.bf16.gmra.mrb[0].mxu0 %v335
    %v1307 = vpop.f32.mrb[0].mxu0
    %v1308 = vadd.f32 %v256, %v1307
    %v1309 = vpop.f32.mrb[0].mxu0
    %v1310 = vadd.f32 %v260, %v1309
    %v1311 = vpop.f32.mrb[0].mxu0
    %v1312 = vadd.f32 %v256, %v1311
    %v1313 = vpop.f32.mrb[0].mxu0
    %v1314 = vadd.f32 %v260, %v1313
    %1315 = vmatprep.mubr.bf16.mxu0 %v338
    %1316 = vmatmul.mubr.bf16.gmra.mrb[0].mxu0 %v337
    %v1317 = vpop.f32.mrb[0].mxu0
    %v1318 = vadd.f32 %v256, %v1317
    %v1319 = vpop.f32.mrb[0].mxu0
    %v1320 = vadd.f32 %v260, %v1319
    %v1321 = vpop.f32.mrb[0].mxu0
    %v1322 = vadd.f32 %v256, %v1321
    %v1323 = vpop.f32.mrb[0].mxu0
    %v1324 = vadd.f32 %v260, %v1323
    %1325 = vmatprep.mubr.bf16.mxu0 %v340
    %1326 = vmatmul.mubr.bf16.gmra.mrb[0].mxu0 %v339
    %v1327 = vpop.f32.mrb[0].mxu0
    %v1328 = vadd.f32 %v256, %v1327
    %v1329 = vpop.f32.mrb[0].mxu0
    %v1330 = vadd.f32 %v260, %v1329
    %v1331 = vpop.f32.mrb[0].mxu0
    %v1332 = vadd.f32 %v256, %v1331
    %v1333 = vpop.f32.mrb[0].mxu0
    %v1334 = vadd.f32 %v260, %v1333
    %1335 = vdwg.mxu0
    %1336 = vmatprep.subr.bf16.mxu0 %v748
    %1337 = vmatpush1.bf16.msra.mxu0 %v747
    %1338 = vmatprep.subr.bf16.mxu0 %v756
    %1339 = vmatpush1.bf16.msra.mxu0 %v755
    %1340 = vmatprep.subr.bf16.mxu0 %v764
    %1341 = vmatpush1.bf16.msra.mxu0 %v763
    %1342 = vmatprep.subr.bf16.mxu0 %v772
    %1343 = vmatpush1.bf16.msra.mxu0 %v771
    %1344 = vmatprep.subr.bf16.mxu0 %v780
    %1345 = vmatpush1.bf16.msra.mxu0 %v779
    %1346 = vmatprep.subr.bf16.mxu0 %v788
    %1347 = vmatpush1.bf16.msra.mxu0 %v787
    %1348 = vmatprep.subr.bf16.mxu0 %v796
    %1349 = vmatpush1.bf16.msra.mxu0 %v795
    %1350 = vmatprep.subr.bf16.mxu0 %v804
    %1351 = vmatpush1.bf16.msra.mxu0 %v803
    %1352 = vmatprep.subr.bf16.mxu0 %v812
    %1353 = vmatpush1.bf16.msra.mxu0 %v811
    %1354 = vmatprep.subr.bf16.mxu0 %v820
    %1355 = vmatpush1.bf16.msra.mxu0 %v819
    %1356 = vmatprep.subr.bf16.mxu0 %v828
    %1357 = vmatpush1.bf16.msra.mxu0 %v827
    %1358 = vmatprep.subr.bf16.mxu0 %v836
    %1359 = vmatpush1.bf16.msra.mxu0 %v835
    %1360 = vmatprep.subr.bf16.mxu0 %v844
    %1361 = vmatpush1.bf16.msra.mxu0 %v843
    %1362 = vmatprep.subr.bf16.mxu0 %v852
    %1363 = vmatpush1.bf16.msra.mxu0 %v851
    %1364 = vmatprep.subr.bf16.mxu0 %v860
    %1365 = vmatpush1.bf16.msra.mxu0 %v859
    %1366 = vmatprep.subr.bf16.mxu0 %v868
    %1367 = vmatpush1.bf16.msra.mxu0 %v867
    %1368 = vmatprep.mubr.bf16.mxu0 %v326
    %1369 = vmatmul.mubr.bf16.gmra.mrb[0].mxu0 %v325
    %v1370 = vpop.f32.mrb[0].mxu0
    %v1371 = vadd.f32 %v264, %v1370
    %v1372 = vpop.f32.mrb[0].mxu0
    %v1373 = vadd.f32 %v268, %v1372
    %v1374 = vpop.f32.mrb[0].mxu0
    %v1375 = vadd.f32 %v264, %v1374
    %v1376 = vpop.f32.mrb[0].mxu0
    %v1377 = vadd.f32 %v268, %v1376
    %1378 = vmatprep.mubr.bf16.mxu0 %v328
    %1379 = vmatmul.mubr.bf16.gmra.mrb[0].mxu0 %v327
    %v1380 = vpop.f32.mrb[0].mxu0
    %v1381 = vadd.f32 %v264, %v1380
    %v1382 = vpop.f32.mrb[0].mxu0
    %v1383 = vadd.f32 %v268, %v1382
    %v1384 = vpop.f32.mrb[0].mxu0
    %v1385 = vadd.f32 %v264, %v1384
    %v1386 = vpop.f32.mrb[0].mxu0
    %v1387 = vadd.f32 %v268, %v1386
    %1388 = vmatprep.mubr.bf16.mxu0 %v330
    %1389 = vmatmul.mubr.bf16.gmra.mrb[0].mxu0 %v329
    %v1390 = vpop.f32.mrb[0].mxu0
    %v1391 = vadd.f32 %v264, %v1390
    %v1392 = vpop.f32.mrb[0].mxu0
    %v1393 = vadd.f32 %v268, %v1392
    %v1394 = vpop.f32.mrb[0].mxu0
    %v1395 = vadd.f32 %v264, %v1394
    %v1396 = vpop.f32.mrb[0].mxu0
    %v1397 = vadd.f32 %v268, %v1396
    %1398 = vmatprep.mubr.bf16.mxu0 %v332
    %1399 = vmatmul.mubr.bf16.gmra.mrb[0].mxu0 %v331
    %v1400 = vpop.f32.mrb[0].mxu0
    %v1401 = vadd.f32 %v264, %v1400
    %v1402 = vpop.f32.mrb[0].mxu0
    %v1403 = vadd.f32 %v268, %v1402
    %v1404 = vpop.f32.mrb[0].mxu0
    %v1405 = vadd.f32 %v264, %v1404
    %v1406 = vpop.f32.mrb[0].mxu0
    %v1407 = vadd.f32 %v268, %v1406
    %1408 = vmatprep.mubr.bf16.mxu0 %v334
    %1409 = vmatmul.mubr.bf16.gmra.mrb[0].mxu0 %v333
    %v1410 = vpop.f32.mrb[0].mxu0
    %v1411 = vadd.f32 %v264, %v1410
    %v1412 = vpop.f32.mrb[0].mxu0
    %v1413 = vadd.f32 %v268, %v1412
    %v1414 = vpop.f32.mrb[0].mxu0
    %v1415 = vadd.f32 %v264, %v1414
    %v1416 = vpop.f32.mrb[0].mxu0
    %v1417 = vadd.f32 %v268, %v1416
    %1418 = vmatprep.mubr.bf16.mxu0 %v336
    %1419 = vmatmul.mubr.bf16.gmra.mrb[0].mxu0 %v335
    %v1420 = vpop.f32.mrb[0].mxu0
    %v1421 = vadd.f32 %v264, %v1420
    %v1422 = vpop.f32.mrb[0].mxu0
    %v1423 = vadd.f32 %v268, %v1422
    %v1424 = vpop.f32.mrb[0].mxu0
    %v1425 = vadd.f32 %v264, %v1424
    %v1426 = vpop.f32.mrb[0].mxu0
    %v1427 = vadd.f32 %v268, %v1426
    %1428 = vmatprep.mubr.bf16.mxu0 %v338
    %1429 = vmatmul.mubr.bf16.gmra.mrb[0].mxu0 %v337
    %v1430 = vpop.f32.mrb[0].mxu0
    %v1431 = vadd.f32 %v264, %v1430
    %v1432 = vpop.f32.mrb[0].mxu0
    %v1433 = vadd.f32 %v268, %v1432
    %v1434 = vpop.f32.mrb[0].mxu0
    %v1435 = vadd.f32 %v264, %v1434
    %v1436 = vpop.f32.mrb[0].mxu0
    %v1437 = vadd.f32 %v268, %v1436
    %1438 = vmatprep.mubr.bf16.mxu0 %v340
    %1439 = vmatmul.mubr.bf16.gmra.mrb[0].mxu0 %v339
    %v1440 = vpop.f32.mrb[0].mxu0
    %v1441 = vadd.f32 %v264, %v1440
    %v1442 = vpop.f32.mrb[0].mxu0
    %v1443 = vadd.f32 %v268, %v1442
    %v1444 = vpop.f32.mrb[0].mxu0
    %v1445 = vadd.f32 %v264, %v1444
    %v1446 = vpop.f32.mrb[0].mxu0
    %v1447 = vadd.f32 %v268, %v1446
    %1448 = vdwg.mxu0
    %v1449 = vmax.f32 %v1032, 0.0
    %v1450 = vmax.f32 %v1034, 0.0
    %v1451 = vmax.f32 %v1145, 0.0
    %v1452 = vmax.f32 %v1147, 0.0
    %v1453 = vmax.f32 %v1258, 0.0
    %v1454 = vmax.f32 %v1260, 0.0
    %v1455 = vmax.f32 %v1371, 0.0
    %v1456 = vmax.f32 %v1373, 0.0
    %v1457 = vmax.f32 %v1036, 0.0
    %v1458 = vmax.f32 %v1038, 0.0
    %v1459 = vmax.f32 %v1149, 0.0
    %v1460 = vmax.f32 %v1151, 0.0
    %v1461 = vmax.f32 %v1262, 0.0
    %v1462 = vmax.f32 %v1264, 0.0
    %v1463 = vmax.f32 %v1375, 0.0
    %v1464 = vmax.f32 %v1377, 0.0
    %v1465 = vmax.f32 %v1042, 0.0
    %v1466 = vmax.f32 %v1044, 0.0
    %v1467 = vmax.f32 %v1155, 0.0
    %v1468 = vmax.f32 %v1157, 0.0
    %v1469 = vmax.f32 %v1268, 0.0
    %v1470 = vmax.f32 %v1270, 0.0
    %v1471 = vmax.f32 %v1381, 0.0
    %v1472 = vmax.f32 %v1383, 0.0
    %v1473 = vmax.f32 %v1046, 0.0
    %v1474 = vmax.f32 %v1048, 0.0
    %v1475 = vmax.f32 %v1159, 0.0
    %v1476 = vmax.f32 %v1161, 0.0
    %v1477 = vmax.f32 %v1272, 0.0
    %v1478 = vmax.f32 %v1274, 0.0
    %v1479 = vmax.f32 %v1385, 0.0
    %v1480 = vmax.f32 %v1387, 0.0
    %v1481 = vmax.f32 %v1052, 0.0
    %v1482 = vmax.f32 %v1054, 0.0
    %v1483 = vmax.f32 %v1165, 0.0
    %v1484 = vmax.f32 %v1167, 0.0
    %v1485 = vmax.f32 %v1278, 0.0
    %v1486 = vmax.f32 %v1280, 0.0
    %v1487 = vmax.f32 %v1391, 0.0
    %v1488 = vmax.f32 %v1393, 0.0
    %v1489 = vmax.f32 %v1056, 0.0
    %v1490 = vmax.f32 %v1058, 0.0
    %v1491 = vmax.f32 %v1169, 0.0
    %v1492 = vmax.f32 %v1171, 0.0
    %v1493 = vmax.f32 %v1282, 0.0
    %v1494 = vmax.f32 %v1284, 0.0
    %v1495 = vmax.f32 %v1395, 0.0
    %v1496 = vmax.f32 %v1397, 0.0
    %v1497 = vmax.f32 %v1062, 0.0
    %v1498 = vmax.f32 %v1064, 0.0
    %v1499 = vmax.f32 %v1175, 0.0
    %v1500 = vmax.f32 %v1177, 0.0
    %v1501 = vmax.f32 %v1288, 0.0
    %v1502 = vmax.f32 %v1290, 0.0
    %v1503 = vmax.f32 %v1401, 0.0
    %v1504 = vmax.f32 %v1403, 0.0
    %v1505 = vmax.f32 %v1066, 0.0
    %v1506 = vmax.f32 %v1068, 0.0
    %v1507 = vmax.f32 %v1179, 0.0
    %v1508 = vmax.f32 %v1181, 0.0
    %v1509 = vmax.f32 %v1292, 0.0
    %v1510 = vmax.f32 %v1294, 0.0
    %v1511 = vmax.f32 %v1405, 0.0
    %v1512 = vmax.f32 %v1407, 0.0
    %v1513 = vmax.f32 %v1072, 0.0
    %v1514 = vmax.f32 %v1074, 0.0
    %v1515 = vmax.f32 %v1185, 0.0
    %v1516 = vmax.f32 %v1187, 0.0
    %v1517 = vmax.f32 %v1298, 0.0
    %v1518 = vmax.f32 %v1300, 0.0
    %v1519 = vmax.f32 %v1411, 0.0
    %v1520 = vmax.f32 %v1413, 0.0
    %v1521 = vmax.f32 %v1076, 0.0
    %v1522 = vmax.f32 %v1078, 0.0
    %v1523 = vmax.f32 %v1189, 0.0
    %v1524 = vmax.f32 %v1191, 0.0
    %v1525 = vmax.f32 %v1302, 0.0
    %v1526 = vmax.f32 %v1304, 0.0
    %v1527 = vmax.f32 %v1415, 0.0
    %v1528 = vmax.f32 %v1417, 0.0
    %v1529 = vmax.f32 %v1082, 0.0
    %v1530 = vmax.f32 %v1084, 0.0
    %v1531 = vmax.f32 %v1195, 0.0
    %v1532 = vmax.f32 %v1197, 0.0
    %v1533 = vmax.f32 %v1308, 0.0
    %v1534 = vmax.f32 %v1310, 0.0
    %v1535 = vmax.f32 %v1421, 0.0
    %v1536 = vmax.f32 %v1423, 0.0
    %v1537 = vmax.f32 %v1086, 0.0
    %v1538 = vmax.f32 %v1088, 0.0
    %v1539 = vmax.f32 %v1199, 0.0
    %v1540 = vmax.f32 %v1201, 0.0
    %v1541 = vmax.f32 %v1312, 0.0
    %v1542 = vmax.f32 %v1314, 0.0
    %v1543 = vmax.f32 %v1425, 0.0
    %v1544 = vmax.f32 %v1427, 0.0
    %v1545 = vmax.f32 %v1092, 0.0
    %v1546 = vmax.f32 %v1094, 0.0
    %v1547 = vmax.f32 %v1205, 0.0
    %v1548 = vmax.f32 %v1207, 0.0
    %v1549 = vmax.f32 %v1318, 0.0
    %v1550 = vmax.f32 %v1320, 0.0
    %v1551 = vmax.f32 %v1431, 0.0
    %v1552 = vmax.f32 %v1433, 0.0
    %v1553 = vmax.f32 %v1096, 0.0
    %v1554 = vmax.f32 %v1098, 0.0
    %v1555 = vmax.f32 %v1209, 0.0
    %v1556 = vmax.f32 %v1211, 0.0
    %v1557 = vmax.f32 %v1322, 0.0
    %v1558 = vmax.f32 %v1324, 0.0
    %v1559 = vmax.f32 %v1435, 0.0
    %v1560 = vmax.f32 %v1437, 0.0
    %v1561 = vmax.f32 %v1102, 0.0
    %v1562 = vmax.f32 %v1104, 0.0
    %v1563 = vmax.f32 %v1215, 0.0
    %v1564 = vmax.f32 %v1217, 0.0
    %v1565 = vmax.f32 %v1328, 0.0
    %v1566 = vmax.f32 %v1330, 0.0
    %v1567 = vmax.f32 %v1441, 0.0
    %v1568 = vmax.f32 %v1443, 0.0
    %v1569 = vmax.f32 %v1106, 0.0
    %v1570 = vmax.f32 %v1108, 0.0
    %v1571 = vmax.f32 %v1219, 0.0
    %v1572 = vmax.f32 %v1221, 0.0
    %v1573 = vmax.f32 %v1332, 0.0
    %v1574 = vmax.f32 %v1334, 0.0
    %v1575 = vmax.f32 %v1445, 0.0
    %v1576 = vmax.f32 %v1447, 0.0
    %v1577 = vpack.c.bf16 %v1457, %v1449
    %v1578 = vpack.c.bf16 %v1458, %v1450
    %v1579 = vpack.c.bf16 %v1459, %v1451
    %v1580 = vpack.c.bf16 %v1460, %v1452
    %v1581 = vpack.c.bf16 %v1461, %v1453
    %v1582 = vpack.c.bf16 %v1462, %v1454
    %v1583 = vpack.c.bf16 %v1463, %v1455
    %v1584 = vpack.c.bf16 %v1464, %v1456
    %v1585 = vpack.c.bf16 %v1473, %v1465
    %v1586 = vpack.c.bf16 %v1474, %v1466
    %v1587 = vpack.c.bf16 %v1475, %v1467
    %v1588 = vpack.c.bf16 %v1476, %v1468
    %v1589 = vpack.c.bf16 %v1477, %v1469
    %v1590 = vpack.c.bf16 %v1478, %v1470
    %v1591 = vpack.c.bf16 %v1479, %v1471
    %v1592 = vpack.c.bf16 %v1480, %v1472
    %v1593 = vpack.c.bf16 %v1489, %v1481
    %v1594 = vpack.c.bf16 %v1490, %v1482
    %v1595 = vpack.c.bf16 %v1491, %v1483
    %v1596 = vpack.c.bf16 %v1492, %v1484
    %v1597 = vpack.c.bf16 %v1493, %v1485
    %v1598 = vpack.c.bf16 %v1494, %v1486
    %v1599 = vpack.c.bf16 %v1495, %v1487
    %v1600 = vpack.c.bf16 %v1496, %v1488
    %v1601 = vpack.c.bf16 %v1505, %v1497
    %v1602 = vpack.c.bf16 %v1506, %v1498
    %v1603 = vpack.c.bf16 %v1507, %v1499
    %v1604 = vpack.c.bf16 %v1508, %v1500
    %v1605 = vpack.c.bf16 %v1509, %v1501
    %v1606 = vpack.c.bf16 %v1510, %v1502
    %v1607 = vpack.c.bf16 %v1511, %v1503
    %v1608 = vpack.c.bf16 %v1512, %v1504
    %v1609 = vpack.c.bf16 %v1521, %v1513
    %v1610 = vpack.c.bf16 %v1522, %v1514
    %v1611 = vpack.c.bf16 %v1523, %v1515
    %v1612 = vpack.c.bf16 %v1524, %v1516
    %v1613 = vpack.c.bf16 %v1525, %v1517
    %v1614 = vpack.c.bf16 %v1526, %v1518
    %v1615 = vpack.c.bf16 %v1527, %v1519
    %v1616 = vpack.c.bf16 %v1528, %v1520
    %v1617 = vpack.c.bf16 %v1537, %v1529
    %v1618 = vpack.c.bf16 %v1538, %v1530
    %v1619 = vpack.c.bf16 %v1539, %v1531
    %v1620 = vpack.c.bf16 %v1540, %v1532
    %v1621 = vpack.c.bf16 %v1541, %v1533
    %v1622 = vpack.c.bf16 %v1542, %v1534
    %v1623 = vpack.c.bf16 %v1543, %v1535
    %v1624 = vpack.c.bf16 %v1544, %v1536
    %v1625 = vpack.c.bf16 %v1553, %v1545
    %v1626 = vpack.c.bf16 %v1554, %v1546
    %v1627 = vpack.c.bf16 %v1555, %v1547
    %v1628 = vpack.c.bf16 %v1556, %v1548
    %v1629 = vpack.c.bf16 %v1557, %v1549
    %v1630 = vpack.c.bf16 %v1558, %v1550
    %v1631 = vpack.c.bf16 %v1559, %v1551
    %v1632 = vpack.c.bf16 %v1560, %v1552
    %v1633 = vpack.c.bf16 %v1569, %v1561
    %v1634 = vpack.c.bf16 %v1570, %v1562
    %v1635 = vpack.c.bf16 %v1571, %v1563
    %v1636 = vpack.c.bf16 %v1572, %v1564
    %v1637 = vpack.c.bf16 %v1573, %v1565
    %v1638 = vpack.c.bf16 %v1574, %v1566
    %v1639 = vpack.c.bf16 %v1575, %v1567
    %v1640 = vpack.c.bf16 %v1576, %v1568
    %v1641 = vld [vmem:[#allocation8] sm:$0xff]
    %v1642 = vld [vmem:[#allocation8 + $0x8] sm:$0xff]
    %v1643 = vld [vmem:[#allocation8 + $0x10] sm:$0xff]
    %v1644 = vld [vmem:[#allocation8 + $0x18] sm:$0xff]
    %v1645 = vld [vmem:[#allocation8 + $0x20] sm:$0xff]
    %v1646 = vld [vmem:[#allocation8 + $0x28] sm:$0xff]
    %v1647 = vld [vmem:[#allocation8 + $0x30] sm:$0xff]
    %v1648 = vld [vmem:[#allocation8 + $0x38] sm:$0xff]
    %v1649 = vld [vmem:[#allocation8 + $0x40] sm:$0xff]
    %v1650 = vld [vmem:[#allocation8 + $0x48] sm:$0xff]
    %v1651 = vld [vmem:[#allocation8 + $0x50] sm:$0xff]
    %v1652 = vld [vmem:[#allocation8 + $0x58] sm:$0xff]
    %v1653 = vld [vmem:[#allocation8 + $0x60] sm:$0xff]
    %v1654 = vld [vmem:[#allocation8 + $0x68] sm:$0xff]
    %v1655 = vld [vmem:[#allocation8 + $0x70] sm:$0xff]
    %v1656 = vld [vmem:[#allocation8 + $0x78] sm:$0xff]
    %v1657 = vld [vmem:[#allocation8 + $0x80] sm:$0xff]
    %v1658 = vld [vmem:[#allocation8 + $0x88] sm:$0xff]
    %v1659 = vld [vmem:[#allocation8 + $0x90] sm:$0xff]
    %v1660 = vld [vmem:[#allocation8 + $0x98] sm:$0xff]
    %v1661 = vld [vmem:[#allocation8 + $0xa0] sm:$0xff]
    %v1662 = vld [vmem:[#allocation8 + $0xa8] sm:$0xff]
    %v1663 = vld [vmem:[#allocation8 + $0xb0] sm:$0xff]
    %v1664 = vld [vmem:[#allocation8 + $0xb8] sm:$0xff]
    %v1665 = vld [vmem:[#allocation8 + $0xc0] sm:$0xff]
    %v1666 = vld [vmem:[#allocation8 + $0xc8] sm:$0xff]
    %v1667 = vld [vmem:[#allocation8 + $0xd0] sm:$0xff]
    %v1668 = vld [vmem:[#allocation8 + $0xd8] sm:$0xff]
    %v1669 = vld [vmem:[#allocation8 + $0xe0] sm:$0xff]
    %v1670 = vld [vmem:[#allocation8 + $0xe8] sm:$0xff]
    %v1671 = vld [vmem:[#allocation8 + $0xf0] sm:$0xff]
    %v1672 = vld [vmem:[#allocation8 + $0xf8] sm:$0xff]
    %v1673 = vld [vmem:[#allocation8 + $0x100] sm:$0xff]
    %v1674 = vld [vmem:[#allocation8 + $0x108] sm:$0xff]
    %v1675 = vld [vmem:[#allocation8 + $0x110] sm:$0xff]
    %v1676 = vld [vmem:[#allocation8 + $0x118] sm:$0xff]
    %v1677 = vld [vmem:[#allocation8 + $0x120] sm:$0xff]
    %v1678 = vld [vmem:[#allocation8 + $0x128] sm:$0xff]
    %v1679 = vld [vmem:[#allocation8 + $0x130] sm:$0xff]
    %v1680 = vld [vmem:[#allocation8 + $0x138] sm:$0xff]
    %v1681 = vld [vmem:[#allocation8 + $0x140] sm:$0xff]
    %v1682 = vld [vmem:[#allocation8 + $0x148] sm:$0xff]
    %v1683 = vld [vmem:[#allocation8 + $0x150] sm:$0xff]
    %v1684 = vld [vmem:[#allocation8 + $0x158] sm:$0xff]
    %v1685 = vld [vmem:[#allocation8 + $0x160] sm:$0xff]
    %v1686 = vld [vmem:[#allocation8 + $0x168] sm:$0xff]
    %v1687 = vld [vmem:[#allocation8 + $0x170] sm:$0xff]
    %v1688 = vld [vmem:[#allocation8 + $0x178] sm:$0xff]
    %v1689 = vld [vmem:[#allocation8 + $0x180] sm:$0xff]
    %v1690 = vld [vmem:[#allocation8 + $0x188] sm:$0xff]
    %v1691 = vld [vmem:[#allocation8 + $0x190] sm:$0xff]
    %v1692 = vld [vmem:[#allocation8 + $0x198] sm:$0xff]
    %v1693 = vld [vmem:[#allocation8 + $0x1a0] sm:$0xff]
    %v1694 = vld [vmem:[#allocation8 + $0x1a8] sm:$0xff]
    %v1695 = vld [vmem:[#allocation8 + $0x1b0] sm:$0xff]
    %v1696 = vld [vmem:[#allocation8 + $0x1b8] sm:$0xff]
    %v1697 = vld [vmem:[#allocation8 + $0x1c0] sm:$0xff]
    %v1698 = vld [vmem:[#allocation8 + $0x1c8] sm:$0xff]
    %v1699 = vld [vmem:[#allocation8 + $0x1d0] sm:$0xff]
    %v1700 = vld [vmem:[#allocation8 + $0x1d8] sm:$0xff]
    %v1701 = vld [vmem:[#allocation8 + $0x1e0] sm:$0xff]
    %v1702 = vld [vmem:[#allocation8 + $0x1e8] sm:$0xff]
    %v1703 = vld [vmem:[#allocation8 + $0x1f0] sm:$0xff]
    %v1704 = vld [vmem:[#allocation8 + $0x1f8] sm:$0xff]
    %v1705 = vld [vmem:[#allocation8 + $0x200] sm:$0xff]
    %v1706 = vld [vmem:[#allocation8 + $0x208] sm:$0xff]
    %v1707 = vld [vmem:[#allocation8 + $0x210] sm:$0xff]
    %v1708 = vld [vmem:[#allocation8 + $0x218] sm:$0xff]
    %v1709 = vld [vmem:[#allocation8 + $0x220] sm:$0xff]
    %v1710 = vld [vmem:[#allocation8 + $0x228] sm:$0xff]
    %v1711 = vld [vmem:[#allocation8 + $0x230] sm:$0xff]
    %v1712 = vld [vmem:[#allocation8 + $0x238] sm:$0xff]
    %v1713 = vld [vmem:[#allocation8 + $0x240] sm:$0xff]
    %v1714 = vld [vmem:[#allocation8 + $0x248] sm:$0xff]
    %v1715 = vld [vmem:[#allocation8 + $0x250] sm:$0xff]
    %v1716 = vld [vmem:[#allocation8 + $0x258] sm:$0xff]
    %v1717 = vld [vmem:[#allocation8 + $0x260] sm:$0xff]
    %v1718 = vld [vmem:[#allocation8 + $0x268] sm:$0xff]
    %v1719 = vld [vmem:[#allocation8 + $0x270] sm:$0xff]
    %v1720 = vld [vmem:[#allocation8 + $0x278] sm:$0xff]
    %v1721 = vld [vmem:[#allocation8 + $0x280] sm:$0xff]
    %v1722 = vld [vmem:[#allocation8 + $0x288] sm:$0xff]
    %v1723 = vld [vmem:[#allocation8 + $0x290] sm:$0xff]
    %v1724 = vld [vmem:[#allocation8 + $0x298] sm:$0xff]
    %v1725 = vld [vmem:[#allocation8 + $0x2a0] sm:$0xff]
    %v1726 = vld [vmem:[#allocation8 + $0x2a8] sm:$0xff]
    %v1727 = vld [vmem:[#allocation8 + $0x2b0] sm:$0xff]
    %v1728 = vld [vmem:[#allocation8 + $0x2b8] sm:$0xff]
    %v1729 = vld [vmem:[#allocation8 + $0x2c0] sm:$0xff]
    %v1730 = vld [vmem:[#allocation8 + $0x2c8] sm:$0xff]
    %v1731 = vld [vmem:[#allocation8 + $0x2d0] sm:$0xff]
    %v1732 = vld [vmem:[#allocation8 + $0x2d8] sm:$0xff]
    %v1733 = vld [vmem:[#allocation8 + $0x2e0] sm:$0xff]
    %v1734 = vld [vmem:[#allocation8 + $0x2e8] sm:$0xff]
    %v1735 = vld [vmem:[#allocation8 + $0x2f0] sm:$0xff]
    %v1736 = vld [vmem:[#allocation8 + $0x2f8] sm:$0xff]
    %v1737 = vld [vmem:[#allocation8 + $0x300] sm:$0xff]
    %v1738 = vld [vmem:[#allocation8 + $0x308] sm:$0xff]
    %v1739 = vld [vmem:[#allocation8 + $0x310] sm:$0xff]
    %v1740 = vld [vmem:[#allocation8 + $0x318] sm:$0xff]
    %v1741 = vld [vmem:[#allocation8 + $0x320] sm:$0xff]
    %v1742 = vld [vmem:[#allocation8 + $0x328] sm:$0xff]
    %v1743 = vld [vmem:[#allocation8 + $0x330] sm:$0xff]
    %v1744 = vld [vmem:[#allocation8 + $0x338] sm:$0xff]
    %v1745 = vld [vmem:[#allocation8 + $0x340] sm:$0xff]
    %v1746 = vld [vmem:[#allocation8 + $0x348] sm:$0xff]
    %v1747 = vld [vmem:[#allocation8 + $0x350] sm:$0xff]
    %v1748 = vld [vmem:[#allocation8 + $0x358] sm:$0xff]
    %v1749 = vld [vmem:[#allocation8 + $0x360] sm:$0xff]
    %v1750 = vld [vmem:[#allocation8 + $0x368] sm:$0xff]
    %v1751 = vld [vmem:[#allocation8 + $0x370] sm:$0xff]
    %v1752 = vld [vmem:[#allocation8 + $0x378] sm:$0xff]
    %v1753 = vld [vmem:[#allocation8 + $0x380] sm:$0xff]
    %v1754 = vld [vmem:[#allocation8 + $0x388] sm:$0xff]
    %v1755 = vld [vmem:[#allocation8 + $0x390] sm:$0xff]
    %v1756 = vld [vmem:[#allocation8 + $0x398] sm:$0xff]
    %v1757 = vld [vmem:[#allocation8 + $0x3a0] sm:$0xff]
    %v1758 = vld [vmem:[#allocation8 + $0x3a8] sm:$0xff]
    %v1759 = vld [vmem:[#allocation8 + $0x3b0] sm:$0xff]
    %v1760 = vld [vmem:[#allocation8 + $0x3b8] sm:$0xff]
    %v1761 = vld [vmem:[#allocation8 + $0x3c0] sm:$0xff]
    %v1762 = vld [vmem:[#allocation8 + $0x3c8] sm:$0xff]
    %v1763 = vld [vmem:[#allocation8 + $0x3d0] sm:$0xff]
    %v1764 = vld [vmem:[#allocation8 + $0x3d8] sm:$0xff]
    %v1765 = vld [vmem:[#allocation8 + $0x3e0] sm:$0xff]
    %v1766 = vld [vmem:[#allocation8 + $0x3e8] sm:$0xff]
    %v1767 = vld [vmem:[#allocation8 + $0x3f0] sm:$0xff]
    %v1768 = vld [vmem:[#allocation8 + $0x3f8] sm:$0xff]
    %v1769 = vld [vmem:[#allocation8 + $0x400] sm:$0xff]
    %v1770 = vld [vmem:[#allocation8 + $0x408] sm:$0xff]
    %v1771 = vld [vmem:[#allocation8 + $0x410] sm:$0xff]
    %v1772 = vld [vmem:[#allocation8 + $0x418] sm:$0xff]
    %v1773 = vld [vmem:[#allocation8 + $0x420] sm:$0xff]
    %v1774 = vld [vmem:[#allocation8 + $0x428] sm:$0xff]
    %v1775 = vld [vmem:[#allocation8 + $0x430] sm:$0xff]
    %v1776 = vld [vmem:[#allocation8 + $0x438] sm:$0xff]
    %v1777 = vld [vmem:[#allocation8 + $0x440] sm:$0xff]
    %v1778 = vld [vmem:[#allocation8 + $0x448] sm:$0xff]
    %v1779 = vld [vmem:[#allocation8 + $0x450] sm:$0xff]
    %v1780 = vld [vmem:[#allocation8 + $0x458] sm:$0xff]
    %v1781 = vld [vmem:[#allocation8 + $0x460] sm:$0xff]
    %v1782 = vld [vmem:[#allocation8 + $0x468] sm:$0xff]
    %v1783 = vld [vmem:[#allocation8 + $0x470] sm:$0xff]
    %v1784 = vld [vmem:[#allocation8 + $0x478] sm:$0xff]
    %v1785 = vld [vmem:[#allocation8 + $0x480] sm:$0xff]
    %v1786 = vld [vmem:[#allocation8 + $0x488] sm:$0xff]
    %v1787 = vld [vmem:[#allocation8 + $0x490] sm:$0xff]
    %v1788 = vld [vmem:[#allocation8 + $0x498] sm:$0xff]
    %v1789 = vld [vmem:[#allocation8 + $0x4a0] sm:$0xff]
    %v1790 = vld [vmem:[#allocation8 + $0x4a8] sm:$0xff]
    %v1791 = vld [vmem:[#allocation8 + $0x4b0] sm:$0xff]
    %v1792 = vld [vmem:[#allocation8 + $0x4b8] sm:$0xff]
    %v1793 = vld [vmem:[#allocation8 + $0x4c0] sm:$0xff]
    %v1794 = vld [vmem:[#allocation8 + $0x4c8] sm:$0xff]
    %v1795 = vld [vmem:[#allocation8 + $0x4d0] sm:$0xff]
    %v1796 = vld [vmem:[#allocation8 + $0x4d8] sm:$0xff]
    %v1797 = vld [vmem:[#allocation8 + $0x4e0] sm:$0xff]
    %v1798 = vld [vmem:[#allocation8 + $0x4e8] sm:$0xff]
    %v1799 = vld [vmem:[#allocation8 + $0x4f0] sm:$0xff]
    %v1800 = vld [vmem:[#allocation8 + $0x4f8] sm:$0xff]
    %v1801 = vld [vmem:[#allocation8 + $0x500] sm:$0xff]
    %v1802 = vld [vmem:[#allocation8 + $0x508] sm:$0xff]
    %v1803 = vld [vmem:[#allocation8 + $0x510] sm:$0xff]
    %v1804 = vld [vmem:[#allocation8 + $0x518] sm:$0xff]
    %v1805 = vld [vmem:[#allocation8 + $0x520] sm:$0xff]
    %v1806 = vld [vmem:[#allocation8 + $0x528] sm:$0xff]
    %v1807 = vld [vmem:[#allocation8 + $0x530] sm:$0xff]
    %v1808 = vld [vmem:[#allocation8 + $0x538] sm:$0xff]
    %v1809 = vld [vmem:[#allocation8 + $0x540] sm:$0xff]
    %v1810 = vld [vmem:[#allocation8 + $0x548] sm:$0xff]
    %v1811 = vld [vmem:[#allocation8 + $0x550] sm:$0xff]
    %v1812 = vld [vmem:[#allocation8 + $0x558] sm:$0xff]
    %v1813 = vld [vmem:[#allocation8 + $0x560] sm:$0xff]
    %v1814 = vld [vmem:[#allocation8 + $0x568] sm:$0xff]
    %v1815 = vld [vmem:[#allocation8 + $0x570] sm:$0xff]
    %v1816 = vld [vmem:[#allocation8 + $0x578] sm:$0xff]
    %v1817 = vld [vmem:[#allocation8 + $0x580] sm:$0xff]
    %v1818 = vld [vmem:[#allocation8 + $0x588] sm:$0xff]
    %v1819 = vld [vmem:[#allocation8 + $0x590] sm:$0xff]
    %v1820 = vld [vmem:[#allocation8 + $0x598] sm:$0xff]
    %v1821 = vld [vmem:[#allocation8 + $0x5a0] sm:$0xff]
    %v1822 = vld [vmem:[#allocation8 + $0x5a8] sm:$0xff]
    %v1823 = vld [vmem:[#allocation8 + $0x5b0] sm:$0xff]
    %v1824 = vld [vmem:[#allocation8 + $0x5b8] sm:$0xff]
    %v1825 = vld [vmem:[#allocation8 + $0x5c0] sm:$0xff]
    %v1826 = vld [vmem:[#allocation8 + $0x5c8] sm:$0xff]
    %v1827 = vld [vmem:[#allocation8 + $0x5d0] sm:$0xff]
    %v1828 = vld [vmem:[#allocation8 + $0x5d8] sm:$0xff]
    %v1829 = vld [vmem:[#allocation8 + $0x5e0] sm:$0xff]
    %v1830 = vld [vmem:[#allocation8 + $0x5e8] sm:$0xff]
    %v1831 = vld [vmem:[#allocation8 + $0x5f0] sm:$0xff]
    %v1832 = vld [vmem:[#allocation8 + $0x5f8] sm:$0xff]
    %v1833 = vld [vmem:[#allocation8 + $0x600] sm:$0xff]
    %v1834 = vld [vmem:[#allocation8 + $0x608] sm:$0xff]
    %v1835 = vld [vmem:[#allocation8 + $0x610] sm:$0xff]
    %v1836 = vld [vmem:[#allocation8 + $0x618] sm:$0xff]
    %v1837 = vld [vmem:[#allocation8 + $0x620] sm:$0xff]
    %v1838 = vld [vmem:[#allocation8 + $0x628] sm:$0xff]
    %v1839 = vld [vmem:[#allocation8 + $0x630] sm:$0xff]
    %v1840 = vld [vmem:[#allocation8 + $0x638] sm:$0xff]
    %v1841 = vld [vmem:[#allocation8 + $0x640] sm:$0xff]
    %v1842 = vld [vmem:[#allocation8 + $0x648] sm:$0xff]
    %v1843 = vld [vmem:[#allocation8 + $0x650] sm:$0xff]
    %v1844 = vld [vmem:[#allocation8 + $0x658] sm:$0xff]
    %v1845 = vld [vmem:[#allocation8 + $0x660] sm:$0xff]
    %v1846 = vld [vmem:[#allocation8 + $0x668] sm:$0xff]
    %v1847 = vld [vmem:[#allocation8 + $0x670] sm:$0xff]
    %v1848 = vld [vmem:[#allocation8 + $0x678] sm:$0xff]
    %v1849 = vld [vmem:[#allocation8 + $0x680] sm:$0xff]
    %v1850 = vld [vmem:[#allocation8 + $0x688] sm:$0xff]
    %v1851 = vld [vmem:[#allocation8 + $0x690] sm:$0xff]
    %v1852 = vld [vmem:[#allocation8 + $0x698] sm:$0xff]
    %v1853 = vld [vmem:[#allocation8 + $0x6a0] sm:$0xff]
    %v1854 = vld [vmem:[#allocation8 + $0x6a8] sm:$0xff]
    %v1855 = vld [vmem:[#allocation8 + $0x6b0] sm:$0xff]
    %v1856 = vld [vmem:[#allocation8 + $0x6b8] sm:$0xff]
    %v1857 = vld [vmem:[#allocation8 + $0x6c0] sm:$0xff]
    %v1858 = vld [vmem:[#allocation8 + $0x6c8] sm:$0xff]
    %v1859 = vld [vmem:[#allocation8 + $0x6d0] sm:$0xff]
    %v1860 = vld [vmem:[#allocation8 + $0x6d8] sm:$0xff]
    %v1861 = vld [vmem:[#allocation8 + $0x6e0] sm:$0xff]
    %v1862 = vld [vmem:[#allocation8 + $0x6e8] sm:$0xff]
    %v1863 = vld [vmem:[#allocation8 + $0x6f0] sm:$0xff]
    %v1864 = vld [vmem:[#allocation8 + $0x6f8] sm:$0xff]
    %v1865 = vld [vmem:[#allocation8 + $0x700] sm:$0xff]
    %v1866 = vld [vmem:[#allocation8 + $0x708] sm:$0xff]
    %v1867 = vld [vmem:[#allocation8 + $0x710] sm:$0xff]
    %v1868 = vld [vmem:[#allocation8 + $0x718] sm:$0xff]
    %v1869 = vld [vmem:[#allocation8 + $0x720] sm:$0xff]
    %v1870 = vld [vmem:[#allocation8 + $0x728] sm:$0xff]
    %v1871 = vld [vmem:[#allocation8 + $0x730] sm:$0xff]
    %v1872 = vld [vmem:[#allocation8 + $0x738] sm:$0xff]
    %v1873 = vld [vmem:[#allocation8 + $0x740] sm:$0xff]
    %v1874 = vld [vmem:[#allocation8 + $0x748] sm:$0xff]
    %v1875 = vld [vmem:[#allocation8 + $0x750] sm:$0xff]
    %v1876 = vld [vmem:[#allocation8 + $0x758] sm:$0xff]
    %v1877 = vld [vmem:[#allocation8 + $0x760] sm:$0xff]
    %v1878 = vld [vmem:[#allocation8 + $0x768] sm:$0xff]
    %v1879 = vld [vmem:[#allocation8 + $0x770] sm:$0xff]
    %v1880 = vld [vmem:[#allocation8 + $0x778] sm:$0xff]
    %v1881 = vld [vmem:[#allocation8 + $0x780] sm:$0xff]
    %v1882 = vld [vmem:[#allocation8 + $0x788] sm:$0xff]
    %v1883 = vld [vmem:[#allocation8 + $0x790] sm:$0xff]
    %v1884 = vld [vmem:[#allocation8 + $0x798] sm:$0xff]
    %v1885 = vld [vmem:[#allocation8 + $0x7a0] sm:$0xff]
    %v1886 = vld [vmem:[#allocation8 + $0x7a8] sm:$0xff]
    %v1887 = vld [vmem:[#allocation8 + $0x7b0] sm:$0xff]
    %v1888 = vld [vmem:[#allocation8 + $0x7b8] sm:$0xff]
    %v1889 = vld [vmem:[#allocation8 + $0x7c0] sm:$0xff]
    %v1890 = vld [vmem:[#allocation8 + $0x7c8] sm:$0xff]
    %v1891 = vld [vmem:[#allocation8 + $0x7d0] sm:$0xff]
    %v1892 = vld [vmem:[#allocation8 + $0x7d8] sm:$0xff]
    %v1893 = vld [vmem:[#allocation8 + $0x7e0] sm:$0xff]
    %v1894 = vld [vmem:[#allocation8 + $0x7e8] sm:$0xff]
    %v1895 = vld [vmem:[#allocation8 + $0x7f0] sm:$0xff]
    %v1896 = vld [vmem:[#allocation8 + $0x7f8] sm:$0xff]
    %v1897 = vld [vmem:[%s4] sm:$0xf]
    %v1899 = vlaneseq
    %v1900 = vshrl.u32 %v1899, 7
    %v1901 = vsub.s32 0, %v1900
    %v1902 = vrot.slane %v1897, %v1901
    %v1903 = vlaneseq
    %v1904 = vshrl.u32 %v1903, 7
    %v1905 = vsub.s32 1, %v1904
    %v1906 = vrot.slane %v1897, %v1905
    %v1907 = vlaneseq
    %v1908 = vshrl.u32 %v1907, 7
    %v1909 = vsub.s32 2, %v1908
    %v1910 = vrot.slane %v1897, %v1909
    %v1911 = vlaneseq
    %v1912 = vshrl.u32 %v1911, 7
    %v1913 = vsub.s32 3, %v1912
    %v1914 = vrot.slane %v1897, %v1913
    %v2175 = vunpack.c.l.b16 %v1641
    %v2176 = vunpack.c.h.b16 %v1641
    %v2177 = vunpack.c.l.b16 %v1642
    %v2178 = vunpack.c.h.b16 %v1642
    %v2179 = vunpack.c.l.b16 %v1643
    %v2180 = vunpack.c.h.b16 %v1643
    %v2181 = vunpack.c.l.b16 %v1644
    %v2182 = vunpack.c.h.b16 %v1644
    %v2183 = vunpack.c.l.b16 %v1645
    %v2184 = vunpack.c.h.b16 %v1645
    %v2185 = vunpack.c.l.b16 %v1646
    %v2186 = vunpack.c.h.b16 %v1646
    %v2187 = vunpack.c.l.b16 %v1647
    %v2188 = vunpack.c.h.b16 %v1647
    %v2189 = vunpack.c.l.b16 %v1648
    %v2190 = vunpack.c.h.b16 %v1648
    %v2191 = vunpack.c.l.b16 %v1649
    %v2192 = vunpack.c.h.b16 %v1649
    %v2193 = vunpack.c.l.b16 %v1650
    %v2194 = vunpack.c.h.b16 %v1650
    %v2195 = vunpack.c.l.b16 %v1651
    %v2196 = vunpack.c.h.b16 %v1651
    %v2197 = vunpack.c.l.b16 %v1652
    %v2198 = vunpack.c.h.b16 %v1652
    %v2199 = vunpack.c.l.b16 %v1653
    %v2200 = vunpack.c.h.b16 %v1653
    %v2201 = vunpack.c.l.b16 %v1654
    %v2202 = vunpack.c.h.b16 %v1654
    %v2203 = vunpack.c.l.b16 %v1655
    %v2204 = vunpack.c.h.b16 %v1655
    %v2205 = vunpack.c.l.b16 %v1656
    %v2206 = vunpack.c.h.b16 %v1656
    %v2207 = vunpack.c.l.b16 %v1657
    %v2208 = vunpack.c.h.b16 %v1657
    %v2209 = vunpack.c.l.b16 %v1658
    %v2210 = vunpack.c.h.b16 %v1658
    %v2211 = vunpack.c.l.b16 %v1659
    %v2212 = vunpack.c.h.b16 %v1659
    %v2213 = vunpack.c.l.b16 %v1660
    %v2214 = vunpack.c.h.b16 %v1660
    %v2215 = vunpack.c.l.b16 %v1661
    %v2216 = vunpack.c.h.b16 %v1661
    %v2217 = vunpack.c.l.b16 %v1662
    %v2218 = vunpack.c.h.b16 %v1662
    %v2219 = vunpack.c.l.b16 %v1663
    %v2220 = vunpack.c.h.b16 %v1663
    %v2221 = vunpack.c.l.b16 %v1664
    %v2222 = vunpack.c.h.b16 %v1664
    %v2223 = vunpack.c.l.b16 %v1665
    %v2224 = vunpack.c.h.b16 %v1665
    %v2225 = vunpack.c.l.b16 %v1666
    %v2226 = vunpack.c.h.b16 %v1666
    %v2227 = vunpack.c.l.b16 %v1667
    %v2228 = vunpack.c.h.b16 %v1667
    %v2229 = vunpack.c.l.b16 %v1668
    %v2230 = vunpack.c.h.b16 %v1668
    %v2231 = vunpack.c.l.b16 %v1669
    %v2232 = vunpack.c.h.b16 %v1669
    %v2233 = vunpack.c.l.b16 %v1670
    %v2234 = vunpack.c.h.b16 %v1670
    %v2235 = vunpack.c.l.b16 %v1671
    %v2236 = vunpack.c.h.b16 %v1671
    %v2237 = vunpack.c.l.b16 %v1672
    %v2238 = vunpack.c.h.b16 %v1672
    %v2239 = vunpack.c.l.b16 %v1673
    %v2240 = vunpack.c.h.b16 %v1673
    %v2241 = vunpack.c.l.b16 %v1674
    %v2242 = vunpack.c.h.b16 %v1674
    %v2243 = vunpack.c.l.b16 %v1675
    %v2244 = vunpack.c.h.b16 %v1675
    %v2245 = vunpack.c.l.b16 %v1676
    %v2246 = vunpack.c.h.b16 %v1676
    %v2247 = vunpack.c.l.b16 %v1677
    %v2248 = vunpack.c.h.b16 %v1677
    %v2249 = vunpack.c.l.b16 %v1678
    %v2250 = vunpack.c.h.b16 %v1678
    %v2251 = vunpack.c.l.b16 %v1679
    %v2252 = vunpack.c.h.b16 %v1679
    %v2253 = vunpack.c.l.b16 %v1680
    %v2254 = vunpack.c.h.b16 %v1680
    %v2255 = vunpack.c.l.b16 %v1681
    %v2256 = vunpack.c.h.b16 %v1681
    %v2257 = vunpack.c.l.b16 %v1682
    %v2258 = vunpack.c.h.b16 %v1682
    %v2259 = vunpack.c.l.b16 %v1683
    %v2260 = vunpack.c.h.b16 %v1683
    %v2261 = vunpack.c.l.b16 %v1684
    %v2262 = vunpack.c.h.b16 %v1684
    %v2263 = vunpack.c.l.b16 %v1685
    %v2264 = vunpack.c.h.b16 %v1685
    %v2265 = vunpack.c.l.b16 %v1686
    %v2266 = vunpack.c.h.b16 %v1686
    %v2267 = vunpack.c.l.b16 %v1687
    %v2268 = vunpack.c.h.b16 %v1687
    %v2269 = vunpack.c.l.b16 %v1688
    %v2270 = vunpack.c.h.b16 %v1688
    %v2271 = vunpack.c.l.b16 %v1689
    %v2272 = vunpack.c.h.b16 %v1689
    %v2273 = vunpack.c.l.b16 %v1690
    %v2274 = vunpack.c.h.b16 %v1690
    %v2275 = vunpack.c.l.b16 %v1691
    %v2276 = vunpack.c.h.b16 %v1691
    %v2277 = vunpack.c.l.b16 %v1692
    %v2278 = vunpack.c.h.b16 %v1692
    %v2279 = vunpack.c.l.b16 %v1693
    %v2280 = vunpack.c.h.b16 %v1693
    %v2281 = vunpack.c.l.b16 %v1694
    %v2282 = vunpack.c.h.b16 %v1694
    %v2283 = vunpack.c.l.b16 %v1695
    %v2284 = vunpack.c.h.b16 %v1695
    %v2285 = vunpack.c.l.b16 %v1696
    %v2286 = vunpack.c.h.b16 %v1696
    %v2287 = vunpack.c.l.b16 %v1697
    %v2288 = vunpack.c.h.b16 %v1697
    %v2289 = vunpack.c.l.b16 %v1698
    %v2290 = vunpack.c.h.b16 %v1698
    %v2291 = vunpack.c.l.b16 %v1699
    %v2292 = vunpack.c.h.b16 %v1699
    %v2293 = vunpack.c.l.b16 %v1700
    %v2294 = vunpack.c.h.b16 %v1700
    %v2295 = vunpack.c.l.b16 %v1701
    %v2296 = vunpack.c.h.b16 %v1701
    %v2297 = vunpack.c.l.b16 %v1702
    %v2298 = vunpack.c.h.b16 %v1702
    %v2299 = vunpack.c.l.b16 %v1703
    %v2300 = vunpack.c.h.b16 %v1703
    %v2301 = vunpack.c.l.b16 %v1704
    %v2302 = vunpack.c.h.b16 %v1704
    %v2303 = vunpack.c.l.b16 %v1705
    %v2304 = vunpack.c.h.b16 %v1705
    %v2305 = vunpack.c.l.b16 %v1706
    %v2306 = vunpack.c.h.b16 %v1706
    %v2307 = vunpack.c.l.b16 %v1707
    %v2308 = vunpack.c.h.b16 %v1707
    %v2309 = vunpack.c.l.b16 %v1708
    %v2310 = vunpack.c.h.b16 %v1708
    %v2311 = vunpack.c.l.b16 %v1709
    %v2312 = vunpack.c.h.b16 %v1709
    %v2313 = vunpack.c.l.b16 %v1710
    %v2314 = vunpack.c.h.b16 %v1710
    %v2315 = vunpack.c.l.b16 %v1711
    %v2316 = vunpack.c.h.b16 %v1711
    %v2317 = vunpack.c.l.b16 %v1712
    %v2318 = vunpack.c.h.b16 %v1712
    %v2319 = vunpack.c.l.b16 %v1713
    %v2320 = vunpack.c.h.b16 %v1713
    %v2321 = vunpack.c.l.b16 %v1714
    %v2322 = vunpack.c.h.b16 %v1714
    %v2323 = vunpack.c.l.b16 %v1715
    %v2324 = vunpack.c.h.b16 %v1715
    %v2325 = vunpack.c.l.b16 %v1716
    %v2326 = vunpack.c.h.b16 %v1716
    %v2327 = vunpack.c.l.b16 %v1717
    %v2328 = vunpack.c.h.b16 %v1717
    %v2329 = vunpack.c.l.b16 %v1718
    %v2330 = vunpack.c.h.b16 %v1718
    %v2331 = vunpack.c.l.b16 %v1719
    %v2332 = vunpack.c.h.b16 %v1719
    %v2333 = vunpack.c.l.b16 %v1720
    %v2334 = vunpack.c.h.b16 %v1720
    %v2335 = vunpack.c.l.b16 %v1721
    %v2336 = vunpack.c.h.b16 %v1721
    %v2337 = vunpack.c.l.b16 %v1722
    %v2338 = vunpack.c.h.b16 %v1722
    %v2339 = vunpack.c.l.b16 %v1723
    %v2340 = vunpack.c.h.b16 %v1723
    %v2341 = vunpack.c.l.b16 %v1724
    %v2342 = vunpack.c.h.b16 %v1724
    %v2343 = vunpack.c.l.b16 %v1725
    %v2344 = vunpack.c.h.b16 %v1725
    %v2345 = vunpack.c.l.b16 %v1726
    %v2346 = vunpack.c.h.b16 %v1726
    %v2347 = vunpack.c.l.b16 %v1727
    %v2348 = vunpack.c.h.b16 %v1727
    %v2349 = vunpack.c.l.b16 %v1728
    %v2350 = vunpack.c.h.b16 %v1728
    %v2351 = vunpack.c.l.b16 %v1729
    %v2352 = vunpack.c.h.b16 %v1729
    %v2353 = vunpack.c.l.b16 %v1730
    %v2354 = vunpack.c.h.b16 %v1730
    %v2355 = vunpack.c.l.b16 %v1731
    %v2356 = vunpack.c.h.b16 %v1731
    %v2357 = vunpack.c.l.b16 %v1732
    %v2358 = vunpack.c.h.b16 %v1732
    %v2359 = vunpack.c.l.b16 %v1733
    %v2360 = vunpack.c.h.b16 %v1733
    %v2361 = vunpack.c.l.b16 %v1734
    %v2362 = vunpack.c.h.b16 %v1734
    %v2363 = vunpack.c.l.b16 %v1735
    %v2364 = vunpack.c.h.b16 %v1735
    %v2365 = vunpack.c.l.b16 %v1736
    %v2366 = vunpack.c.h.b16 %v1736
    %v2367 = vunpack.c.l.b16 %v1737
    %v2368 = vunpack.c.h.b16 %v1737
    %v2369 = vunpack.c.l.b16 %v1738
    %v2370 = vunpack.c.h.b16 %v1738
    %v2371 = vunpack.c.l.b16 %v1739
    %v2372 = vunpack.c.h.b16 %v1739
    %v2373 = vunpack.c.l.b16 %v1740
    %v2374 = vunpack.c.h.b16 %v1740
    %v2375 = vunpack.c.l.b16 %v1741
    %v2376 = vunpack.c.h.b16 %v1741
    %v2377 = vunpack.c.l.b16 %v1742
    %v2378 = vunpack.c.h.b16 %v1742
    %v2379 = vunpack.c.l.b16 %v1743
    %v2380 = vunpack.c.h.b16 %v1743
    %v2381 = vunpack.c.l.b16 %v1744
    %v2382 = vunpack.c.h.b16 %v1744
    %v2383 = vunpack.c.l.b16 %v1745
    %v2384 = vunpack.c.h.b16 %v1745
    %v2385 = vunpack.c.l.b16 %v1746
    %v2386 = vunpack.c.h.b16 %v1746
    %v2387 = vunpack.c.l.b16 %v1747
    %v2388 = vunpack.c.h.b16 %v1747
    %v2389 = vunpack.c.l.b16 %v1748
    %v2390 = vunpack.c.h.b16 %v1748
    %v2391 = vunpack.c.l.b16 %v1749
    %v2392 = vunpack.c.h.b16 %v1749
    %v2393 = vunpack.c.l.b16 %v1750
    %v2394 = vunpack.c.h.b16 %v1750
    %v2395 = vunpack.c.l.b16 %v1751
    %v2396 = vunpack.c.h.b16 %v1751
    %v2397 = vunpack.c.l.b16 %v1752
    %v2398 = vunpack.c.h.b16 %v1752
    %v2399 = vunpack.c.l.b16 %v1753
    %v2400 = vunpack.c.h.b16 %v1753
    %v2401 = vunpack.c.l.b16 %v1754
    %v2402 = vunpack.c.h.b16 %v1754
    %v2403 = vunpack.c.l.b16 %v1755
    %v2404 = vunpack.c.h.b16 %v1755
    %v2405 = vunpack.c.l.b16 %v1756
    %v2406 = vunpack.c.h.b16 %v1756
    %v2407 = vunpack.c.l.b16 %v1757
    %v2408 = vunpack.c.h.b16 %v1757
    %v2409 = vunpack.c.l.b16 %v1758
    %v2410 = vunpack.c.h.b16 %v1758
    %v2411 = vunpack.c.l.b16 %v1759
    %v2412 = vunpack.c.h.b16 %v1759
    %v2413 = vunpack.c.l.b16 %v1760
    %v2414 = vunpack.c.h.b16 %v1760
    %v2415 = vunpack.c.l.b16 %v1761
    %v2416 = vunpack.c.h.b16 %v1761
    %v2417 = vunpack.c.l.b16 %v1762
    %v2418 = vunpack.c.h.b16 %v1762
    %v2419 = vunpack.c.l.b16 %v1763
    %v2420 = vunpack.c.h.b16 %v1763
    %v2421 = vunpack.c.l.b16 %v1764
    %v2422 = vunpack.c.h.b16 %v1764
    %v2423 = vunpack.c.l.b16 %v1765
    %v2424 = vunpack.c.h.b16 %v1765
    %v2425 = vunpack.c.l.b16 %v1766
    %v2426 = vunpack.c.h.b16 %v1766
    %v2427 = vunpack.c.l.b16 %v1767
    %v2428 = vunpack.c.h.b16 %v1767
    %v2429 = vunpack.c.l.b16 %v1768
    %v2430 = vunpack.c.h.b16 %v1768
    %v2431 = vunpack.c.l.b16 %v1769
    %v2432 = vunpack.c.h.b16 %v1769
    %v2433 = vunpack.c.l.b16 %v1770
    %v2434 = vunpack.c.h.b16 %v1770
    %v2435 = vunpack.c.l.b16 %v1771
    %v2436 = vunpack.c.h.b16 %v1771
    %v2437 = vunpack.c.l.b16 %v1772
    %v2438 = vunpack.c.h.b16 %v1772
    %v2439 = vunpack.c.l.b16 %v1773
    %v2440 = vunpack.c.h.b16 %v1773
    %v2441 = vunpack.c.l.b16 %v1774
    %v2442 = vunpack.c.h.b16 %v1774
    %v2443 = vunpack.c.l.b16 %v1775
    %v2444 = vunpack.c.h.b16 %v1775
    %v2445 = vunpack.c.l.b16 %v1776
    %v2446 = vunpack.c.h.b16 %v1776
    %v2447 = vunpack.c.l.b16 %v1777
    %v2448 = vunpack.c.h.b16 %v1777
    %v2449 = vunpack.c.l.b16 %v1778
    %v2450 = vunpack.c.h.b16 %v1778
    %v2451 = vunpack.c.l.b16 %v1779
    %v2452 = vunpack.c.h.b16 %v1779
    %v2453 = vunpack.c.l.b16 %v1780
    %v2454 = vunpack.c.h.b16 %v1780
    %v2455 = vunpack.c.l.b16 %v1781
    %v2456 = vunpack.c.h.b16 %v1781
    %v2457 = vunpack.c.l.b16 %v1782
    %v2458 = vunpack.c.h.b16 %v1782
    %v2459 = vunpack.c.l.b16 %v1783
    %v2460 = vunpack.c.h.b16 %v1783
    %v2461 = vunpack.c.l.b16 %v1784
    %v2462 = vunpack.c.h.b16 %v1784
    %v2463 = vunpack.c.l.b16 %v1785
    %v2464 = vunpack.c.h.b16 %v1785
    %v2465 = vunpack.c.l.b16 %v1786
    %v2466 = vunpack.c.h.b16 %v1786
    %v2467 = vunpack.c.l.b16 %v1787
    %v2468 = vunpack.c.h.b16 %v1787
    %v2469 = vunpack.c.l.b16 %v1788
    %v2470 = vunpack.c.h.b16 %v1788
    %v2471 = vunpack.c.l.b16 %v1789
    %v2472 = vunpack.c.h.b16 %v1789
    %v2473 = vunpack.c.l.b16 %v1790
    %v2474 = vunpack.c.h.b16 %v1790
    %v2475 = vunpack.c.l.b16 %v1791
    %v2476 = vunpack.c.h.b16 %v1791
    %v2477 = vunpack.c.l.b16 %v1792
    %v2478 = vunpack.c.h.b16 %v1792
    %v2479 = vunpack.c.l.b16 %v1793
    %v2480 = vunpack.c.h.b16 %v1793
    %v2481 = vunpack.c.l.b16 %v1794
    %v2482 = vunpack.c.h.b16 %v1794
    %v2483 = vunpack.c.l.b16 %v1795
    %v2484 = vunpack.c.h.b16 %v1795
    %v2485 = vunpack.c.l.b16 %v1796
    %v2486 = vunpack.c.h.b16 %v1796
    %v2487 = vunpack.c.l.b16 %v1797
    %v2488 = vunpack.c.h.b16 %v1797
    %v2489 = vunpack.c.l.b16 %v1798
    %v2490 = vunpack.c.h.b16 %v1798
    %v2491 = vunpack.c.l.b16 %v1799
    %v2492 = vunpack.c.h.b16 %v1799
    %v2493 = vunpack.c.l.b16 %v1800
    %v2494 = vunpack.c.h.b16 %v1800
    %v2495 = vunpack.c.l.b16 %v1801
    %v2496 = vunpack.c.h.b16 %v1801
    %v2497 = vunpack.c.l.b16 %v1802
    %v2498 = vunpack.c.h.b16 %v1802
    %v2499 = vunpack.c.l.b16 %v1803
    %v2500 = vunpack.c.h.b16 %v1803
    %v2501 = vunpack.c.l.b16 %v1804
    %v2502 = vunpack.c.h.b16 %v1804
    %v2503 = vunpack.c.l.b16 %v1805
    %v2504 = vunpack.c.h.b16 %v1805
    %v2505 = vunpack.c.l.b16 %v1806
    %v2506 = vunpack.c.h.b16 %v1806
    %v2507 = vunpack.c.l.b16 %v1807
    %v2508 = vunpack.c.h.b16 %v1807
    %v2509 = vunpack.c.l.b16 %v1808
    %v2510 = vunpack.c.h.b16 %v1808
    %v2511 = vunpack.c.l.b16 %v1809
    %v2512 = vunpack.c.h.b16 %v1809
    %v2513 = vunpack.c.l.b16 %v1810
    %v2514 = vunpack.c.h.b16 %v1810
    %v2515 = vunpack.c.l.b16 %v1811
    %v2516 = vunpack.c.h.b16 %v1811
    %v2517 = vunpack.c.l.b16 %v1812
    %v2518 = vunpack.c.h.b16 %v1812
    %v2519 = vunpack.c.l.b16 %v1813
    %v2520 = vunpack.c.h.b16 %v1813
    %v2521 = vunpack.c.l.b16 %v1814
    %v2522 = vunpack.c.h.b16 %v1814
    %v2523 = vunpack.c.l.b16 %v1815
    %v2524 = vunpack.c.h.b16 %v1815
    %v2525 = vunpack.c.l.b16 %v1816
    %v2526 = vunpack.c.h.b16 %v1816
    %v2527 = vunpack.c.l.b16 %v1817
    %v2528 = vunpack.c.h.b16 %v1817
    %v2529 = vunpack.c.l.b16 %v1818
    %v2530 = vunpack.c.h.b16 %v1818
    %v2531 = vunpack.c.l.b16 %v1819
    %v2532 = vunpack.c.h.b16 %v1819
    %v2533 = vunpack.c.l.b16 %v1820
    %v2534 = vunpack.c.h.b16 %v1820
    %v2535 = vunpack.c.l.b16 %v1821
    %v2536 = vunpack.c.h.b16 %v1821
    %v2537 = vunpack.c.l.b16 %v1822
    %v2538 = vunpack.c.h.b16 %v1822
    %v2539 = vunpack.c.l.b16 %v1823
    %v2540 = vunpack.c.h.b16 %v1823
    %v2541 = vunpack.c.l.b16 %v1824
    %v2542 = vunpack.c.h.b16 %v1824
    %v2543 = vunpack.c.l.b16 %v1825
    %v2544 = vunpack.c.h.b16 %v1825
    %v2545 = vunpack.c.l.b16 %v1826
    %v2546 = vunpack.c.h.b16 %v1826
    %v2547 = vunpack.c.l.b16 %v1827
    %v2548 = vunpack.c.h.b16 %v1827
    %v2549 = vunpack.c.l.b16 %v1828
    %v2550 = vunpack.c.h.b16 %v1828
    %v2551 = vunpack.c.l.b16 %v1829
    %v2552 = vunpack.c.h.b16 %v1829
    %v2553 = vunpack.c.l.b16 %v1830
    %v2554 = vunpack.c.h.b16 %v1830
    %v2555 = vunpack.c.l.b16 %v1831
    %v2556 = vunpack.c.h.b16 %v1831
    %v2557 = vunpack.c.l.b16 %v1832
    %v2558 = vunpack.c.h.b16 %v1832
    %v2559 = vunpack.c.l.b16 %v1833
    %v2560 = vunpack.c.h.b16 %v1833
    %v2561 = vunpack.c.l.b16 %v1834
    %v2562 = vunpack.c.h.b16 %v1834
    %v2563 = vunpack.c.l.b16 %v1835
    %v2564 = vunpack.c.h.b16 %v1835
    %v2565 = vunpack.c.l.b16 %v1836
    %v2566 = vunpack.c.h.b16 %v1836
    %v2567 = vunpack.c.l.b16 %v1837
    %v2568 = vunpack.c.h.b16 %v1837
    %v2569 = vunpack.c.l.b16 %v1838
    %v2570 = vunpack.c.h.b16 %v1838
    %v2571 = vunpack.c.l.b16 %v1839
    %v2572 = vunpack.c.h.b16 %v1839
    %v2573 = vunpack.c.l.b16 %v1840
    %v2574 = vunpack.c.h.b16 %v1840
    %v2575 = vunpack.c.l.b16 %v1841
    %v2576 = vunpack.c.h.b16 %v1841
    %v2577 = vunpack.c.l.b16 %v1842
    %v2578 = vunpack.c.h.b16 %v1842
    %v2579 = vunpack.c.l.b16 %v1843
    %v2580 = vunpack.c.h.b16 %v1843
    %v2581 = vunpack.c.l.b16 %v1844
    %v2582 = vunpack.c.h.b16 %v1844
    %v2583 = vunpack.c.l.b16 %v1845
    %v2584 = vunpack.c.h.b16 %v1845
    %v2585 = vunpack.c.l.b16 %v1846
    %v2586 = vunpack.c.h.b16 %v1846
    %v2587 = vunpack.c.l.b16 %v1847
    %v2588 = vunpack.c.h.b16 %v1847
    %v2589 = vunpack.c.l.b16 %v1848
    %v2590 = vunpack.c.h.b16 %v1848
    %v2591 = vunpack.c.l.b16 %v1849
    %v2592 = vunpack.c.h.b16 %v1849
    %v2593 = vunpack.c.l.b16 %v1850
    %v2594 = vunpack.c.h.b16 %v1850
    %v2595 = vunpack.c.l.b16 %v1851
    %v2596 = vunpack.c.h.b16 %v1851
    %v2597 = vunpack.c.l.b16 %v1852
    %v2598 = vunpack.c.h.b16 %v1852
    %v2599 = vunpack.c.l.b16 %v1853
    %v2600 = vunpack.c.h.b16 %v1853
    %v2601 = vunpack.c.l.b16 %v1854
    %v2602 = vunpack.c.h.b16 %v1854
    %v2603 = vunpack.c.l.b16 %v1855
    %v2604 = vunpack.c.h.b16 %v1855
    %v2605 = vunpack.c.l.b16 %v1856
    %v2606 = vunpack.c.h.b16 %v1856
    %v2607 = vunpack.c.l.b16 %v1857
    %v2608 = vunpack.c.h.b16 %v1857
    %v2609 = vunpack.c.l.b16 %v1858
    %v2610 = vunpack.c.h.b16 %v1858
    %v2611 = vunpack.c.l.b16 %v1859
    %v2612 = vunpack.c.h.b16 %v1859
    %v2613 = vunpack.c.l.b16 %v1860
    %v2614 = vunpack.c.h.b16 %v1860
    %v2615 = vunpack.c.l.b16 %v1861
    %v2616 = vunpack.c.h.b16 %v1861
    %v2617 = vunpack.c.l.b16 %v1862
    %v2618 = vunpack.c.h.b16 %v1862
    %v2619 = vunpack.c.l.b16 %v1863
    %v2620 = vunpack.c.h.b16 %v1863
    %v2621 = vunpack.c.l.b16 %v1864
    %v2622 = vunpack.c.h.b16 %v1864
    %v2623 = vunpack.c.l.b16 %v1865
    %v2624 = vunpack.c.h.b16 %v1865
    %v2625 = vunpack.c.l.b16 %v1866
    %v2626 = vunpack.c.h.b16 %v1866
    %v2627 = vunpack.c.l.b16 %v1867
    %v2628 = vunpack.c.h.b16 %v1867
    %v2629 = vunpack.c.l.b16 %v1868
    %v2630 = vunpack.c.h.b16 %v1868
    %v2631 = vunpack.c.l.b16 %v1869
    %v2632 = vunpack.c.h.b16 %v1869
    %v2633 = vunpack.c.l.b16 %v1870
    %v2634 = vunpack.c.h.b16 %v1870
    %v2635 = vunpack.c.l.b16 %v1871
    %v2636 = vunpack.c.h.b16 %v1871
    %v2637 = vunpack.c.l.b16 %v1872
    %v2638 = vunpack.c.h.b16 %v1872
    %v2639 = vunpack.c.l.b16 %v1873
    %v2640 = vunpack.c.h.b16 %v1873
    %v2641 = vunpack.c.l.b16 %v1874
    %v2642 = vunpack.c.h.b16 %v1874
    %v2643 = vunpack.c.l.b16 %v1875
    %v2644 = vunpack.c.h.b16 %v1875
    %v2645 = vunpack.c.l.b16 %v1876
    %v2646 = vunpack.c.h.b16 %v1876
    %v2647 = vunpack.c.l.b16 %v1877
    %v2648 = vunpack.c.h.b16 %v1877
    %v2649 = vunpack.c.l.b16 %v1878
    %v2650 = vunpack.c.h.b16 %v1878
    %v2651 = vunpack.c.l.b16 %v1879
    %v2652 = vunpack.c.h.b16 %v1879
    %v2653 = vunpack.c.l.b16 %v1880
    %v2654 = vunpack.c.h.b16 %v1880
    %v2655 = vunpack.c.l.b16 %v1881
    %v2656 = vunpack.c.h.b16 %v1881
    %v2657 = vunpack.c.l.b16 %v1882
    %v2658 = vunpack.c.h.b16 %v1882
    %v2659 = vunpack.c.l.b16 %v1883
    %v2660 = vunpack.c.h.b16 %v1883
    %v2661 = vunpack.c.l.b16 %v1884
    %v2662 = vunpack.c.h.b16 %v1884
    %v2663 = vunpack.c.l.b16 %v1885
    %v2664 = vunpack.c.h.b16 %v1885
    %v2665 = vunpack.c.l.b16 %v1886
    %v2666 = vunpack.c.h.b16 %v1886
    %v2667 = vunpack.c.l.b16 %v1887
    %v2668 = vunpack.c.h.b16 %v1887
    %v2669 = vunpack.c.l.b16 %v1888
    %v2670 = vunpack.c.h.b16 %v1888
    %v2671 = vunpack.c.l.b16 %v1889
    %v2672 = vunpack.c.h.b16 %v1889
    %v2673 = vunpack.c.l.b16 %v1890
    %v2674 = vunpack.c.h.b16 %v1890
    %v2675 = vunpack.c.l.b16 %v1891
    %v2676 = vunpack.c.h.b16 %v1891
    %v2677 = vunpack.c.l.b16 %v1892
    %v2678 = vunpack.c.h.b16 %v1892
    %v2679 = vunpack.c.l.b16 %v1893
    %v2680 = vunpack.c.h.b16 %v1893
    %v2681 = vunpack.c.l.b16 %v1894
    %v2682 = vunpack.c.h.b16 %v1894
    %v2683 = vunpack.c.l.b16 %v1895
    %v2684 = vunpack.c.h.b16 %v1895
    %v2685 = vunpack.c.l.b16 %v1896
    %v2686 = vunpack.c.h.b16 %v1896
    %v2687 = vpack.c.b16 %v2179, %v2175
    %v2688 = vpack.c.b16 %v2180, %v2176
    %v2689 = vpack.c.b16 %v2181, %v2177
    %v2690 = vpack.c.b16 %v2182, %v2178
    %v2691 = vpack.c.b16 %v2187, %v2183
    %v2692 = vpack.c.b16 %v2188, %v2184
    %v2693 = vpack.c.b16 %v2189, %v2185
    %v2694 = vpack.c.b16 %v2190, %v2186
    %v2695 = vpack.c.b16 %v2195, %v2191
    %v2696 = vpack.c.b16 %v2196, %v2192
    %v2697 = vpack.c.b16 %v2197, %v2193
    %v2698 = vpack.c.b16 %v2198, %v2194
    %v2699 = vpack.c.b16 %v2203, %v2199
    %v2700 = vpack.c.b16 %v2204, %v2200
    %v2701 = vpack.c.b16 %v2205, %v2201
    %v2702 = vpack.c.b16 %v2206, %v2202
    %v2703 = vpack.c.b16 %v2211, %v2207
    %v2704 = vpack.c.b16 %v2212, %v2208
    %v2705 = vpack.c.b16 %v2213, %v2209
    %v2706 = vpack.c.b16 %v2214, %v2210
    %v2707 = vpack.c.b16 %v2219, %v2215
    %v2708 = vpack.c.b16 %v2220, %v2216
    %v2709 = vpack.c.b16 %v2221, %v2217
    %v2710 = vpack.c.b16 %v2222, %v2218
    %v2711 = vpack.c.b16 %v2227, %v2223
    %v2712 = vpack.c.b16 %v2228, %v2224
    %v2713 = vpack.c.b16 %v2229, %v2225
    %v2714 = vpack.c.b16 %v2230, %v2226
    %v2715 = vpack.c.b16 %v2235, %v2231
    %v2716 = vpack.c.b16 %v2236, %v2232
    %v2717 = vpack.c.b16 %v2237, %v2233
    %v2718 = vpack.c.b16 %v2238, %v2234
    %v2719 = vpack.c.b16 %v2243, %v2239
    %v2720 = vpack.c.b16 %v2244, %v2240
    %v2721 = vpack.c.b16 %v2245, %v2241
    %v2722 = vpack.c.b16 %v2246, %v2242
    %v2723 = vpack.c.b16 %v2251, %v2247
    %v2724 = vpack.c.b16 %v2252, %v2248
    %v2725 = vpack.c.b16 %v2253, %v2249
    %v2726 = vpack.c.b16 %v2254, %v2250
    %v2727 = vpack.c.b16 %v2259, %v2255
    %v2728 = vpack.c.b16 %v2260, %v2256
    %v2729 = vpack.c.b16 %v2261, %v2257
    %v2730 = vpack.c.b16 %v2262, %v2258
    %v2731 = vpack.c.b16 %v2267, %v2263
    %v2732 = vpack.c.b16 %v2268, %v2264
    %v2733 = vpack.c.b16 %v2269, %v2265
    %v2734 = vpack.c.b16 %v2270, %v2266
    %v2735 = vpack.c.b16 %v2275, %v2271
    %v2736 = vpack.c.b16 %v2276, %v2272
    %v2737 = vpack.c.b16 %v2277, %v2273
    %v2738 = vpack.c.b16 %v2278, %v2274
    %v2739 = vpack.c.b16 %v2283, %v2279
    %v2740 = vpack.c.b16 %v2284, %v2280
    %v2741 = vpack.c.b16 %v2285, %v2281
    %v2742 = vpack.c.b16 %v2286, %v2282
    %v2743 = vpack.c.b16 %v2291, %v2287
    %v2744 = vpack.c.b16 %v2292, %v2288
    %v2745 = vpack.c.b16 %v2293, %v2289
    %v2746 = vpack.c.b16 %v2294, %v2290
    %v2747 = vpack.c.b16 %v2299, %v2295
    %v2748 = vpack.c.b16 %v2300, %v2296
    %v2749 = vpack.c.b16 %v2301, %v2297
    %v2750 = vpack.c.b16 %v2302, %v2298
    %v2751 = vpack.c.b16 %v2307, %v2303
    %v2752 = vpack.c.b16 %v2308, %v2304
    %v2753 = vpack.c.b16 %v2309, %v2305
    %v2754 = vpack.c.b16 %v2310, %v2306
    %v2755 = vpack.c.b16 %v2315, %v2311
    %v2756 = vpack.c.b16 %v2316, %v2312
    %v2757 = vpack.c.b16 %v2317, %v2313
    %v2758 = vpack.c.b16 %v2318, %v2314
    %v2759 = vpack.c.b16 %v2323, %v2319
    %v2760 = vpack.c.b16 %v2324, %v2320
    %v2761 = vpack.c.b16 %v2325, %v2321
    %v2762 = vpack.c.b16 %v2326, %v2322
    %v2763 = vpack.c.b16 %v2331, %v2327
    %v2764 = vpack.c.b16 %v2332, %v2328
    %v2765 = vpack.c.b16 %v2333, %v2329
    %v2766 = vpack.c.b16 %v2334, %v2330
    %v2767 = vpack.c.b16 %v2339, %v2335
    %v2768 = vpack.c.b16 %v2340, %v2336
    %v2769 = vpack.c.b16 %v2341, %v2337
    %v2770 = vpack.c.b16 %v2342, %v2338
    %v2771 = vpack.c.b16 %v2347, %v2343
    %v2772 = vpack.c.b16 %v2348, %v2344
    %v2773 = vpack.c.b16 %v2349, %v2345
    %v2774 = vpack.c.b16 %v2350, %v2346
    %v2775 = vpack.c.b16 %v2355, %v2351
    %v2776 = vpack.c.b16 %v2356, %v2352
    %v2777 = vpack.c.b16 %v2357, %v2353
    %v2778 = vpack.c.b16 %v2358, %v2354
    %v2779 = vpack.c.b16 %v2363, %v2359
    %v2780 = vpack.c.b16 %v2364, %v2360
    %v2781 = vpack.c.b16 %v2365, %v2361
    %v2782 = vpack.c.b16 %v2366, %v2362
    %v2783 = vpack.c.b16 %v2371, %v2367
    %v2784 = vpack.c.b16 %v2372, %v2368
    %v2785 = vpack.c.b16 %v2373, %v2369
    %v2786 = vpack.c.b16 %v2374, %v2370
    %v2787 = vpack.c.b16 %v2379, %v2375
    %v2788 = vpack.c.b16 %v2380, %v2376
    %v2789 = vpack.c.b16 %v2381, %v2377
    %v2790 = vpack.c.b16 %v2382, %v2378
    %v2791 = vpack.c.b16 %v2387, %v2383
    %v2792 = vpack.c.b16 %v2388, %v2384
    %v2793 = vpack.c.b16 %v2389, %v2385
    %v2794 = vpack.c.b16 %v2390, %v2386
    %v2795 = vpack.c.b16 %v2395, %v2391
    %v2796 = vpack.c.b16 %v2396, %v2392
    %v2797 = vpack.c.b16 %v2397, %v2393
    %v2798 = vpack.c.b16 %v2398, %v2394
    %v2799 = vpack.c.b16 %v2403, %v2399
    %v2800 = vpack.c.b16 %v2404, %v2400
    %v2801 = vpack.c.b16 %v2405, %v2401
    %v2802 = vpack.c.b16 %v2406, %v2402
    %v2803 = vpack.c.b16 %v2411, %v2407
    %v2804 = vpack.c.b16 %v2412, %v2408
    %v2805 = vpack.c.b16 %v2413, %v2409
    %v2806 = vpack.c.b16 %v2414, %v2410
    %v2807 = vpack.c.b16 %v2419, %v2415
    %v2808 = vpack.c.b16 %v2420, %v2416
    %v2809 = vpack.c.b16 %v2421, %v2417
    %v2810 = vpack.c.b16 %v2422, %v2418
    %v2811 = vpack.c.b16 %v2427, %v2423
    %v2812 = vpack.c.b16 %v2428, %v2424
    %v2813 = vpack.c.b16 %v2429, %v2425
    %v2814 = vpack.c.b16 %v2430, %v2426
    %v2815 = vpack.c.b16 %v2435, %v2431
    %v2816 = vpack.c.b16 %v2436, %v2432
    %v2817 = vpack.c.b16 %v2437, %v2433
    %v2818 = vpack.c.b16 %v2438, %v2434
    %v2819 = vpack.c.b16 %v2443, %v2439
    %v2820 = vpack.c.b16 %v2444, %v2440
    %v2821 = vpack.c.b16 %v2445, %v2441
    %v2822 = vpack.c.b16 %v2446, %v2442
    %v2823 = vpack.c.b16 %v2451, %v2447
    %v2824 = vpack.c.b16 %v2452, %v2448
    %v2825 = vpack.c.b16 %v2453, %v2449
    %v2826 = vpack.c.b16 %v2454, %v2450
    %v2827 = vpack.c.b16 %v2459, %v2455
    %v2828 = vpack.c.b16 %v2460, %v2456
    %v2829 = vpack.c.b16 %v2461, %v2457
    %v2830 = vpack.c.b16 %v2462, %v2458
    %v2831 = vpack.c.b16 %v2467, %v2463
    %v2832 = vpack.c.b16 %v2468, %v2464
    %v2833 = vpack.c.b16 %v2469, %v2465
    %v2834 = vpack.c.b16 %v2470, %v2466
    %v2835 = vpack.c.b16 %v2475, %v2471
    %v2836 = vpack.c.b16 %v2476, %v2472
    %v2837 = vpack.c.b16 %v2477, %v2473
    %v2838 = vpack.c.b16 %v2478, %v2474
    %v2839 = vpack.c.b16 %v2483, %v2479
    %v2840 = vpack.c.b16 %v2484, %v2480
    %v2841 = vpack.c.b16 %v2485, %v2481
    %v2842 = vpack.c.b16 %v2486, %v2482
    %v2843 = vpack.c.b16 %v2491, %v2487
    %v2844 = vpack.c.b16 %v2492, %v2488
    %v2845 = vpack.c.b16 %v2493, %v2489
    %v2846 = vpack.c.b16 %v2494, %v2490
    %v2847 = vpack.c.b16 %v2499, %v2495
    %v2848 = vpack.c.b16 %v2500, %v2496
    %v2849 = vpack.c.b16 %v2501, %v2497
    %v2850 = vpack.c.b16 %v2502, %v2498
    %v2851 = vpack.c.b16 %v2507, %v2503
    %v2852 = vpack.c.b16 %v2508, %v2504
    %v2853 = vpack.c.b16 %v2509, %v2505
    %v2854 = vpack.c.b16 %v2510, %v2506
    %v2855 = vpack.c.b16 %v2515, %v2511
    %v2856 = vpack.c.b16 %v2516, %v2512
    %v2857 = vpack.c.b16 %v2517, %v2513
    %v2858 = vpack.c.b16 %v2518, %v2514
    %v2859 = vpack.c.b16 %v2523, %v2519
    %v2860 = vpack.c.b16 %v2524, %v2520
    %v2861 = vpack.c.b16 %v2525, %v2521
    %v2862 = vpack.c.b16 %v2526, %v2522
    %v2863 = vpack.c.b16 %v2531, %v2527
    %v2864 = vpack.c.b16 %v2532, %v2528
    %v2865 = vpack.c.b16 %v2533, %v2529
    %v2866 = vpack.c.b16 %v2534, %v2530
    %v2867 = vpack.c.b16 %v2539, %v2535
    %v2868 = vpack.c.b16 %v2540, %v2536
    %v2869 = vpack.c.b16 %v2541, %v2537
    %v2870 = vpack.c.b16 %v2542, %v2538
    %v2871 = vpack.c.b16 %v2547, %v2543
    %v2872 = vpack.c.b16 %v2548, %v2544
    %v2873 = vpack.c.b16 %v2549, %v2545
    %v2874 = vpack.c.b16 %v2550, %v2546
    %v2875 = vpack.c.b16 %v2555, %v2551
    %v2876 = vpack.c.b16 %v2556, %v2552
    %v2877 = vpack.c.b16 %v2557, %v2553
    %v2878 = vpack.c.b16 %v2558, %v2554
    %v2879 = vpack.c.b16 %v2563, %v2559
    %v2880 = vpack.c.b16 %v2564, %v2560
    %v2881 = vpack.c.b16 %v2565, %v2561
    %v2882 = vpack.c.b16 %v2566, %v2562
    %v2883 = vpack.c.b16 %v2571, %v2567
    %v2884 = vpack.c.b16 %v2572, %v2568
    %v2885 = vpack.c.b16 %v2573, %v2569
    %v2886 = vpack.c.b16 %v2574, %v2570
    %v2887 = vpack.c.b16 %v2579, %v2575
    %v2888 = vpack.c.b16 %v2580, %v2576
    %v2889 = vpack.c.b16 %v2581, %v2577
    %v2890 = vpack.c.b16 %v2582, %v2578
    %v2891 = vpack.c.b16 %v2587, %v2583
    %v2892 = vpack.c.b16 %v2588, %v2584
    %v2893 = vpack.c.b16 %v2589, %v2585
    %v2894 = vpack.c.b16 %v2590, %v2586
    %v2895 = vpack.c.b16 %v2595, %v2591
    %v2896 = vpack.c.b16 %v2596, %v2592
    %v2897 = vpack.c.b16 %v2597, %v2593
    %v2898 = vpack.c.b16 %v2598, %v2594
    %v2899 = vpack.c.b16 %v2603, %v2599
    %v2900 = vpack.c.b16 %v2604, %v2600
    %v2901 = vpack.c.b16 %v2605, %v2601
    %v2902 = vpack.c.b16 %v2606, %v2602
    %v2903 = vpack.c.b16 %v2611, %v2607
    %v2904 = vpack.c.b16 %v2612, %v2608
    %v2905 = vpack.c.b16 %v2613, %v2609
    %v2906 = vpack.c.b16 %v2614, %v2610
    %v2907 = vpack.c.b16 %v2619, %v2615
    %v2908 = vpack.c.b16 %v2620, %v2616
    %v2909 = vpack.c.b16 %v2621, %v2617
    %v2910 = vpack.c.b16 %v2622, %v2618
    %v2911 = vpack.c.b16 %v2627, %v2623
    %v2912 = vpack.c.b16 %v2628, %v2624
    %v2913 = vpack.c.b16 %v2629, %v2625
    %v2914 = vpack.c.b16 %v2630, %v2626
    %v2915 = vpack.c.b16 %v2635, %v2631
    %v2916 = vpack.c.b16 %v2636, %v2632
    %v2917 = vpack.c.b16 %v2637, %v2633
    %v2918 = vpack.c.b16 %v2638, %v2634
    %v2919 = vpack.c.b16 %v2643, %v2639
    %v2920 = vpack.c.b16 %v2644, %v2640
    %v2921 = vpack.c.b16 %v2645, %v2641
    %v2922 = vpack.c.b16 %v2646, %v2642
    %v2923 = vpack.c.b16 %v2651, %v2647
    %v2924 = vpack.c.b16 %v2652, %v2648
    %v2925 = vpack.c.b16 %v2653, %v2649
    %v2926 = vpack.c.b16 %v2654, %v2650
    %v2927 = vpack.c.b16 %v2659, %v2655
    %v2928 = vpack.c.b16 %v2660, %v2656
    %v2929 = vpack.c.b16 %v2661, %v2657
    %v2930 = vpack.c.b16 %v2662, %v2658
    %v2931 = vpack.c.b16 %v2667, %v2663
    %v2932 = vpack.c.b16 %v2668, %v2664
    %v2933 = vpack.c.b16 %v2669, %v2665
    %v2934 = vpack.c.b16 %v2670, %v2666
    %v2935 = vpack.c.b16 %v2675, %v2671
    %v2936 = vpack.c.b16 %v2676, %v2672
    %v2937 = vpack.c.b16 %v2677, %v2673
    %v2938 = vpack.c.b16 %v2678, %v2674
    %v2939 = vpack.c.b16 %v2683, %v2679
    %v2940 = vpack.c.b16 %v2684, %v2680
    %v2941 = vpack.c.b16 %v2685, %v2681
    %v2942 = vpack.c.b16 %v2686, %v2682
    %3199 = vmatprep.subr.bf16.mxu0 %v2688
    %3200 = vmatpush1.bf16.msra.mxu0 %v2687
    %3201 = vmatprep.subr.bf16.mxu0 %v2692
    %3202 = vmatpush1.bf16.msra.mxu0 %v2691
    %3203 = vmatprep.subr.bf16.mxu0 %v2696
    %3204 = vmatpush1.bf16.msra.mxu0 %v2695
    %3205 = vmatprep.subr.bf16.mxu0 %v2700
    %3206 = vmatpush1.bf16.msra.mxu0 %v2699
    %3207 = vmatprep.subr.bf16.mxu0 %v2704
    %3208 = vmatpush1.bf16.msra.mxu0 %v2703
    %3209 = vmatprep.subr.bf16.mxu0 %v2708
    %3210 = vmatpush1.bf16.msra.mxu0 %v2707
    %3211 = vmatprep.subr.bf16.mxu0 %v2712
    %3212 = vmatpush1.bf16.msra.mxu0 %v2711
    %3213 = vmatprep.subr.bf16.mxu0 %v2716
    %3214 = vmatpush1.bf16.msra.mxu0 %v2715
    %3215 = vmatprep.subr.bf16.mxu0 %v2720
    %3216 = vmatpush1.bf16.msra.mxu0 %v2719
    %3217 = vmatprep.subr.bf16.mxu0 %v2724
    %3218 = vmatpush1.bf16.msra.mxu0 %v2723
    %3219 = vmatprep.subr.bf16.mxu0 %v2728
    %3220 = vmatpush1.bf16.msra.mxu0 %v2727
    %3221 = vmatprep.subr.bf16.mxu0 %v2732
    %3222 = vmatpush1.bf16.msra.mxu0 %v2731
    %3223 = vmatprep.subr.bf16.mxu0 %v2736
    %3224 = vmatpush1.bf16.msra.mxu0 %v2735
    %3225 = vmatprep.subr.bf16.mxu0 %v2740
    %3226 = vmatpush1.bf16.msra.mxu0 %v2739
    %3227 = vmatprep.subr.bf16.mxu0 %v2744
    %3228 = vmatpush1.bf16.msra.mxu0 %v2743
    %3229 = vmatprep.subr.bf16.mxu0 %v2748
    %3230 = vmatpush1.bf16.msra.mxu0 %v2747
    %3231 = vmatprep.mubr.bf16.mxu0 %v1578
    %3232 = vmatmul.mubr.bf16.gmra.mrb[0].mxu0 %v1577
    %v3233 = vpop.f32.mrb[0].mxu0
    %v3234 = vadd.f32 %v1902, %v3233
    %v3235 = vpop.f32.mrb[0].mxu0
    %v3236 = vadd.f32 %v1906, %v3235
    %v3237 = vpop.f32.mrb[0].mxu0
    %v3238 = vadd.f32 %v1902, %v3237
    %v3239 = vpop.f32.mrb[0].mxu0
    %v3240 = vadd.f32 %v1906, %v3239
    %3241 = vmatprep.mubr.bf16.mxu0 %v1586
    %3242 = vmatmul.mubr.bf16.gmra.mrb[0].mxu0 %v1585
    %v3243 = vpop.f32.mrb[0].mxu0
    %v3244 = vadd.f32 %v1902, %v3243
    %v3245 = vpop.f32.mrb[0].mxu0
    %v3246 = vadd.f32 %v1906, %v3245
    %v3247 = vpop.f32.mrb[0].mxu0
    %v3248 = vadd.f32 %v1902, %v3247
    %v3249 = vpop.f32.mrb[0].mxu0
    %v3250 = vadd.f32 %v1906, %v3249
    %3251 = vmatprep.mubr.bf16.mxu0 %v1594
    %3252 = vmatmul.mubr.bf16.gmra.mrb[0].mxu0 %v1593
    %v3253 = vpop.f32.mrb[0].mxu0
    %v3254 = vadd.f32 %v1902, %v3253
    %v3255 = vpop.f32.mrb[0].mxu0
    %v3256 = vadd.f32 %v1906, %v3255
    %v3257 = vpop.f32.mrb[0].mxu0
    %v3258 = vadd.f32 %v1902, %v3257
    %v3259 = vpop.f32.mrb[0].mxu0
    %v3260 = vadd.f32 %v1906, %v3259
    %3261 = vmatprep.mubr.bf16.mxu0 %v1602
    %3262 = vmatmul.mubr.bf16.gmra.mrb[0].mxu0 %v1601
    %v3263 = vpop.f32.mrb[0].mxu0
    %v3264 = vadd.f32 %v1902, %v3263
    %v3265 = vpop.f32.mrb[0].mxu0
    %v3266 = vadd.f32 %v1906, %v3265
    %v3267 = vpop.f32.mrb[0].mxu0
    %v3268 = vadd.f32 %v1902, %v3267
    %v3269 = vpop.f32.mrb[0].mxu0
    %v3270 = vadd.f32 %v1906, %v3269
    %3271 = vmatprep.mubr.bf16.mxu0 %v1610
    %3272 = vmatmul.mubr.bf16.gmra.mrb[0].mxu0 %v1609
    %v3273 = vpop.f32.mrb[0].mxu0
    %v3274 = vadd.f32 %v1902, %v3273
    %v3275 = vpop.f32.mrb[0].mxu0
    %v3276 = vadd.f32 %v1906, %v3275
    %v3277 = vpop.f32.mrb[0].mxu0
    %v3278 = vadd.f32 %v1902, %v3277
    %v3279 = vpop.f32.mrb[0].mxu0
    %v3280 = vadd.f32 %v1906, %v3279
    %3281 = vmatprep.mubr.bf16.mxu0 %v1618
    %3282 = vmatmul.mubr.bf16.gmra.mrb[0].mxu0 %v1617
    %v3283 = vpop.f32.mrb[0].mxu0
    %v3284 = vadd.f32 %v1902, %v3283
    %v3285 = vpop.f32.mrb[0].mxu0
    %v3286 = vadd.f32 %v1906, %v3285
    %v3287 = vpop.f32.mrb[0].mxu0
    %v3288 = vadd.f32 %v1902, %v3287
    %v3289 = vpop.f32.mrb[0].mxu0
    %v3290 = vadd.f32 %v1906, %v3289
    %3291 = vmatprep.mubr.bf16.mxu0 %v1626
    %3292 = vmatmul.mubr.bf16.gmra.mrb[0].mxu0 %v1625
    %v3293 = vpop.f32.mrb[0].mxu0
    %v3294 = vadd.f32 %v1902, %v3293
    %v3295 = vpop.f32.mrb[0].mxu0
    %v3296 = vadd.f32 %v1906, %v3295
    %v3297 = vpop.f32.mrb[0].mxu0
    %v3298 = vadd.f32 %v1902, %v3297
    %v3299 = vpop.f32.mrb[0].mxu0
    %v3300 = vadd.f32 %v1906, %v3299
    %3301 = vmatprep.mubr.bf16.mxu0 %v1634
    %3302 = vmatmul.mubr.bf16.gmra.mrb[0].mxu0 %v1633
    %v3303 = vpop.f32.mrb[0].mxu0
    %v3304 = vadd.f32 %v1902, %v3303
    %v3305 = vpop.f32.mrb[0].mxu0
    %v3306 = vadd.f32 %v1906, %v3305
    %v3307 = vpop.f32.mrb[0].mxu0
    %v3308 = vadd.f32 %v1902, %v3307
    %v3309 = vpop.f32.mrb[0].mxu0
    %v3310 = vadd.f32 %v1906, %v3309
    %3311 = vdwg.mxu0
    %3312 = vmatprep.subr.bf16.mxu0 %v2752
    %3313 = vmatpush1.bf16.msra.mxu0 %v2751
    %3314 = vmatprep.subr.bf16.mxu0 %v2756
    %3315 = vmatpush1.bf16.msra.mxu0 %v2755
    %3316 = vmatprep.subr.bf16.mxu0 %v2760
    %3317 = vmatpush1.bf16.msra.mxu0 %v2759
    %3318 = vmatprep.subr.bf16.mxu0 %v2764
    %3319 = vmatpush1.bf16.msra.mxu0 %v2763
    %3320 = vmatprep.subr.bf16.mxu0 %v2768
    %3321 = vmatpush1.bf16.msra.mxu0 %v2767
    %3322 = vmatprep.subr.bf16.mxu0 %v2772
    %3323 = vmatpush1.bf16.msra.mxu0 %v2771
    %3324 = vmatprep.subr.bf16.mxu0 %v2776
    %3325 = vmatpush1.bf16.msra.mxu0 %v2775
    %3326 = vmatprep.subr.bf16.mxu0 %v2780
    %3327 = vmatpush1.bf16.msra.mxu0 %v2779
    %3328 = vmatprep.subr.bf16.mxu0 %v2784
    %3329 = vmatpush1.bf16.msra.mxu0 %v2783
    %3330 = vmatprep.subr.bf16.mxu0 %v2788
    %3331 = vmatpush1.bf16.msra.mxu0 %v2787
    %3332 = vmatprep.subr.bf16.mxu0 %v2792
    %3333 = vmatpush1.bf16.msra.mxu0 %v2791
    %3334 = vmatprep.subr.bf16.mxu0 %v2796
    %3335 = vmatpush1.bf16.msra.mxu0 %v2795
    %3336 = vmatprep.subr.bf16.mxu0 %v2800
    %3337 = vmatpush1.bf16.msra.mxu0 %v2799
    %3338 = vmatprep.subr.bf16.mxu0 %v2804
    %3339 = vmatpush1.bf16.msra.mxu0 %v2803
    %3340 = vmatprep.subr.bf16.mxu0 %v2808
    %3341 = vmatpush1.bf16.msra.mxu0 %v2807
    %3342 = vmatprep.subr.bf16.mxu0 %v2812
    %3343 = vmatpush1.bf16.msra.mxu0 %v2811
    %3344 = vmatprep.mubr.bf16.mxu0 %v1580
    %3345 = vmatmul.mubr.bf16.gmra.mrb[0].mxu0 %v1579
    %v3346 = vpop.f32.mrb[0].mxu0
    %v3347 = vadd.f32 %v3234, %v3346
    %v3348 = vpop.f32.mrb[0].mxu0
    %v3349 = vadd.f32 %v3236, %v3348
    %v3350 = vpop.f32.mrb[0].mxu0
    %v3351 = vadd.f32 %v3238, %v3350
    %v3352 = vpop.f32.mrb[0].mxu0
    %v3353 = vadd.f32 %v3240, %v3352
    %3354 = vmatprep.mubr.bf16.mxu0 %v1588
    %3355 = vmatmul.mubr.bf16.gmra.mrb[0].mxu0 %v1587
    %v3356 = vpop.f32.mrb[0].mxu0
    %v3357 = vadd.f32 %v3244, %v3356
    %v3358 = vpop.f32.mrb[0].mxu0
    %v3359 = vadd.f32 %v3246, %v3358
    %v3360 = vpop.f32.mrb[0].mxu0
    %v3361 = vadd.f32 %v3248, %v3360
    %v3362 = vpop.f32.mrb[0].mxu0
    %v3363 = vadd.f32 %v3250, %v3362
    %3364 = vmatprep.mubr.bf16.mxu0 %v1596
    %3365 = vmatmul.mubr.bf16.gmra.mrb[0].mxu0 %v1595
    %v3366 = vpop.f32.mrb[0].mxu0
    %v3367 = vadd.f32 %v3254, %v3366
    %v3368 = vpop.f32.mrb[0].mxu0
    %v3369 = vadd.f32 %v3256, %v3368
    %v3370 = vpop.f32.mrb[0].mxu0
    %v3371 = vadd.f32 %v3258, %v3370
    %v3372 = vpop.f32.mrb[0].mxu0
    %v3373 = vadd.f32 %v3260, %v3372
    %3374 = vmatprep.mubr.bf16.mxu0 %v1604
    %3375 = vmatmul.mubr.bf16.gmra.mrb[0].mxu0 %v1603
    %v3376 = vpop.f32.mrb[0].mxu0
    %v3377 = vadd.f32 %v3264, %v3376
    %v3378 = vpop.f32.mrb[0].mxu0
    %v3379 = vadd.f32 %v3266, %v3378
    %v3380 = vpop.f32.mrb[0].mxu0
    %v3381 = vadd.f32 %v3268, %v3380
    %v3382 = vpop.f32.mrb[0].mxu0
    %v3383 = vadd.f32 %v3270, %v3382
    %3384 = vmatprep.mubr.bf16.mxu0 %v1612
    %3385 = vmatmul.mubr.bf16.gmra.mrb[0].mxu0 %v1611
    %v3386 = vpop.f32.mrb[0].mxu0
    %v3387 = vadd.f32 %v3274, %v3386
    %v3388 = vpop.f32.mrb[0].mxu0
    %v3389 = vadd.f32 %v3276, %v3388
    %v3390 = vpop.f32.mrb[0].mxu0
    %v3391 = vadd.f32 %v3278, %v3390
    %v3392 = vpop.f32.mrb[0].mxu0
    %v3393 = vadd.f32 %v3280, %v3392
    %3394 = vmatprep.mubr.bf16.mxu0 %v1620
    %3395 = vmatmul.mubr.bf16.gmra.mrb[0].mxu0 %v1619
    %v3396 = vpop.f32.mrb[0].mxu0
    %v3397 = vadd.f32 %v3284, %v3396
    %v3398 = vpop.f32.mrb[0].mxu0
    %v3399 = vadd.f32 %v3286, %v3398
    %v3400 = vpop.f32.mrb[0].mxu0
    %v3401 = vadd.f32 %v3288, %v3400
    %v3402 = vpop.f32.mrb[0].mxu0
    %v3403 = vadd.f32 %v3290, %v3402
    %3404 = vmatprep.mubr.bf16.mxu0 %v1628
    %3405 = vmatmul.mubr.bf16.gmra.mrb[0].mxu0 %v1627
    %v3406 = vpop.f32.mrb[0].mxu0
    %v3407 = vadd.f32 %v3294, %v3406
    %v3408 = vpop.f32.mrb[0].mxu0
    %v3409 = vadd.f32 %v3296, %v3408
    %v3410 = vpop.f32.mrb[0].mxu0
    %v3411 = vadd.f32 %v3298, %v3410
    %v3412 = vpop.f32.mrb[0].mxu0
    %v3413 = vadd.f32 %v3300, %v3412
    %3414 = vmatprep.mubr.bf16.mxu0 %v1636
    %3415 = vmatmul.mubr.bf16.gmra.mrb[0].mxu0 %v1635
    %v3416 = vpop.f32.mrb[0].mxu0
    %v3417 = vadd.f32 %v3304, %v3416
    %v3418 = vpop.f32.mrb[0].mxu0
    %v3419 = vadd.f32 %v3306, %v3418
    %v3420 = vpop.f32.mrb[0].mxu0
    %v3421 = vadd.f32 %v3308, %v3420
    %v3422 = vpop.f32.mrb[0].mxu0
    %v3423 = vadd.f32 %v3310, %v3422
    %3424 = vdwg.mxu0
    %3425 = vmatprep.subr.bf16.mxu0 %v2816
    %3426 = vmatpush1.bf16.msra.mxu0 %v2815
    %3427 = vmatprep.subr.bf16.mxu0 %v2820
    %3428 = vmatpush1.bf16.msra.mxu0 %v2819
    %3429 = vmatprep.subr.bf16.mxu0 %v2824
    %3430 = vmatpush1.bf16.msra.mxu0 %v2823
    %3431 = vmatprep.subr.bf16.mxu0 %v2828
    %3432 = vmatpush1.bf16.msra.mxu0 %v2827
    %3433 = vmatprep.subr.bf16.mxu0 %v2832
    %3434 = vmatpush1.bf16.msra.mxu0 %v2831
    %3435 = vmatprep.subr.bf16.mxu0 %v2836
    %3436 = vmatpush1.bf16.msra.mxu0 %v2835
    %3437 = vmatprep.subr.bf16.mxu0 %v2840
    %3438 = vmatpush1.bf16.msra.mxu0 %v2839
    %3439 = vmatprep.subr.bf16.mxu0 %v2844
    %3440 = vmatpush1.bf16.msra.mxu0 %v2843
    %3441 = vmatprep.subr.bf16.mxu0 %v2848
    %3442 = vmatpush1.bf16.msra.mxu0 %v2847
    %3443 = vmatprep.subr.bf16.mxu0 %v2852
    %3444 = vmatpush1.bf16.msra.mxu0 %v2851
    %3445 = vmatprep.subr.bf16.mxu0 %v2856
    %3446 = vmatpush1.bf16.msra.mxu0 %v2855
    %3447 = vmatprep.subr.bf16.mxu0 %v2860
    %3448 = vmatpush1.bf16.msra.mxu0 %v2859
    %3449 = vmatprep.subr.bf16.mxu0 %v2864
    %3450 = vmatpush1.bf16.msra.mxu0 %v2863
    %3451 = vmatprep.subr.bf16.mxu0 %v2868
    %3452 = vmatpush1.bf16.msra.mxu0 %v2867
    %3453 = vmatprep.subr.bf16.mxu0 %v2872
    %3454 = vmatpush1.bf16.msra.mxu0 %v2871
    %3455 = vmatprep.subr.bf16.mxu0 %v2876
    %3456 = vmatpush1.bf16.msra.mxu0 %v2875
    %3457 = vmatprep.mubr.bf16.mxu0 %v1582
    %3458 = vmatmul.mubr.bf16.gmra.mrb[0].mxu0 %v1581
    %v3459 = vpop.f32.mrb[0].mxu0
    %v3460 = vadd.f32 %v3347, %v3459
    %v3461 = vpop.f32.mrb[0].mxu0
    %v3462 = vadd.f32 %v3349, %v3461
    %v3463 = vpop.f32.mrb[0].mxu0
    %v3464 = vadd.f32 %v3351, %v3463
    %v3465 = vpop.f32.mrb[0].mxu0
    %v3466 = vadd.f32 %v3353, %v3465
    %3467 = vmatprep.mubr.bf16.mxu0 %v1590
    %3468 = vmatmul.mubr.bf16.gmra.mrb[0].mxu0 %v1589
    %v3469 = vpop.f32.mrb[0].mxu0
    %v3470 = vadd.f32 %v3357, %v3469
    %v3471 = vpop.f32.mrb[0].mxu0
    %v3472 = vadd.f32 %v3359, %v3471
    %v3473 = vpop.f32.mrb[0].mxu0
    %v3474 = vadd.f32 %v3361, %v3473
    %v3475 = vpop.f32.mrb[0].mxu0
    %v3476 = vadd.f32 %v3363, %v3475
    %3477 = vmatprep.mubr.bf16.mxu0 %v1598
    %3478 = vmatmul.mubr.bf16.gmra.mrb[0].mxu0 %v1597
    %v3479 = vpop.f32.mrb[0].mxu0
    %v3480 = vadd.f32 %v3367, %v3479
    %v3481 = vpop.f32.mrb[0].mxu0
    %v3482 = vadd.f32 %v3369, %v3481
    %v3483 = vpop.f32.mrb[0].mxu0
    %v3484 = vadd.f32 %v3371, %v3483
    %v3485 = vpop.f32.mrb[0].mxu0
    %v3486 = vadd.f32 %v3373, %v3485
    %3487 = vmatprep.mubr.bf16.mxu0 %v1606
    %3488 = vmatmul.mubr.bf16.gmra.mrb[0].mxu0 %v1605
    %v3489 = vpop.f32.mrb[0].mxu0
    %v3490 = vadd.f32 %v3377, %v3489
    %v3491 = vpop.f32.mrb[0].mxu0
    %v3492 = vadd.f32 %v3379, %v3491
    %v3493 = vpop.f32.mrb[0].mxu0
    %v3494 = vadd.f32 %v3381, %v3493
    %v3495 = vpop.f32.mrb[0].mxu0
    %v3496 = vadd.f32 %v3383, %v3495
    %3497 = vmatprep.mubr.bf16.mxu0 %v1614
    %3498 = vmatmul.mubr.bf16.gmra.mrb[0].mxu0 %v1613
    %v3499 = vpop.f32.mrb[0].mxu0
    %v3500 = vadd.f32 %v3387, %v3499
    %v3501 = vpop.f32.mrb[0].mxu0
    %v3502 = vadd.f32 %v3389, %v3501
    %v3503 = vpop.f32.mrb[0].mxu0
    %v3504 = vadd.f32 %v3391, %v3503
    %v3505 = vpop.f32.mrb[0].mxu0
    %v3506 = vadd.f32 %v3393, %v3505
    %3507 = vmatprep.mubr.bf16.mxu0 %v1622
    %3508 = vmatmul.mubr.bf16.gmra.mrb[0].mxu0 %v1621
    %v3509 = vpop.f32.mrb[0].mxu0
    %v3510 = vadd.f32 %v3397, %v3509
    %v3511 = vpop.f32.mrb[0].mxu0
    %v3512 = vadd.f32 %v3399, %v3511
    %v3513 = vpop.f32.mrb[0].mxu0
    %v3514 = vadd.f32 %v3401, %v3513
    %v3515 = vpop.f32.mrb[0].mxu0
    %v3516 = vadd.f32 %v3403, %v3515
    %3517 = vmatprep.mubr.bf16.mxu0 %v1630
    %3518 = vmatmul.mubr.bf16.gmra.mrb[0].mxu0 %v1629
    %v3519 = vpop.f32.mrb[0].mxu0
    %v3520 = vadd.f32 %v3407, %v3519
    %v3521 = vpop.f32.mrb[0].mxu0
    %v3522 = vadd.f32 %v3409, %v3521
    %v3523 = vpop.f32.mrb[0].mxu0
    %v3524 = vadd.f32 %v3411, %v3523
    %v3525 = vpop.f32.mrb[0].mxu0
    %v3526 = vadd.f32 %v3413, %v3525
    %3527 = vmatprep.mubr.bf16.mxu0 %v1638
    %3528 = vmatmul.mubr.bf16.gmra.mrb[0].mxu0 %v1637
    %v3529 = vpop.f32.mrb[0].mxu0
    %v3530 = vadd.f32 %v3417, %v3529
    %v3531 = vpop.f32.mrb[0].mxu0
    %v3532 = vadd.f32 %v3419, %v3531
    %v3533 = vpop.f32.mrb[0].mxu0
    %v3534 = vadd.f32 %v3421, %v3533
    %v3535 = vpop.f32.mrb[0].mxu0
    %v3536 = vadd.f32 %v3423, %v3535
    %3537 = vdwg.mxu0
    %3538 = vmatprep.subr.bf16.mxu0 %v2880
    %3539 = vmatpush1.bf16.msra.mxu0 %v2879
    %3540 = vmatprep.subr.bf16.mxu0 %v2884
    %3541 = vmatpush1.bf16.msra.mxu0 %v2883
    %3542 = vmatprep.subr.bf16.mxu0 %v2888
    %3543 = vmatpush1.bf16.msra.mxu0 %v2887
    %3544 = vmatprep.subr.bf16.mxu0 %v2892
    %3545 = vmatpush1.bf16.msra.mxu0 %v2891
    %3546 = vmatprep.subr.bf16.mxu0 %v2896
    %3547 = vmatpush1.bf16.msra.mxu0 %v2895
    %3548 = vmatprep.subr.bf16.mxu0 %v2900
    %3549 = vmatpush1.bf16.msra.mxu0 %v2899
    %3550 = vmatprep.subr.bf16.mxu0 %v2904
    %3551 = vmatpush1.bf16.msra.mxu0 %v2903
    %3552 = vmatprep.subr.bf16.mxu0 %v2908
    %3553 = vmatpush1.bf16.msra.mxu0 %v2907
    %3554 = vmatprep.subr.bf16.mxu0 %v2912
    %3555 = vmatpush1.bf16.msra.mxu0 %v2911
    %3556 = vmatprep.subr.bf16.mxu0 %v2916
    %3557 = vmatpush1.bf16.msra.mxu0 %v2915
    %3558 = vmatprep.subr.bf16.mxu0 %v2920
    %3559 = vmatpush1.bf16.msra.mxu0 %v2919
    %3560 = vmatprep.subr.bf16.mxu0 %v2924
    %3561 = vmatpush1.bf16.msra.mxu0 %v2923
    %3562 = vmatprep.subr.bf16.mxu0 %v2928
    %3563 = vmatpush1.bf16.msra.mxu0 %v2927
    %3564 = vmatprep.subr.bf16.mxu0 %v2932
    %3565 = vmatpush1.bf16.msra.mxu0 %v2931
    %3566 = vmatprep.subr.bf16.mxu0 %v2936
    %3567 = vmatpush1.bf16.msra.mxu0 %v2935
    %3568 = vmatprep.subr.bf16.mxu0 %v2940
    %3569 = vmatpush1.bf16.msra.mxu0 %v2939
    %3570 = vmatprep.mubr.bf16.mxu0 %v1584
    %3571 = vmatmul.mubr.bf16.gmra.mrb[0].mxu0 %v1583
    %v3572 = vpop.f32.mrb[0].mxu0
    %v3573 = vadd.f32 %v3460, %v3572
    %v3574 = vpop.f32.mrb[0].mxu0
    %v3575 = vadd.f32 %v3462, %v3574
    %v3576 = vpop.f32.mrb[0].mxu0
    %v3577 = vadd.f32 %v3464, %v3576
    %v3578 = vpop.f32.mrb[0].mxu0
    %v3579 = vadd.f32 %v3466, %v3578
    %3580 = vmatprep.mubr.bf16.mxu0 %v1592
    %3581 = vmatmul.mubr.bf16.gmra.mrb[0].mxu0 %v1591
    %v3582 = vpop.f32.mrb[0].mxu0
    %v3583 = vadd.f32 %v3470, %v3582
    %v3584 = vpop.f32.mrb[0].mxu0
    %v3585 = vadd.f32 %v3472, %v3584
    %v3586 = vpop.f32.mrb[0].mxu0
    %v3587 = vadd.f32 %v3474, %v3586
    %v3588 = vpop.f32.mrb[0].mxu0
    %v3589 = vadd.f32 %v3476, %v3588
    %3590 = vmatprep.mubr.bf16.mxu0 %v1600
    %3591 = vmatmul.mubr.bf16.gmra.mrb[0].mxu0 %v1599
    %v3592 = vpop.f32.mrb[0].mxu0
    %v3593 = vadd.f32 %v3480, %v3592
    %v3594 = vpop.f32.mrb[0].mxu0
    %v3595 = vadd.f32 %v3482, %v3594
    %v3596 = vpop.f32.mrb[0].mxu0
    %v3597 = vadd.f32 %v3484, %v3596
    %v3598 = vpop.f32.mrb[0].mxu0
    %v3599 = vadd.f32 %v3486, %v3598
    %3600 = vmatprep.mubr.bf16.mxu0 %v1608
    %3601 = vmatmul.mubr.bf16.gmra.mrb[0].mxu0 %v1607
    %v3602 = vpop.f32.mrb[0].mxu0
    %v3603 = vadd.f32 %v3490, %v3602
    %v3604 = vpop.f32.mrb[0].mxu0
    %v3605 = vadd.f32 %v3492, %v3604
    %v3606 = vpop.f32.mrb[0].mxu0
    %v3607 = vadd.f32 %v3494, %v3606
    %v3608 = vpop.f32.mrb[0].mxu0
    %v3609 = vadd.f32 %v3496, %v3608
    %3610 = vmatprep.mubr.bf16.mxu0 %v1616
    %3611 = vmatmul.mubr.bf16.gmra.mrb[0].mxu0 %v1615
    %v3612 = vpop.f32.mrb[0].mxu0
    %v3613 = vadd.f32 %v3500, %v3612
    %v3614 = vpop.f32.mrb[0].mxu0
    %v3615 = vadd.f32 %v3502, %v3614
    %v3616 = vpop.f32.mrb[0].mxu0
    %v3617 = vadd.f32 %v3504, %v3616
    %v3618 = vpop.f32.mrb[0].mxu0
    %v3619 = vadd.f32 %v3506, %v3618
    %3620 = vmatprep.mubr.bf16.mxu0 %v1624
    %3621 = vmatmul.mubr.bf16.gmra.mrb[0].mxu0 %v1623
    %v3622 = vpop.f32.mrb[0].mxu0
    %v3623 = vadd.f32 %v3510, %v3622
    %v3624 = vpop.f32.mrb[0].mxu0
    %v3625 = vadd.f32 %v3512, %v3624
    %v3626 = vpop.f32.mrb[0].mxu0
    %v3627 = vadd.f32 %v3514, %v3626
    %v3628 = vpop.f32.mrb[0].mxu0
    %v3629 = vadd.f32 %v3516, %v3628
    %3630 = vmatprep.mubr.bf16.mxu0 %v1632
    %3631 = vmatmul.mubr.bf16.gmra.mrb[0].mxu0 %v1631
    %v3632 = vpop.f32.mrb[0].mxu0
    %v3633 = vadd.f32 %v3520, %v3632
    %v3634 = vpop.f32.mrb[0].mxu0
    %v3635 = vadd.f32 %v3522, %v3634
    %v3636 = vpop.f32.mrb[0].mxu0
    %v3637 = vadd.f32 %v3524, %v3636
    %v3638 = vpop.f32.mrb[0].mxu0
    %v3639 = vadd.f32 %v3526, %v3638
    %3640 = vmatprep.mubr.bf16.mxu0 %v1640
    %3641 = vmatmul.mubr.bf16.gmra.mrb[0].mxu0 %v1639
    %v3642 = vpop.f32.mrb[0].mxu0
    %v3643 = vadd.f32 %v3530, %v3642
    %v3644 = vpop.f32.mrb[0].mxu0
    %v3645 = vadd.f32 %v3532, %v3644
    %v3646 = vpop.f32.mrb[0].mxu0
    %v3647 = vadd.f32 %v3534, %v3646
    %v3648 = vpop.f32.mrb[0].mxu0
    %v3649 = vadd.f32 %v3536, %v3648
    %3650 = vdwg.mxu0
    %3651 = vmatprep.subr.bf16.mxu0 %v2690
    %3652 = vmatpush1.bf16.msra.mxu0 %v2689
    %3653 = vmatprep.subr.bf16.mxu0 %v2694
    %3654 = vmatpush1.bf16.msra.mxu0 %v2693
    %3655 = vmatprep.subr.bf16.mxu0 %v2698
    %3656 = vmatpush1.bf16.msra.mxu0 %v2697
    %3657 = vmatprep.subr.bf16.mxu0 %v2702
    %3658 = vmatpush1.bf16.msra.mxu0 %v2701
    %3659 = vmatprep.subr.bf16.mxu0 %v2706
    %3660 = vmatpush1.bf16.msra.mxu0 %v2705
    %3661 = vmatprep.subr.bf16.mxu0 %v2710
    %3662 = vmatpush1.bf16.msra.mxu0 %v2709
    %3663 = vmatprep.subr.bf16.mxu0 %v2714
    %3664 = vmatpush1.bf16.msra.mxu0 %v2713
    %3665 = vmatprep.subr.bf16.mxu0 %v2718
    %3666 = vmatpush1.bf16.msra.mxu0 %v2717
    %3667 = vmatprep.subr.bf16.mxu0 %v2722
    %3668 = vmatpush1.bf16.msra.mxu0 %v2721
    %3669 = vmatprep.subr.bf16.mxu0 %v2726
    %3670 = vmatpush1.bf16.msra.mxu0 %v2725
    %3671 = vmatprep.subr.bf16.mxu0 %v2730
    %3672 = vmatpush1.bf16.msra.mxu0 %v2729
    %3673 = vmatprep.subr.bf16.mxu0 %v2734
    %3674 = vmatpush1.bf16.msra.mxu0 %v2733
    %3675 = vmatprep.subr.bf16.mxu0 %v2738
    %3676 = vmatpush1.bf16.msra.mxu0 %v2737
    %3677 = vmatprep.subr.bf16.mxu0 %v2742
    %3678 = vmatpush1.bf16.msra.mxu0 %v2741
    %3679 = vmatprep.subr.bf16.mxu0 %v2746
    %3680 = vmatpush1.bf16.msra.mxu0 %v2745
    %3681 = vmatprep.subr.bf16.mxu0 %v2750
    %3682 = vmatpush1.bf16.msra.mxu0 %v2749
    %3683 = vmatprep.mubr.bf16.mxu0 %v1578
    %3684 = vmatmul.mubr.bf16.gmra.mrb[0].mxu0 %v1577
    %v3685 = vpop.f32.mrb[0].mxu0
    %v3686 = vadd.f32 %v1910, %v3685
    %v3687 = vpop.f32.mrb[0].mxu0
    %v3688 = vadd.f32 %v1914, %v3687
    %v3689 = vpop.f32.mrb[0].mxu0
    %v3690 = vadd.f32 %v1910, %v3689
    %v3691 = vpop.f32.mrb[0].mxu0
    %v3692 = vadd.f32 %v1914, %v3691
    %3693 = vmatprep.mubr.bf16.mxu0 %v1586
    %3694 = vmatmul.mubr.bf16.gmra.mrb[0].mxu0 %v1585
    %v3695 = vpop.f32.mrb[0].mxu0
    %v3696 = vadd.f32 %v1910, %v3695
    %v3697 = vpop.f32.mrb[0].mxu0
    %v3698 = vadd.f32 %v1914, %v3697
    %v3699 = vpop.f32.mrb[0].mxu0
    %v3700 = vadd.f32 %v1910, %v3699
    %v3701 = vpop.f32.mrb[0].mxu0
    %v3702 = vadd.f32 %v1914, %v3701
    %3703 = vmatprep.mubr.bf16.mxu0 %v1594
    %3704 = vmatmul.mubr.bf16.gmra.mrb[0].mxu0 %v1593
    %v3705 = vpop.f32.mrb[0].mxu0
    %v3706 = vadd.f32 %v1910, %v3705
    %v3707 = vpop.f32.mrb[0].mxu0
    %v3708 = vadd.f32 %v1914, %v3707
    %v3709 = vpop.f32.mrb[0].mxu0
    %v3710 = vadd.f32 %v1910, %v3709
    %v3711 = vpop.f32.mrb[0].mxu0
    %v3712 = vadd.f32 %v1914, %v3711
    %3713 = vmatprep.mubr.bf16.mxu0 %v1602
    %3714 = vmatmul.mubr.bf16.gmra.mrb[0].mxu0 %v1601
    %v3715 = vpop.f32.mrb[0].mxu0
    %v3716 = vadd.f32 %v1910, %v3715
    %v3717 = vpop.f32.mrb[0].mxu0
    %v3718 = vadd.f32 %v1914, %v3717
    %v3719 = vpop.f32.mrb[0].mxu0
    %v3720 = vadd.f32 %v1910, %v3719
    %v3721 = vpop.f32.mrb[0].mxu0
    %v3722 = vadd.f32 %v1914, %v3721
    %3723 = vmatprep.mubr.bf16.mxu0 %v1610
    %3724 = vmatmul.mubr.bf16.gmra.mrb[0].mxu0 %v1609
    %v3725 = vpop.f32.mrb[0].mxu0
    %v3726 = vadd.f32 %v1910, %v3725
    %v3727 = vpop.f32.mrb[0].mxu0
    %v3728 = vadd.f32 %v1914, %v3727
    %v3729 = vpop.f32.mrb[0].mxu0
    %v3730 = vadd.f32 %v1910, %v3729
    %v3731 = vpop.f32.mrb[0].mxu0
    %v3732 = vadd.f32 %v1914, %v3731
    %3733 = vmatprep.mubr.bf16.mxu0 %v1618
    %3734 = vmatmul.mubr.bf16.gmra.mrb[0].mxu0 %v1617
    %v3735 = vpop.f32.mrb[0].mxu0
    %v3736 = vadd.f32 %v1910, %v3735
    %v3737 = vpop.f32.mrb[0].mxu0
    %v3738 = vadd.f32 %v1914, %v3737
    %v3739 = vpop.f32.mrb[0].mxu0
    %v3740 = vadd.f32 %v1910, %v3739
    %v3741 = vpop.f32.mrb[0].mxu0
    %v3742 = vadd.f32 %v1914, %v3741
    %3743 = vmatprep.mubr.bf16.mxu0 %v1626
    %3744 = vmatmul.mubr.bf16.gmra.mrb[0].mxu0 %v1625
    %v3745 = vpop.f32.mrb[0].mxu0
    %v3746 = vadd.f32 %v1910, %v3745
    %v3747 = vpop.f32.mrb[0].mxu0
    %v3748 = vadd.f32 %v1914, %v3747
    %v3749 = vpop.f32.mrb[0].mxu0
    %v3750 = vadd.f32 %v1910, %v3749
    %v3751 = vpop.f32.mrb[0].mxu0
    %v3752 = vadd.f32 %v1914, %v3751
    %3753 = vmatprep.mubr.bf16.mxu0 %v1634
    %3754 = vmatmul.mubr.bf16.gmra.mrb[0].mxu0 %v1633
    %v3755 = vpop.f32.mrb[0].mxu0
    %v3756 = vadd.f32 %v1910, %v3755
    %v3757 = vpop.f32.mrb[0].mxu0
    %v3758 = vadd.f32 %v1914, %v3757
    %v3759 = vpop.f32.mrb[0].mxu0
    %v3760 = vadd.f32 %v1910, %v3759
    %v3761 = vpop.f32.mrb[0].mxu0
    %v3762 = vadd.f32 %v1914, %v3761
    %3763 = vdwg.mxu0
    %3764 = vmatprep.subr.bf16.mxu0 %v2754
    %3765 = vmatpush1.bf16.msra.mxu0 %v2753
    %3766 = vmatprep.subr.bf16.mxu0 %v2758
    %3767 = vmatpush1.bf16.msra.mxu0 %v2757
    %3768 = vmatprep.subr.bf16.mxu0 %v2762
    %3769 = vmatpush1.bf16.msra.mxu0 %v2761
    %3770 = vmatprep.subr.bf16.mxu0 %v2766
    %3771 = vmatpush1.bf16.msra.mxu0 %v2765
    %3772 = vmatprep.subr.bf16.mxu0 %v2770
    %3773 = vmatpush1.bf16.msra.mxu0 %v2769
    %3774 = vmatprep.subr.bf16.mxu0 %v2774
    %3775 = vmatpush1.bf16.msra.mxu0 %v2773
    %3776 = vmatprep.subr.bf16.mxu0 %v2778
    %3777 = vmatpush1.bf16.msra.mxu0 %v2777
    %3778 = vmatprep.subr.bf16.mxu0 %v2782
    %3779 = vmatpush1.bf16.msra.mxu0 %v2781
    %3780 = vmatprep.subr.bf16.mxu0 %v2786
    %3781 = vmatpush1.bf16.msra.mxu0 %v2785
    %3782 = vmatprep.subr.bf16.mxu0 %v2790
    %3783 = vmatpush1.bf16.msra.mxu0 %v2789
    %3784 = vmatprep.subr.bf16.mxu0 %v2794
    %3785 = vmatpush1.bf16.msra.mxu0 %v2793
    %3786 = vmatprep.subr.bf16.mxu0 %v2798
    %3787 = vmatpush1.bf16.msra.mxu0 %v2797
    %3788 = vmatprep.subr.bf16.mxu0 %v2802
    %3789 = vmatpush1.bf16.msra.mxu0 %v2801
    %3790 = vmatprep.subr.bf16.mxu0 %v2806
    %3791 = vmatpush1.bf16.msra.mxu0 %v2805
    %3792 = vmatprep.subr.bf16.mxu0 %v2810
    %3793 = vmatpush1.bf16.msra.mxu0 %v2809
    %3794 = vmatprep.subr.bf16.mxu0 %v2814
    %3795 = vmatpush1.bf16.msra.mxu0 %v2813
    %3796 = vmatprep.mubr.bf16.mxu0 %v1580
    %3797 = vmatmul.mubr.bf16.gmra.mrb[0].mxu0 %v1579
    %v3798 = vpop.f32.mrb[0].mxu0
    %v3799 = vadd.f32 %v3686, %v3798
    %v3800 = vpop.f32.mrb[0].mxu0
    %v3801 = vadd.f32 %v3688, %v3800
    %v3802 = vpop.f32.mrb[0].mxu0
    %v3803 = vadd.f32 %v3690, %v3802
    %v3804 = vpop.f32.mrb[0].mxu0
    %v3805 = vadd.f32 %v3692, %v3804
    %3806 = vmatprep.mubr.bf16.mxu0 %v1588
    %3807 = vmatmul.mubr.bf16.gmra.mrb[0].mxu0 %v1587
    %v3808 = vpop.f32.mrb[0].mxu0
    %v3809 = vadd.f32 %v3696, %v3808
    %v3810 = vpop.f32.mrb[0].mxu0
    %v3811 = vadd.f32 %v3698, %v3810
    %v3812 = vpop.f32.mrb[0].mxu0
    %v3813 = vadd.f32 %v3700, %v3812
    %v3814 = vpop.f32.mrb[0].mxu0
    %v3815 = vadd.f32 %v3702, %v3814
    %3816 = vmatprep.mubr.bf16.mxu0 %v1596
    %3817 = vmatmul.mubr.bf16.gmra.mrb[0].mxu0 %v1595
    %v3818 = vpop.f32.mrb[0].mxu0
    %v3819 = vadd.f32 %v3706, %v3818
    %v3820 = vpop.f32.mrb[0].mxu0
    %v3821 = vadd.f32 %v3708, %v3820
    %v3822 = vpop.f32.mrb[0].mxu0
    %v3823 = vadd.f32 %v3710, %v3822
    %v3824 = vpop.f32.mrb[0].mxu0
    %v3825 = vadd.f32 %v3712, %v3824
    %3826 = vmatprep.mubr.bf16.mxu0 %v1604
    %3827 = vmatmul.mubr.bf16.gmra.mrb[0].mxu0 %v1603
    %v3828 = vpop.f32.mrb[0].mxu0
    %v3829 = vadd.f32 %v3716, %v3828
    %v3830 = vpop.f32.mrb[0].mxu0
    %v3831 = vadd.f32 %v3718, %v3830
    %v3832 = vpop.f32.mrb[0].mxu0
    %v3833 = vadd.f32 %v3720, %v3832
    %v3834 = vpop.f32.mrb[0].mxu0
    %v3835 = vadd.f32 %v3722, %v3834
    %3836 = vmatprep.mubr.bf16.mxu0 %v1612
    %3837 = vmatmul.mubr.bf16.gmra.mrb[0].mxu0 %v1611
    %v3838 = vpop.f32.mrb[0].mxu0
    %v3839 = vadd.f32 %v3726, %v3838
    %v3840 = vpop.f32.mrb[0].mxu0
    %v3841 = vadd.f32 %v3728, %v3840
    %v3842 = vpop.f32.mrb[0].mxu0
    %v3843 = vadd.f32 %v3730, %v3842
    %v3844 = vpop.f32.mrb[0].mxu0
    %v3845 = vadd.f32 %v3732, %v3844
    %3846 = vmatprep.mubr.bf16.mxu0 %v1620
    %3847 = vmatmul.mubr.bf16.gmra.mrb[0].mxu0 %v1619
    %v3848 = vpop.f32.mrb[0].mxu0
    %v3849 = vadd.f32 %v3736, %v3848
    %v3850 = vpop.f32.mrb[0].mxu0
    %v3851 = vadd.f32 %v3738, %v3850
    %v3852 = vpop.f32.mrb[0].mxu0
    %v3853 = vadd.f32 %v3740, %v3852
    %v3854 = vpop.f32.mrb[0].mxu0
    %v3855 = vadd.f32 %v3742, %v3854
    %3856 = vmatprep.mubr.bf16.mxu0 %v1628
    %3857 = vmatmul.mubr.bf16.gmra.mrb[0].mxu0 %v1627
    %v3858 = vpop.f32.mrb[0].mxu0
    %v3859 = vadd.f32 %v3746, %v3858
    %v3860 = vpop.f32.mrb[0].mxu0
    %v3861 = vadd.f32 %v3748, %v3860
    %v3862 = vpop.f32.mrb[0].mxu0
    %v3863 = vadd.f32 %v3750, %v3862
    %v3864 = vpop.f32.mrb[0].mxu0
    %v3865 = vadd.f32 %v3752, %v3864
    %3866 = vmatprep.mubr.bf16.mxu0 %v1636
    %3867 = vmatmul.mubr.bf16.gmra.mrb[0].mxu0 %v1635
    %v3868 = vpop.f32.mrb[0].mxu0
    %v3869 = vadd.f32 %v3756, %v3868
    %v3870 = vpop.f32.mrb[0].mxu0
    %v3871 = vadd.f32 %v3758, %v3870
    %v3872 = vpop.f32.mrb[0].mxu0
    %v3873 = vadd.f32 %v3760, %v3872
    %v3874 = vpop.f32.mrb[0].mxu0
    %v3875 = vadd.f32 %v3762, %v3874
    %3876 = vdwg.mxu0
    %3877 = vmatprep.subr.bf16.mxu0 %v2818
    %3878 = vmatpush1.bf16.msra.mxu0 %v2817
    %3879 = vmatprep.subr.bf16.mxu0 %v2822
    %3880 = vmatpush1.bf16.msra.mxu0 %v2821
    %3881 = vmatprep.subr.bf16.mxu0 %v2826
    %3882 = vmatpush1.bf16.msra.mxu0 %v2825
    %3883 = vmatprep.subr.bf16.mxu0 %v2830
    %3884 = vmatpush1.bf16.msra.mxu0 %v2829
    %3885 = vmatprep.subr.bf16.mxu0 %v2834
    %3886 = vmatpush1.bf16.msra.mxu0 %v2833
    %3887 = vmatprep.subr.bf16.mxu0 %v2838
    %3888 = vmatpush1.bf16.msra.mxu0 %v2837
    %3889 = vmatprep.subr.bf16.mxu0 %v2842
    %3890 = vmatpush1.bf16.msra.mxu0 %v2841
    %3891 = vmatprep.subr.bf16.mxu0 %v2846
    %3892 = vmatpush1.bf16.msra.mxu0 %v2845
    %3893 = vmatprep.subr.bf16.mxu0 %v2850
    %3894 = vmatpush1.bf16.msra.mxu0 %v2849
    %3895 = vmatprep.subr.bf16.mxu0 %v2854
    %3896 = vmatpush1.bf16.msra.mxu0 %v2853
    %3897 = vmatprep.subr.bf16.mxu0 %v2858
    %3898 = vmatpush1.bf16.msra.mxu0 %v2857
    %3899 = vmatprep.subr.bf16.mxu0 %v2862
    %3900 = vmatpush1.bf16.msra.mxu0 %v2861
    %3901 = vmatprep.subr.bf16.mxu0 %v2866
    %3902 = vmatpush1.bf16.msra.mxu0 %v2865
    %3903 = vmatprep.subr.bf16.mxu0 %v2870
    %3904 = vmatpush1.bf16.msra.mxu0 %v2869
    %3905 = vmatprep.subr.bf16.mxu0 %v2874
    %3906 = vmatpush1.bf16.msra.mxu0 %v2873
    %3907 = vmatprep.subr.bf16.mxu0 %v2878
    %3908 = vmatpush1.bf16.msra.mxu0 %v2877
    %3909 = vmatprep.mubr.bf16.mxu0 %v1582
    %3910 = vmatmul.mubr.bf16.gmra.mrb[0].mxu0 %v1581
    %v3911 = vpop.f32.mrb[0].mxu0
    %v3912 = vadd.f32 %v3799, %v3911
    %v3913 = vpop.f32.mrb[0].mxu0
    %v3914 = vadd.f32 %v3801, %v3913
    %v3915 = vpop.f32.mrb[0].mxu0
    %v3916 = vadd.f32 %v3803, %v3915
    %v3917 = vpop.f32.mrb[0].mxu0
    %v3918 = vadd.f32 %v3805, %v3917
    %3919 = vmatprep.mubr.bf16.mxu0 %v1590
    %3920 = vmatmul.mubr.bf16.gmra.mrb[0].mxu0 %v1589
    %v3921 = vpop.f32.mrb[0].mxu0
    %v3922 = vadd.f32 %v3809, %v3921
    %v3923 = vpop.f32.mrb[0].mxu0
    %v3924 = vadd.f32 %v3811, %v3923
    %v3925 = vpop.f32.mrb[0].mxu0
    %v3926 = vadd.f32 %v3813, %v3925
    %v3927 = vpop.f32.mrb[0].mxu0
    %v3928 = vadd.f32 %v3815, %v3927
    %3929 = vmatprep.mubr.bf16.mxu0 %v1598
    %3930 = vmatmul.mubr.bf16.gmra.mrb[0].mxu0 %v1597
    %v3931 = vpop.f32.mrb[0].mxu0
    %v3932 = vadd.f32 %v3819, %v3931
    %v3933 = vpop.f32.mrb[0].mxu0
    %v3934 = vadd.f32 %v3821, %v3933
    %v3935 = vpop.f32.mrb[0].mxu0
    %v3936 = vadd.f32 %v3823, %v3935
    %v3937 = vpop.f32.mrb[0].mxu0
    %v3938 = vadd.f32 %v3825, %v3937
    %3939 = vmatprep.mubr.bf16.mxu0 %v1606
    %3940 = vmatmul.mubr.bf16.gmra.mrb[0].mxu0 %v1605
    %v3941 = vpop.f32.mrb[0].mxu0
    %v3942 = vadd.f32 %v3829, %v3941
    %v3943 = vpop.f32.mrb[0].mxu0
    %v3944 = vadd.f32 %v3831, %v3943
    %v3945 = vpop.f32.mrb[0].mxu0
    %v3946 = vadd.f32 %v3833, %v3945
    %v3947 = vpop.f32.mrb[0].mxu0
    %v3948 = vadd.f32 %v3835, %v3947
    %3949 = vmatprep.mubr.bf16.mxu0 %v1614
    %3950 = vmatmul.mubr.bf16.gmra.mrb[0].mxu0 %v1613
    %v3951 = vpop.f32.mrb[0].mxu0
    %v3952 = vadd.f32 %v3839, %v3951
    %v3953 = vpop.f32.mrb[0].mxu0
    %v3954 = vadd.f32 %v3841, %v3953
    %v3955 = vpop.f32.mrb[0].mxu0
    %v3956 = vadd.f32 %v3843, %v3955
    %v3957 = vpop.f32.mrb[0].mxu0
    %v3958 = vadd.f32 %v3845, %v3957
    %3959 = vmatprep.mubr.bf16.mxu0 %v1622
    %3960 = vmatmul.mubr.bf16.gmra.mrb[0].mxu0 %v1621
    %v3961 = vpop.f32.mrb[0].mxu0
    %v3962 = vadd.f32 %v3849, %v3961
    %v3963 = vpop.f32.mrb[0].mxu0
    %v3964 = vadd.f32 %v3851, %v3963
    %v3965 = vpop.f32.mrb[0].mxu0
    %v3966 = vadd.f32 %v3853, %v3965
    %v3967 = vpop.f32.mrb[0].mxu0
    %v3968 = vadd.f32 %v3855, %v3967
    %3969 = vmatprep.mubr.bf16.mxu0 %v1630
    %3970 = vmatmul.mubr.bf16.gmra.mrb[0].mxu0 %v1629
    %v3971 = vpop.f32.mrb[0].mxu0
    %v3972 = vadd.f32 %v3859, %v3971
    %v3973 = vpop.f32.mrb[0].mxu0
    %v3974 = vadd.f32 %v3861, %v3973
    %v3975 = vpop.f32.mrb[0].mxu0
    %v3976 = vadd.f32 %v3863, %v3975
    %v3977 = vpop.f32.mrb[0].mxu0
    %v3978 = vadd.f32 %v3865, %v3977
    %3979 = vmatprep.mubr.bf16.mxu0 %v1638
    %3980 = vmatmul.mubr.bf16.gmra.mrb[0].mxu0 %v1637
    %v3981 = vpop.f32.mrb[0].mxu0
    %v3982 = vadd.f32 %v3869, %v3981
    %v3983 = vpop.f32.mrb[0].mxu0
    %v3984 = vadd.f32 %v3871, %v3983
    %v3985 = vpop.f32.mrb[0].mxu0
    %v3986 = vadd.f32 %v3873, %v3985
    %v3987 = vpop.f32.mrb[0].mxu0
    %v3988 = vadd.f32 %v3875, %v3987
    %3989 = vdwg.mxu0
    %3990 = vmatprep.subr.bf16.mxu0 %v2882
    %3991 = vmatpush1.bf16.msra.mxu0 %v2881
    %3992 = vmatprep.subr.bf16.mxu0 %v2886
    %3993 = vmatpush1.bf16.msra.mxu0 %v2885
    %3994 = vmatprep.subr.bf16.mxu0 %v2890
    %3995 = vmatpush1.bf16.msra.mxu0 %v2889
    %3996 = vmatprep.subr.bf16.mxu0 %v2894
    %3997 = vmatpush1.bf16.msra.mxu0 %v2893
    %3998 = vmatprep.subr.bf16.mxu0 %v2898
    %3999 = vmatpush1.bf16.msra.mxu0 %v2897
    %4000 = vmatprep.subr.bf16.mxu0 %v2902
    %4001 = vmatpush1.bf16.msra.mxu0 %v2901
    %4002 = vmatprep.subr.bf16.mxu0 %v2906
    %4003 = vmatpush1.bf16.msra.mxu0 %v2905
    %4004 = vmatprep.subr.bf16.mxu0 %v2910
    %4005 = vmatpush1.bf16.msra.mxu0 %v2909
    %4006 = vmatprep.subr.bf16.mxu0 %v2914
    %4007 = vmatpush1.bf16.msra.mxu0 %v2913
    %4008 = vmatprep.subr.bf16.mxu0 %v2918
    %4009 = vmatpush1.bf16.msra.mxu0 %v2917
    %4010 = vmatprep.subr.bf16.mxu0 %v2922
    %4011 = vmatpush1.bf16.msra.mxu0 %v2921
    %4012 = vmatprep.subr.bf16.mxu0 %v2926
    %4013 = vmatpush1.bf16.msra.mxu0 %v2925
    %4014 = vmatprep.subr.bf16.mxu0 %v2930
    %4015 = vmatpush1.bf16.msra.mxu0 %v2929
    %4016 = vmatprep.subr.bf16.mxu0 %v2934
    %4017 = vmatpush1.bf16.msra.mxu0 %v2933
    %4018 = vmatprep.subr.bf16.mxu0 %v2938
    %4019 = vmatpush1.bf16.msra.mxu0 %v2937
    %4020 = vmatprep.subr.bf16.mxu0 %v2942
    %4021 = vmatpush1.bf16.msra.mxu0 %v2941
    %4022 = vmatprep.mubr.bf16.mxu0 %v1584
    %4023 = vmatmul.mubr.bf16.gmra.mrb[0].mxu0 %v1583
    %v4024 = vpop.f32.mrb[0].mxu0
    %v4025 = vadd.f32 %v3912, %v4024
    %v4026 = vpop.f32.mrb[0].mxu0
    %v4027 = vadd.f32 %v3914, %v4026
    %v4028 = vpop.f32.mrb[0].mxu0
    %v4029 = vadd.f32 %v3916, %v4028
    %v4030 = vpop.f32.mrb[0].mxu0
    %v4031 = vadd.f32 %v3918, %v4030
    %4032 = vmatprep.mubr.bf16.mxu0 %v1592
    %4033 = vmatmul.mubr.bf16.gmra.mrb[0].mxu0 %v1591
    %v4034 = vpop.f32.mrb[0].mxu0
    %v4035 = vadd.f32 %v3922, %v4034
    %v4036 = vpop.f32.mrb[0].mxu0
    %v4037 = vadd.f32 %v3924, %v4036
    %v4038 = vpop.f32.mrb[0].mxu0
    %v4039 = vadd.f32 %v3926, %v4038
    %v4040 = vpop.f32.mrb[0].mxu0
    %v4041 = vadd.f32 %v3928, %v4040
    %4042 = vmatprep.mubr.bf16.mxu0 %v1600
    %4043 = vmatmul.mubr.bf16.gmra.mrb[0].mxu0 %v1599
    %v4044 = vpop.f32.mrb[0].mxu0
    %v4045 = vadd.f32 %v3932, %v4044
    %v4046 = vpop.f32.mrb[0].mxu0
    %v4047 = vadd.f32 %v3934, %v4046
    %v4048 = vpop.f32.mrb[0].mxu0
    %v4049 = vadd.f32 %v3936, %v4048
    %v4050 = vpop.f32.mrb[0].mxu0
    %v4051 = vadd.f32 %v3938, %v4050
    %4052 = vmatprep.mubr.bf16.mxu0 %v1608
    %4053 = vmatmul.mubr.bf16.gmra.mrb[0].mxu0 %v1607
    %v4054 = vpop.f32.mrb[0].mxu0
    %v4055 = vadd.f32 %v3942, %v4054
    %v4056 = vpop.f32.mrb[0].mxu0
    %v4057 = vadd.f32 %v3944, %v4056
    %v4058 = vpop.f32.mrb[0].mxu0
    %v4059 = vadd.f32 %v3946, %v4058
    %v4060 = vpop.f32.mrb[0].mxu0
    %v4061 = vadd.f32 %v3948, %v4060
    %4062 = vmatprep.mubr.bf16.mxu0 %v1616
    %4063 = vmatmul.mubr.bf16.gmra.mrb[0].mxu0 %v1615
    %v4064 = vpop.f32.mrb[0].mxu0
    %v4065 = vadd.f32 %v3952, %v4064
    %v4066 = vpop.f32.mrb[0].mxu0
    %v4067 = vadd.f32 %v3954, %v4066
    %v4068 = vpop.f32.mrb[0].mxu0
    %v4069 = vadd.f32 %v3956, %v4068
    %v4070 = vpop.f32.mrb[0].mxu0
    %v4071 = vadd.f32 %v3958, %v4070
    %4072 = vmatprep.mubr.bf16.mxu0 %v1624
    %4073 = vmatmul.mubr.bf16.gmra.mrb[0].mxu0 %v1623
    %v4074 = vpop.f32.mrb[0].mxu0
    %v4075 = vadd.f32 %v3962, %v4074
    %v4076 = vpop.f32.mrb[0].mxu0
    %v4077 = vadd.f32 %v3964, %v4076
    %v4078 = vpop.f32.mrb[0].mxu0
    %v4079 = vadd.f32 %v3966, %v4078
    %v4080 = vpop.f32.mrb[0].mxu0
    %v4081 = vadd.f32 %v3968, %v4080
    %4082 = vmatprep.mubr.bf16.mxu0 %v1632
    %4083 = vmatmul.mubr.bf16.gmra.mrb[0].mxu0 %v1631
    %v4084 = vpop.f32.mrb[0].mxu0
    %v4085 = vadd.f32 %v3972, %v4084
    %v4086 = vpop.f32.mrb[0].mxu0
    %v4087 = vadd.f32 %v3974, %v4086
    %v4088 = vpop.f32.mrb[0].mxu0
    %v4089 = vadd.f32 %v3976, %v4088
    %v4090 = vpop.f32.mrb[0].mxu0
    %v4091 = vadd.f32 %v3978, %v4090
    %4092 = vmatprep.mubr.bf16.mxu0 %v1640
    %4093 = vmatmul.mubr.bf16.gmra.mrb[0].mxu0 %v1639
    %v4094 = vpop.f32.mrb[0].mxu0
    %v4095 = vadd.f32 %v3982, %v4094
    %v4096 = vpop.f32.mrb[0].mxu0
    %v4097 = vadd.f32 %v3984, %v4096
    %v4098 = vpop.f32.mrb[0].mxu0
    %v4099 = vadd.f32 %v3986, %v4098
    %v4100 = vpop.f32.mrb[0].mxu0
    %v4101 = vadd.f32 %v3988, %v4100
    %4102 = vdwg.mxu0
    %v4103 = vmax.f32 %v3573, 0.0
    %v4104 = vmax.f32 %v3575, 0.0
    %v4105 = vmax.f32 %v4025, 0.0
    %v4106 = vmax.f32 %v4027, 0.0
    %v4107 = vmax.f32 %v3577, 0.0
    %v4108 = vmax.f32 %v3579, 0.0
    %v4109 = vmax.f32 %v4029, 0.0
    %v4110 = vmax.f32 %v4031, 0.0
    %v4111 = vmax.f32 %v3583, 0.0
    %v4112 = vmax.f32 %v3585, 0.0
    %v4113 = vmax.f32 %v4035, 0.0
    %v4114 = vmax.f32 %v4037, 0.0
    %v4115 = vmax.f32 %v3587, 0.0
    %v4116 = vmax.f32 %v3589, 0.0
    %v4117 = vmax.f32 %v4039, 0.0
    %v4118 = vmax.f32 %v4041, 0.0
    %v4119 = vmax.f32 %v3593, 0.0
    %v4120 = vmax.f32 %v3595, 0.0
    %v4121 = vmax.f32 %v4045, 0.0
    %v4122 = vmax.f32 %v4047, 0.0
    %v4123 = vmax.f32 %v3597, 0.0
    %v4124 = vmax.f32 %v3599, 0.0
    %v4125 = vmax.f32 %v4049, 0.0
    %v4126 = vmax.f32 %v4051, 0.0
    %v4127 = vmax.f32 %v3603, 0.0
    %v4128 = vmax.f32 %v3605, 0.0
    %v4129 = vmax.f32 %v4055, 0.0
    %v4130 = vmax.f32 %v4057, 0.0
    %v4131 = vmax.f32 %v3607, 0.0
    %v4132 = vmax.f32 %v3609, 0.0
    %v4133 = vmax.f32 %v4059, 0.0
    %v4134 = vmax.f32 %v4061, 0.0
    %v4135 = vmax.f32 %v3613, 0.0
    %v4136 = vmax.f32 %v3615, 0.0
    %v4137 = vmax.f32 %v4065, 0.0
    %v4138 = vmax.f32 %v4067, 0.0
    %v4139 = vmax.f32 %v3617, 0.0
    %v4140 = vmax.f32 %v3619, 0.0
    %v4141 = vmax.f32 %v4069, 0.0
    %v4142 = vmax.f32 %v4071, 0.0
    %v4143 = vmax.f32 %v3623, 0.0
    %v4144 = vmax.f32 %v3625, 0.0
    %v4145 = vmax.f32 %v4075, 0.0
    %v4146 = vmax.f32 %v4077, 0.0
    %v4147 = vmax.f32 %v3627, 0.0
    %v4148 = vmax.f32 %v3629, 0.0
    %v4149 = vmax.f32 %v4079, 0.0
    %v4150 = vmax.f32 %v4081, 0.0
    %v4151 = vmax.f32 %v3633, 0.0
    %v4152 = vmax.f32 %v3635, 0.0
    %v4153 = vmax.f32 %v4085, 0.0
    %v4154 = vmax.f32 %v4087, 0.0
    %v4155 = vmax.f32 %v3637, 0.0
    %v4156 = vmax.f32 %v3639, 0.0
    %v4157 = vmax.f32 %v4089, 0.0
    %v4158 = vmax.f32 %v4091, 0.0
    %v4159 = vmax.f32 %v3643, 0.0
    %v4160 = vmax.f32 %v3645, 0.0
    %v4161 = vmax.f32 %v4095, 0.0
    %v4162 = vmax.f32 %v4097, 0.0
    %v4163 = vmax.f32 %v3647, 0.0
    %v4164 = vmax.f32 %v3649, 0.0
    %v4165 = vmax.f32 %v4099, 0.0
    %v4166 = vmax.f32 %v4101, 0.0
    %v4167 = vpack.c.bf16 %v4107, %v4103
    %v4168 = vpack.c.bf16 %v4108, %v4104
    %v4169 = vpack.c.bf16 %v4109, %v4105
    %v4170 = vpack.c.bf16 %v4110, %v4106
    %v4171 = vpack.c.bf16 %v4115, %v4111
    %v4172 = vpack.c.bf16 %v4116, %v4112
    %v4173 = vpack.c.bf16 %v4117, %v4113
    %v4174 = vpack.c.bf16 %v4118, %v4114
    %v4175 = vpack.c.bf16 %v4123, %v4119
    %v4176 = vpack.c.bf16 %v4124, %v4120
    %v4177 = vpack.c.bf16 %v4125, %v4121
    %v4178 = vpack.c.bf16 %v4126, %v4122
    %v4179 = vpack.c.bf16 %v4131, %v4127
    %v4180 = vpack.c.bf16 %v4132, %v4128
    %v4181 = vpack.c.bf16 %v4133, %v4129
    %v4182 = vpack.c.bf16 %v4134, %v4130
    %v4183 = vpack.c.bf16 %v4139, %v4135
    %v4184 = vpack.c.bf16 %v4140, %v4136
    %v4185 = vpack.c.bf16 %v4141, %v4137
    %v4186 = vpack.c.bf16 %v4142, %v4138
    %v4187 = vpack.c.bf16 %v4147, %v4143
    %v4188 = vpack.c.bf16 %v4148, %v4144
    %v4189 = vpack.c.bf16 %v4149, %v4145
    %v4190 = vpack.c.bf16 %v4150, %v4146
    %v4191 = vpack.c.bf16 %v4155, %v4151
    %v4192 = vpack.c.bf16 %v4156, %v4152
    %v4193 = vpack.c.bf16 %v4157, %v4153
    %v4194 = vpack.c.bf16 %v4158, %v4154
    %v4195 = vpack.c.bf16 %v4163, %v4159
    %v4196 = vpack.c.bf16 %v4164, %v4160
    %v4197 = vpack.c.bf16 %v4165, %v4161
    %v4198 = vpack.c.bf16 %v4166, %v4162
    %v4199 = vld [vmem:[#allocation9] sm:$0xf]
    %v4200 = vld [vmem:[#allocation9 + $0x4] sm:$0xf]
    %v4201 = vld [vmem:[#allocation9 + $0x8] sm:$0xf]
    %v4202 = vld [vmem:[#allocation9 + $0xc] sm:$0xf]
    %v4203 = vld [vmem:[#allocation9 + $0x10] sm:$0xf]
    %v4204 = vld [vmem:[#allocation9 + $0x14] sm:$0xf]
    %v4205 = vld [vmem:[#allocation9 + $0x18] sm:$0xf]
    %v4206 = vld [vmem:[#allocation9 + $0x1c] sm:$0xf]
    %v4207 = vld [vmem:[#allocation9 + $0x20] sm:$0xf]
    %v4208 = vld [vmem:[#allocation9 + $0x24] sm:$0xf]
    %v4209 = vld [vmem:[#allocation9 + $0x28] sm:$0xf]
    %v4210 = vld [vmem:[#allocation9 + $0x2c] sm:$0xf]
    %v4211 = vld [vmem:[#allocation9 + $0x30] sm:$0xf]
    %v4212 = vld [vmem:[#allocation9 + $0x34] sm:$0xf]
    %v4213 = vld [vmem:[#allocation9 + $0x38] sm:$0xf]
    %v4214 = vld [vmem:[#allocation9 + $0x3c] sm:$0xf]
    %v4215 = vld [vmem:[#allocation9 + $0x40] sm:$0xf]
    %v4216 = vld [vmem:[#allocation9 + $0x44] sm:$0xf]
    %v4217 = vld [vmem:[#allocation9 + $0x48] sm:$0xf]
    %v4218 = vld [vmem:[#allocation9 + $0x4c] sm:$0xf]
    %v4219 = vld [vmem:[#allocation9 + $0x50] sm:$0xf]
    %v4220 = vld [vmem:[#allocation9 + $0x54] sm:$0xf]
    %v4221 = vld [vmem:[#allocation9 + $0x58] sm:$0xf]
    %v4222 = vld [vmem:[#allocation9 + $0x5c] sm:$0xf]
    %v4223 = vld [vmem:[#allocation9 + $0x60] sm:$0xf]
    %v4224 = vld [vmem:[#allocation9 + $0x64] sm:$0xf]
    %v4225 = vld [vmem:[#allocation9 + $0x68] sm:$0xf]
    %v4226 = vld [vmem:[#allocation9 + $0x6c] sm:$0xf]
    %v4227 = vld [vmem:[#allocation9 + $0x70] sm:$0xf]
    %v4228 = vld [vmem:[#allocation9 + $0x74] sm:$0xf]
    %v4229 = vld [vmem:[#allocation9 + $0x78] sm:$0xf]
    %v4230 = vld [vmem:[#allocation9 + $0x7c] sm:$0xf]
    %v4231 = vld [vmem:[#allocation9 + $0x80] sm:$0xf]
    %v4232 = vld [vmem:[#allocation9 + $0x84] sm:$0xf]
    %v4233 = vld [vmem:[#allocation9 + $0x88] sm:$0xf]
    %v4234 = vld [vmem:[#allocation9 + $0x8c] sm:$0xf]
    %v4235 = vld [vmem:[#allocation9 + $0x90] sm:$0xf]
    %v4236 = vld [vmem:[#allocation9 + $0x94] sm:$0xf]
    %v4237 = vld [vmem:[#allocation9 + $0x98] sm:$0xf]
    %v4238 = vld [vmem:[#allocation9 + $0x9c] sm:$0xf]
    %v4239 = vld [vmem:[#allocation9 + $0xa0] sm:$0xf]
    %v4240 = vld [vmem:[#allocation9 + $0xa4] sm:$0xf]
    %v4241 = vld [vmem:[#allocation9 + $0xa8] sm:$0xf]
    %v4242 = vld [vmem:[#allocation9 + $0xac] sm:$0xf]
    %v4243 = vld [vmem:[#allocation9 + $0xb0] sm:$0xf]
    %v4244 = vld [vmem:[#allocation9 + $0xb4] sm:$0xf]
    %v4245 = vld [vmem:[#allocation9 + $0xb8] sm:$0xf]
    %v4246 = vld [vmem:[#allocation9 + $0xbc] sm:$0xf]
    %v4247 = vld [vmem:[#allocation9 + $0xc0] sm:$0xf]
    %v4248 = vld [vmem:[#allocation9 + $0xc4] sm:$0xf]
    %v4249 = vld [vmem:[#allocation9 + $0xc8] sm:$0xf]
    %v4250 = vld [vmem:[#allocation9 + $0xcc] sm:$0xf]
    %v4251 = vld [vmem:[#allocation9 + $0xd0] sm:$0xf]
    %v4252 = vld [vmem:[#allocation9 + $0xd4] sm:$0xf]
    %v4253 = vld [vmem:[#allocation9 + $0xd8] sm:$0xf]
    %v4254 = vld [vmem:[#allocation9 + $0xdc] sm:$0xf]
    %v4255 = vld [vmem:[#allocation9 + $0xe0] sm:$0xf]
    %v4256 = vld [vmem:[#allocation9 + $0xe4] sm:$0xf]
    %v4257 = vld [vmem:[#allocation9 + $0xe8] sm:$0xf]
    %v4258 = vld [vmem:[#allocation9 + $0xec] sm:$0xf]
    %v4259 = vld [vmem:[#allocation9 + $0xf0] sm:$0xf]
    %v4260 = vld [vmem:[#allocation9 + $0xf4] sm:$0xf]
    %v4261 = vld [vmem:[#allocation9 + $0xf8] sm:$0xf]
    %v4262 = vld [vmem:[#allocation9 + $0xfc] sm:$0xf]
    %v4263 = vld [vmem:[%s6] sm:$0x1]
    %v4265 = vlaneseq
    %v4266 = vshrl.u32 %v4265, 7
    %v4267 = vsub.s32 0, %v4266
    %v4268 = vrot.slane %v4263, %v4267
    %v4334 = vunpack.c.l.b16 %v4199
    %v4335 = vunpack.c.l.b16 %v4200
    %v4336 = vunpack.c.l.b16 %v4201
    %v4337 = vunpack.c.l.b16 %v4202
    %v4338 = vunpack.c.l.b16 %v4203
    %v4339 = vunpack.c.l.b16 %v4204
    %v4340 = vunpack.c.l.b16 %v4205
    %v4341 = vunpack.c.l.b16 %v4206
    %v4342 = vunpack.c.l.b16 %v4207
    %v4343 = vunpack.c.l.b16 %v4208
    %v4344 = vunpack.c.l.b16 %v4209
    %v4345 = vunpack.c.l.b16 %v4210
    %v4346 = vunpack.c.l.b16 %v4211
    %v4347 = vunpack.c.l.b16 %v4212
    %v4348 = vunpack.c.l.b16 %v4213
    %v4349 = vunpack.c.l.b16 %v4214
    %v4350 = vunpack.c.l.b16 %v4215
    %v4351 = vunpack.c.l.b16 %v4216
    %v4352 = vunpack.c.l.b16 %v4217
    %v4353 = vunpack.c.l.b16 %v4218
    %v4354 = vunpack.c.l.b16 %v4219
    %v4355 = vunpack.c.l.b16 %v4220
    %v4356 = vunpack.c.l.b16 %v4221
    %v4357 = vunpack.c.l.b16 %v4222
    %v4358 = vunpack.c.l.b16 %v4223
    %v4359 = vunpack.c.l.b16 %v4224
    %v4360 = vunpack.c.l.b16 %v4225
    %v4361 = vunpack.c.l.b16 %v4226
    %v4362 = vunpack.c.l.b16 %v4227
    %v4363 = vunpack.c.l.b16 %v4228
    %v4364 = vunpack.c.l.b16 %v4229
    %v4365 = vunpack.c.l.b16 %v4230
    %v4366 = vunpack.c.l.b16 %v4231
    %v4367 = vunpack.c.l.b16 %v4232
    %v4368 = vunpack.c.l.b16 %v4233
    %v4369 = vunpack.c.l.b16 %v4234
    %v4370 = vunpack.c.l.b16 %v4235
    %v4371 = vunpack.c.l.b16 %v4236
    %v4372 = vunpack.c.l.b16 %v4237
    %v4373 = vunpack.c.l.b16 %v4238
    %v4374 = vunpack.c.l.b16 %v4239
    %v4375 = vunpack.c.l.b16 %v4240
    %v4376 = vunpack.c.l.b16 %v4241
    %v4377 = vunpack.c.l.b16 %v4242
    %v4378 = vunpack.c.l.b16 %v4243
    %v4379 = vunpack.c.l.b16 %v4244
    %v4380 = vunpack.c.l.b16 %v4245
    %v4381 = vunpack.c.l.b16 %v4246
    %v4382 = vunpack.c.l.b16 %v4247
    %v4383 = vunpack.c.l.b16 %v4248
    %v4384 = vunpack.c.l.b16 %v4249
    %v4385 = vunpack.c.l.b16 %v4250
    %v4386 = vunpack.c.l.b16 %v4251
    %v4387 = vunpack.c.l.b16 %v4252
    %v4388 = vunpack.c.l.b16 %v4253
    %v4389 = vunpack.c.l.b16 %v4254
    %v4390 = vunpack.c.l.b16 %v4255
    %v4391 = vunpack.c.l.b16 %v4256
    %v4392 = vunpack.c.l.b16 %v4257
    %v4393 = vunpack.c.l.b16 %v4258
    %v4394 = vunpack.c.l.b16 %v4259
    %v4395 = vunpack.c.l.b16 %v4260
    %v4396 = vunpack.c.l.b16 %v4261
    %v4397 = vunpack.c.l.b16 %v4262
    %v4398 = vpack.c.b16 %v4335, %v4334
    %v4399 = vpack.c.b16 %v4337, %v4336
    %v4400 = vpack.c.b16 %v4339, %v4338
    %v4401 = vpack.c.b16 %v4341, %v4340
    %v4402 = vpack.c.b16 %v4343, %v4342
    %v4403 = vpack.c.b16 %v4345, %v4344
    %v4404 = vpack.c.b16 %v4347, %v4346
    %v4405 = vpack.c.b16 %v4349, %v4348
    %v4406 = vpack.c.b16 %v4351, %v4350
    %v4407 = vpack.c.b16 %v4353, %v4352
    %v4408 = vpack.c.b16 %v4355, %v4354
    %v4409 = vpack.c.b16 %v4357, %v4356
    %v4410 = vpack.c.b16 %v4359, %v4358
    %v4411 = vpack.c.b16 %v4361, %v4360
    %v4412 = vpack.c.b16 %v4363, %v4362
    %v4413 = vpack.c.b16 %v4365, %v4364
    %v4414 = vpack.c.b16 %v4367, %v4366
    %v4415 = vpack.c.b16 %v4369, %v4368
    %v4416 = vpack.c.b16 %v4371, %v4370
    %v4417 = vpack.c.b16 %v4373, %v4372
    %v4418 = vpack.c.b16 %v4375, %v4374
    %v4419 = vpack.c.b16 %v4377, %v4376
    %v4420 = vpack.c.b16 %v4379, %v4378
    %v4421 = vpack.c.b16 %v4381, %v4380
    %v4422 = vpack.c.b16 %v4383, %v4382
    %v4423 = vpack.c.b16 %v4385, %v4384
    %v4424 = vpack.c.b16 %v4387, %v4386
    %v4425 = vpack.c.b16 %v4389, %v4388
    %v4426 = vpack.c.b16 %v4391, %v4390
    %v4427 = vpack.c.b16 %v4393, %v4392
    %v4428 = vpack.c.b16 %v4395, %v4394
    %v4429 = vpack.c.b16 %v4397, %v4396
    %4462 = vmatprep.subr.bf16.mxu0 0
    %4463 = vmatpush1.bf16.msra.mxu0 %v4398
    %4464 = vmatprep.subr.bf16.mxu0 0
    %4465 = vmatpush1.bf16.msra.mxu0 %v4399
    %4466 = vmatprep.subr.bf16.mxu0 0
    %4467 = vmatpush1.bf16.msra.mxu0 %v4400
    %4468 = vmatprep.subr.bf16.mxu0 0
    %4469 = vmatpush1.bf16.msra.mxu0 %v4401
    %4470 = vmatprep.subr.bf16.mxu0 0
    %4471 = vmatpush1.bf16.msra.mxu0 %v4402
    %4472 = vmatprep.subr.bf16.mxu0 0
    %4473 = vmatpush1.bf16.msra.mxu0 %v4403
    %4474 = vmatprep.subr.bf16.mxu0 0
    %4475 = vmatpush1.bf16.msra.mxu0 %v4404
    %4476 = vmatprep.subr.bf16.mxu0 0
    %4477 = vmatpush1.bf16.msra.mxu0 %v4405
    %4478 = vmatprep.subr.bf16.mxu0 0
    %4479 = vmatpush1.bf16.msra.mxu0 %v4406
    %4480 = vmatprep.subr.bf16.mxu0 0
    %4481 = vmatpush1.bf16.msra.mxu0 %v4407
    %4482 = vmatprep.subr.bf16.mxu0 0
    %4483 = vmatpush1.bf16.msra.mxu0 %v4408
    %4484 = vmatprep.subr.bf16.mxu0 0
    %4485 = vmatpush1.bf16.msra.mxu0 %v4409
    %4486 = vmatprep.subr.bf16.mxu0 0
    %4487 = vmatpush1.bf16.msra.mxu0 %v4410
    %4488 = vmatprep.subr.bf16.mxu0 0
    %4489 = vmatpush1.bf16.msra.mxu0 %v4411
    %4490 = vmatprep.subr.bf16.mxu0 0
    %4491 = vmatpush1.bf16.msra.mxu0 %v4412
    %4492 = vmatprep.subr.bf16.mxu0 0
    %4493 = vmatpush1.bf16.msra.mxu0 %v4413
    %4494 = vmatprep.mubr.bf16.mxu0 %v4168
    %4495 = vmatmul.mubr.bf16.gmra.mrb[0].mxu0 %v4167
    %v4496 = vpop.f32.mrb[0].mxu0
    %v4497 = vadd.f32 %v4268, %v4496
    %v4498 = vpop.f32.mrb[0].mxu0
    %v4499 = vpop.f32.mrb[0].mxu0
    %v4500 = vadd.f32 %v4268, %v4499
    %v4501 = vpop.f32.mrb[0].mxu0
    %4502 = vmatprep.mubr.bf16.mxu0 %v4172
    %4503 = vmatmul.mubr.bf16.gmra.mrb[0].mxu0 %v4171
    %v4504 = vpop.f32.mrb[0].mxu0
    %v4505 = vadd.f32 %v4268, %v4504
    %v4506 = vpop.f32.mrb[0].mxu0
    %v4507 = vpop.f32.mrb[0].mxu0
    %v4508 = vadd.f32 %v4268, %v4507
    %v4509 = vpop.f32.mrb[0].mxu0
    %4510 = vmatprep.mubr.bf16.mxu0 %v4176
    %4511 = vmatmul.mubr.bf16.gmra.mrb[0].mxu0 %v4175
    %v4512 = vpop.f32.mrb[0].mxu0
    %v4513 = vadd.f32 %v4268, %v4512
    %v4514 = vpop.f32.mrb[0].mxu0
    %v4515 = vpop.f32.mrb[0].mxu0
    %v4516 = vadd.f32 %v4268, %v4515
    %v4517 = vpop.f32.mrb[0].mxu0
    %4518 = vmatprep.mubr.bf16.mxu0 %v4180
    %4519 = vmatmul.mubr.bf16.gmra.mrb[0].mxu0 %v4179
    %v4520 = vpop.f32.mrb[0].mxu0
    %v4521 = vadd.f32 %v4268, %v4520
    %v4522 = vpop.f32.mrb[0].mxu0
    %v4523 = vpop.f32.mrb[0].mxu0
    %v4524 = vadd.f32 %v4268, %v4523
    %v4525 = vpop.f32.mrb[0].mxu0
    %4526 = vmatprep.mubr.bf16.mxu0 %v4184
    %4527 = vmatmul.mubr.bf16.gmra.mrb[0].mxu0 %v4183
    %v4528 = vpop.f32.mrb[0].mxu0
    %v4529 = vadd.f32 %v4268, %v4528
    %v4530 = vpop.f32.mrb[0].mxu0
    %v4531 = vpop.f32.mrb[0].mxu0
    %v4532 = vadd.f32 %v4268, %v4531
    %v4533 = vpop.f32.mrb[0].mxu0
    %4534 = vmatprep.mubr.bf16.mxu0 %v4188
    %4535 = vmatmul.mubr.bf16.gmra.mrb[0].mxu0 %v4187
    %v4536 = vpop.f32.mrb[0].mxu0
    %v4537 = vadd.f32 %v4268, %v4536
    %v4538 = vpop.f32.mrb[0].mxu0
    %v4539 = vpop.f32.mrb[0].mxu0
    %v4540 = vadd.f32 %v4268, %v4539
    %v4541 = vpop.f32.mrb[0].mxu0
    %4542 = vmatprep.mubr.bf16.mxu0 %v4192
    %4543 = vmatmul.mubr.bf16.gmra.mrb[0].mxu0 %v4191
    %v4544 = vpop.f32.mrb[0].mxu0
    %v4545 = vadd.f32 %v4268, %v4544
    %v4546 = vpop.f32.mrb[0].mxu0
    %v4547 = vpop.f32.mrb[0].mxu0
    %v4548 = vadd.f32 %v4268, %v4547
    %v4549 = vpop.f32.mrb[0].mxu0
    %4550 = vmatprep.mubr.bf16.mxu0 %v4196
    %4551 = vmatmul.mubr.bf16.gmra.mrb[0].mxu0 %v4195
    %v4552 = vpop.f32.mrb[0].mxu0
    %v4553 = vadd.f32 %v4268, %v4552
    %v4554 = vpop.f32.mrb[0].mxu0
    %v4555 = vpop.f32.mrb[0].mxu0
    %v4556 = vadd.f32 %v4268, %v4555
    %v4557 = vpop.f32.mrb[0].mxu0
    %4558 = vdwg.mxu0
    %4559 = vmatprep.subr.bf16.mxu0 0
    %4560 = vmatpush1.bf16.msra.mxu0 %v4414
    %4561 = vmatprep.subr.bf16.mxu0 0
    %4562 = vmatpush1.bf16.msra.mxu0 %v4415
    %4563 = vmatprep.subr.bf16.mxu0 0
    %4564 = vmatpush1.bf16.msra.mxu0 %v4416
    %4565 = vmatprep.subr.bf16.mxu0 0
    %4566 = vmatpush1.bf16.msra.mxu0 %v4417
    %4567 = vmatprep.subr.bf16.mxu0 0
    %4568 = vmatpush1.bf16.msra.mxu0 %v4418
    %4569 = vmatprep.subr.bf16.mxu0 0
    %4570 = vmatpush1.bf16.msra.mxu0 %v4419
    %4571 = vmatprep.subr.bf16.mxu0 0
    %4572 = vmatpush1.bf16.msra.mxu0 %v4420
    %4573 = vmatprep.subr.bf16.mxu0 0
    %4574 = vmatpush1.bf16.msra.mxu0 %v4421
    %4575 = vmatprep.subr.bf16.mxu0 0
    %4576 = vmatpush1.bf16.msra.mxu0 %v4422
    %4577 = vmatprep.subr.bf16.mxu0 0
    %4578 = vmatpush1.bf16.msra.mxu0 %v4423
    %4579 = vmatprep.subr.bf16.mxu0 0
    %4580 = vmatpush1.bf16.msra.mxu0 %v4424
    %4581 = vmatprep.subr.bf16.mxu0 0
    %4582 = vmatpush1.bf16.msra.mxu0 %v4425
    %4583 = vmatprep.subr.bf16.mxu0 0
    %4584 = vmatpush1.bf16.msra.mxu0 %v4426
    %4585 = vmatprep.subr.bf16.mxu0 0
    %4586 = vmatpush1.bf16.msra.mxu0 %v4427
    %4587 = vmatprep.subr.bf16.mxu0 0
    %4588 = vmatpush1.bf16.msra.mxu0 %v4428
    %4589 = vmatprep.subr.bf16.mxu0 0
    %4590 = vmatpush1.bf16.msra.mxu0 %v4429
    %4591 = vmatprep.mubr.bf16.mxu0 %v4170
    %4592 = vmatmul.mubr.bf16.gmra.mrb[0].mxu0 %v4169
    %v4593 = vpop.f32.mrb[0].mxu0
    %v4594 = vadd.f32 %v4497, %v4593
    %v4595 = vpop.f32.mrb[0].mxu0
    %v4596 = vpop.f32.mrb[0].mxu0
    %v4597 = vadd.f32 %v4500, %v4596
    %v4598 = vpop.f32.mrb[0].mxu0
    %4599 = vmatprep.mubr.bf16.mxu0 %v4174
    %4600 = vmatmul.mubr.bf16.gmra.mrb[0].mxu0 %v4173
    %v4601 = vpop.f32.mrb[0].mxu0
    %v4602 = vadd.f32 %v4505, %v4601
    %v4603 = vpop.f32.mrb[0].mxu0
    %v4604 = vpop.f32.mrb[0].mxu0
    %v4605 = vadd.f32 %v4508, %v4604
    %v4606 = vpop.f32.mrb[0].mxu0
    %4607 = vmatprep.mubr.bf16.mxu0 %v4178
    %4608 = vmatmul.mubr.bf16.gmra.mrb[0].mxu0 %v4177
    %v4609 = vpop.f32.mrb[0].mxu0
    %v4610 = vadd.f32 %v4513, %v4609
    %v4611 = vpop.f32.mrb[0].mxu0
    %v4612 = vpop.f32.mrb[0].mxu0
    %v4613 = vadd.f32 %v4516, %v4612
    %v4614 = vpop.f32.mrb[0].mxu0
    %4615 = vmatprep.mubr.bf16.mxu0 %v4182
    %4616 = vmatmul.mubr.bf16.gmra.mrb[0].mxu0 %v4181
    %v4617 = vpop.f32.mrb[0].mxu0
    %v4618 = vadd.f32 %v4521, %v4617
    %v4619 = vpop.f32.mrb[0].mxu0
    %v4620 = vpop.f32.mrb[0].mxu0
    %v4621 = vadd.f32 %v4524, %v4620
    %v4622 = vpop.f32.mrb[0].mxu0
    %4623 = vmatprep.mubr.bf16.mxu0 %v4186
    %4624 = vmatmul.mubr.bf16.gmra.mrb[0].mxu0 %v4185
    %v4625 = vpop.f32.mrb[0].mxu0
    %v4626 = vadd.f32 %v4529, %v4625
    %v4627 = vpop.f32.mrb[0].mxu0
    %v4628 = vpop.f32.mrb[0].mxu0
    %v4629 = vadd.f32 %v4532, %v4628
    %v4630 = vpop.f32.mrb[0].mxu0
    %4631 = vmatprep.mubr.bf16.mxu0 %v4190
    %4632 = vmatmul.mubr.bf16.gmra.mrb[0].mxu0 %v4189
    %v4633 = vpop.f32.mrb[0].mxu0
    %v4634 = vadd.f32 %v4537, %v4633
    %v4635 = vpop.f32.mrb[0].mxu0
    %v4636 = vpop.f32.mrb[0].mxu0
    %v4637 = vadd.f32 %v4540, %v4636
    %v4638 = vpop.f32.mrb[0].mxu0
    %4639 = vmatprep.mubr.bf16.mxu0 %v4194
    %4640 = vmatmul.mubr.bf16.gmra.mrb[0].mxu0 %v4193
    %v4641 = vpop.f32.mrb[0].mxu0
    %v4642 = vadd.f32 %v4545, %v4641
    %v4643 = vpop.f32.mrb[0].mxu0
    %v4644 = vpop.f32.mrb[0].mxu0
    %v4645 = vadd.f32 %v4548, %v4644
    %v4646 = vpop.f32.mrb[0].mxu0
    %4647 = vmatprep.mubr.bf16.mxu0 %v4198
    %4648 = vmatmul.mubr.bf16.gmra.mrb[0].mxu0 %v4197
    %v4649 = vpop.f32.mrb[0].mxu0
    %v4650 = vadd.f32 %v4553, %v4649
    %v4651 = vpop.f32.mrb[0].mxu0
    %v4652 = vpop.f32.mrb[0].mxu0
    %v4653 = vadd.f32 %v4556, %v4652
    %v4654 = vpop.f32.mrb[0].mxu0
    %4655 = vdwg.mxu0
    %v4656 = vmax.f32 %v4594, 0.0
    %v4657 = vmax.f32 %v4597, 0.0
    %v4658 = vmax.f32 %v4602, 0.0
    %v4659 = vmax.f32 %v4605, 0.0
    %v4660 = vmax.f32 %v4610, 0.0
    %v4661 = vmax.f32 %v4613, 0.0
    %v4662 = vmax.f32 %v4618, 0.0
    %v4663 = vmax.f32 %v4621, 0.0
    %v4664 = vmax.f32 %v4626, 0.0
    %v4665 = vmax.f32 %v4629, 0.0
    %v4666 = vmax.f32 %v4634, 0.0
    %v4667 = vmax.f32 %v4637, 0.0
    %v4668 = vmax.f32 %v4642, 0.0
    %v4669 = vmax.f32 %v4645, 0.0
    %v4670 = vmax.f32 %v4650, 0.0
    %v4671 = vmax.f32 %v4653, 0.0
    %v4672 = vld [vmem:[%s7] sm:$0x1]
    %v4673 = vld [vmem:[#allocation2] sm:$0x1]
    %4675 = vset.pattern.permute.xlu0 0
    %4676 = vperm.xlu0 %4675, %v4673
    %v4677 = vpop.permute.xlu0 %4676
    %v4679 = vlaneseq
    %v4680 = vshrl.u32 %v4679, 7
    %v4681 = vsub.s32 0, %v4680
    %v4682 = vrot.slane %v4677, %v4681
    %4683 = vmatprep.subr.mxu0 0.0
    %4684 = vmatpush1.xpose.msra.mxu0 %v4656
    %4685 = vmatprep.subr.mxu0 0.0
    %4686 = vmatpush1.xpose.msra.mxu0 %v4657
    %4687 = vmatprep.subr.mxu0 0.0
    %4688 = vmatpush1.xpose.msra.mxu0 %v4658
    %4689 = vmatprep.subr.mxu0 0.0
    %4690 = vmatpush1.xpose.msra.mxu0 %v4659
    %4691 = vmatprep.subr.mxu0 0.0
    %4692 = vmatpush1.xpose.msra.mxu0 %v4660
    %4693 = vmatprep.subr.mxu0 0.0
    %4694 = vmatpush1.xpose.msra.mxu0 %v4661
    %4695 = vmatprep.subr.mxu0 0.0
    %4696 = vmatpush1.xpose.msra.mxu0 %v4662
    %4697 = vmatprep.subr.mxu0 0.0
    %4698 = vmatpush1.xpose.msra.mxu0 %v4663
    %4699 = vmatprep.subr.mxu0 0.0
    %4700 = vmatpush1.xpose.msra.mxu0 %v4664
    %4701 = vmatprep.subr.mxu0 0.0
    %4702 = vmatpush1.xpose.msra.mxu0 %v4665
    %4703 = vmatprep.subr.mxu0 0.0
    %4704 = vmatpush1.xpose.msra.mxu0 %v4666
    %4705 = vmatprep.subr.mxu0 0.0
    %4706 = vmatpush1.xpose.msra.mxu0 %v4667
    %4707 = vmatprep.subr.mxu0 0.0
    %4708 = vmatpush1.xpose.msra.mxu0 %v4668
    %4709 = vmatprep.subr.mxu0 0.0
    %4710 = vmatpush1.xpose.msra.mxu0 %v4669
    %4711 = vmatprep.subr.mxu0 0.0
    %4712 = vmatpush1.xpose.msra.mxu0 %v4670
    %4713 = vmatprep.subr.mxu0 0.0
    %4714 = vmatpush1.xpose.msra.mxu0 %v4671
    %4715 = vmatprep.subr.mxu0 0.0
    %4716 = vmatpush1.xpose.msra.mxu0 0.0
    %4717 = vmatprep.subr.mxu0 0.0
    %4718 = vmatpush1.xpose.msra.mxu0 0.0
    %4719 = vmatprep.subr.mxu0 0.0
    %4720 = vmatpush1.xpose.msra.mxu0 0.0
    %4721 = vmatprep.subr.mxu0 0.0
    %4722 = vmatpush1.xpose.msra.mxu0 0.0
    %4723 = vmatprep.subr.mxu0 0.0
    %4724 = vmatpush1.xpose.msra.mxu0 0.0
    %4725 = vmatprep.subr.mxu0 0.0
    %4726 = vmatpush1.xpose.msra.mxu0 0.0
    %4727 = vmatprep.subr.mxu0 0.0
    %4728 = vmatpush1.xpose.msra.mxu0 0.0
    %4729 = vmatprep.subr.mxu0 0.0
    %4730 = vmatpush1.xpose.msra.mxu0 0.0
    %4731 = vmatprep.subr.mxu0 0.0
    %4732 = vmatpush1.xpose.msra.mxu0 0.0
    %4733 = vmatprep.subr.mxu0 0.0
    %4734 = vmatpush1.xpose.msra.mxu0 0.0
    %4735 = vmatprep.subr.mxu0 0.0
    %4736 = vmatpush1.xpose.msra.mxu0 0.0
    %4737 = vmatprep.subr.mxu0 0.0
    %4738 = vmatpush1.xpose.msra.mxu0 0.0
    %4739 = vmatprep.subr.mxu0 0.0
    %4740 = vmatpush1.xpose.msra.mxu0 0.0
    %4741 = vmatprep.subr.mxu0 0.0
    %4742 = vmatpush1.xpose.msra.mxu0 0.0
    %4743 = vmatprep.subr.mxu0 0.0
    %4744 = vmatpush1.xpose.msra.mxu0 0.0
    %4745 = vmatprep.subr.mxu0 0.0
    %4746 = vmatpush1.xpose.msra.mxu0 0.0
    %4747 = vmatprep.mubr.f32.mxu0 0.0
    %4748 = vmatmul.mubr.f32.gmra.mrb[0].mxu0 %v4672
    %v4749 = vpop.f32.mrb[0].mxu0
    %v4750 = vadd.f32 %v4682, %v4749
    %v4751 = vpop.f32.mrb[0].mxu0
    %4752 = vdwg.mxu0
    %4753 = vst [vmem:[#allocation11] sm:$0x1] %v4750
    // Predicated region
    $region54: #{tpu_custom_call.1} parent=1 // pred_check
      _
    $region55: #{tpu_custom_call.1} parent=1 // pred_check_branch
      %4755 = sbr.rel (0) target = $region57
    $region56: #{tpu_custom_call.1} parent=1 // pred_region
      %s4757 = ssub.s32 16, 16
      %4758 = vsyncadd [#allocation5], %s4757
      %s4760 = sshll.u32 [#allocation11], 4
      %s4761 = int_to_ptr.vmem [resolvable:$true] %s4760
      %4763 = dma.vmem_to_hbm [thread:$0]  %s4761, 16, %s9, [#allocation5]
    $region57: #{tpu_custom_call.1} parent=1 // pred_fallthru
      _
    // Predicated region
    $region58: #{tpu_custom_call.1} parent=1 // pred_check
      _
    $region59: #{tpu_custom_call.1} parent=1 // pred_check_branch
      %4765 = sbr.rel (0) target = $region61
    $region60: #{tpu_custom_call.1} parent=1 // pred_region
      %4766 = dma.done [#allocation5], 16
    $region61: #{tpu_custom_call.1} parent=1 // pred_fallthru
      _
    %4767 = vsyncpa [#allocation4], 1
    %4768 = vsyncpa [#allocation7], 1
    %4769 = vsyncpa [#allocation10], 1
    %4770 = vsyncpa [#allocation5], 1

</llo_original>
